<compile_context>
chip_gen: v5e
topology: v5e:2x2
jax: 0.10.0
libtpu: 0.0.40
codegen_flags: <defaults>
</compile_context>

<pallas_src>
import jax
import jax.numpy as jnp
from jax.experimental import pallas as pl
from jax.experimental.pallas import tpu as pltpu


def _make_kernel(tile_n, n_valid, n_pad, eps, use_stash):
    inv_n = 1.0 / float(n_valid)
    need_mask = (n_valid != n_pad)

    def body(x1_ref, x2_ref, wo_ref, wp_ref, prm_ref, loss_ref,
             sum_o, ssq_o, sum_t, ssq_t, loss_acc, stash):
        phase = pl.program_id(0)
        ti = pl.program_id(1)
        nt = pl.num_programs(1)
        off = pl.multiple_of(ti * tile_n, 16)

        @pl.when((phase == 0) & (ti == 0))
        def _init():
            sum_o[...] = jnp.zeros_like(sum_o)
            ssq_o[...] = jnp.zeros_like(ssq_o)
            sum_t[...] = jnp.zeros_like(sum_t)
            ssq_t[...] = jnp.zeros_like(ssq_t)
            loss_acc[...] = jnp.zeros_like(loss_acc)

        def encoder():
            # Both branches stacked -> one MXU matmul per tile (Wo reused across
            # 2*tile_n LHS rows).  No "+ bo": BN is shift-invariant (exact), and
            # zero-padded rows stay exactly zero so no stats masking is needed.
            x12 = jnp.concatenate([x1_ref[...], x2_ref[...]], axis=0)
            z12 = jnp.dot(x12, wo_ref[...], preferred_element_type=jnp.float32)
            return z12[:tile_n], z12[tile_n:]

        def accum_stats(zo, zt):
            sum_o[...] += jnp.sum(zo, axis=0, keepdims=True)
            ssq_o[...] += jnp.sum(zo * zo, axis=0, keepdims=True)
            sum_t[...] += jnp.sum(zt, axis=0, keepdims=True)
            ssq_t[...] += jnp.sum(zt * zt, axis=0, keepdims=True)

        def bn_pred_cosine(zo, zt):
            prm = prm_ref[...]
            bo = prm[0:1]        # Wo bias (SymReLU threshold)
            bp = prm[1:2]        # Wp bias
            gamma = prm[2:3]
            beta = prm[3:4]

            # Training-mode BatchNorm statistics (biased variance).
            mean_o = sum_o[...] * inv_n
            mean_t = sum_t[...] * inv_n
            var_o = ssq_o[...] * inv_n - mean_o * mean_o
            var_t = ssq_t[...] * inv_n - mean_t * mean_t
            inv_std_o = jax.lax.rsqrt(var_o + eps)       # EUP rsqrt
            inv_std_t = jax.lax.rsqrt(var_t + eps)

            def bn_srelu(z, mean, inv_std):
                zh = (z - mean) * inv_std * gamma + beta
                # TODO(synk): SymReLU source unavailable; symmetric soft-threshold.
                return jnp.maximum(zh - bo, 0.0) - jnp.maximum(-zh - bo, 0.0)

            zo_s = bn_srelu(zo, mean_o, inv_std_o)
            zt_s = bn_srelu(zt, mean_t, inv_std_t)

            # Predictor: both branches in a single stacked MXU matmul.
            zs12 = jnp.concatenate([zo_s.astype(jnp.bfloat16),
                                    zt_s.astype(jnp.bfloat16)], axis=0)
            p12 = jnp.dot(zs12, wp_ref[...],
                          preferred_element_type=jnp.float32) + bp

            # Pair p1 <-> zt_s and p2 <-> zo_s (simplified SimSiam cosine loss).
            z_pair = jnp.concatenate([zt_s, zo_s], axis=0)
            dot = jnp.sum(p12 * z_pair, axis=-1, keepdims=True)
            pp = jnp.maximum(jnp.sum(p12 * p12, axis=-1, keepdims=True), 1e-16)
            zz = jnp.maximum(jnp.sum(z_pair * z_pair, axis=-1, keepdims=True), 1e-16)
            cos = dot * jax.lax.rsqrt(pp) * jax.lax.rsqrt(zz)     # (2*tile_n, 1)

            if need_mask:
                rows = jax.lax.broadcasted_iota(jnp.int32, (tile_n, 1), 0)
                mask = (ti * tile_n + rows < n_valid).astype(jnp.float32)
                cos = cos * jnp.concatenate([mask, mask], axis=0)

            loss_acc[...] += jnp.sum(cos, axis=0, keepdims=True)

            @pl.when(ti == nt - 1)
            def _finalize():
                # loss = 0.5 * (-mean cos(p1, zt) - mean cos(p2, zo))
                loss_ref[...] = (-0.5 * inv_n) * loss_acc[...]

        if use_stash:
            @pl.when(phase == 0)
            def _phase0():
                zo, zt = encoder()
                accum_stats(zo, zt)
                stash[0, pl.ds(off, tile_n), :] = zo.astype(jnp.bfloat16)
                stash[1, pl.ds(off, tile_n), :] = zt.astype(jnp.bfloat16)

            @pl.when(phase == 1)
            def _phase1():
                zo = stash[0, pl.ds(off, tile_n), :].astype(jnp.float32)
                zt = stash[1, pl.ds(off, tile_n), :].astype(jnp.float32)
                bn_pred_cosine(zo, zt)
        else:
            # Recompute fallback: encoder runs in both phases (no stash needed).
            zo, zt = encoder()

            @pl.when(phase == 0)
            def _phase0():
                accum_stats(zo, zt)

            @pl.when(phase == 1)
            def _phase1():
                bn_pred_cosine(zo, zt)

    if use_stash:
        def kernel(x1_ref, x2_ref, wo_ref, wp_ref, prm_ref, loss_ref,
                   sum_o, ssq_o, sum_t, ssq_t, loss_acc, stash):
            body(x1_ref, x2_ref, wo_ref, wp_ref, prm_ref, loss_ref,
                 sum_o, ssq_o, sum_t, ssq_t, loss_acc, stash)
    else:
        def kernel(x1_ref, x2_ref, wo_ref, wp_ref, prm_ref, loss_ref,
                   sum_o, ssq_o, sum_t, ssq_t, loss_acc):
            body(x1_ref, x2_ref, wo_ref, wp_ref, prm_ref, loss_ref,
                 sum_o, ssq_o, sum_t, ssq_t, loss_acc, None)

    return kernel


def simsiam_forward(x1, x2, wo_t, bo, wp_t, bp, gamma, beta,
                    *, tile_n=256, eps=1e-5, use_stash=None):
    """Fused SimSiamAblationModel forward (use_bn=True, use_diag_pred=False).

    x1, x2 : (N, p) inputs.
    wo_t   : (p, m) encoder weight, pre-transposed (x @ wo_t == Wo(x)).
    bo     : (m,)   encoder bias (also the SymReLU threshold, as in the module).
    wp_t   : (m, m) predictor weight, pre-transposed.
    bp     : (m,)   predictor bias.
    gamma, beta : (m,) BatchNorm1d affine parameters.
    Returns the scalar f32 loss.
    """
    n, p_dim = x1.shape
    m_dim = wo_t.shape[1]
    assert wo_t.shape == (p_dim, m_dim) and wp_t.shape == (m_dim, m_dim)
    assert p_dim % 128 == 0 and m_dim % 128 == 0, "feature dims must be lane-dense"

    # Batch tile: multiple of 16 (bf16 sublane pack), capped at the rounded batch
    # so tiny batches are not over-padded (N=128 demo -> one 128-row tile, nt=1).
    tile_n = min(int(tile_n), ((n + 15) // 16) * 16)
    tile_n = max(16, ((tile_n + 15) // 16) * 16)
    n_pad = ((n + tile_n - 1) // tile_n) * tile_n
    nt = n_pad // tile_n

    # --- VMEM budgeting (worst case physical VMEM is 64 MiB per TC on v7x). ---
    VMEM_PHYS_MIN = 64 << 20
    w_bytes = 2 * (p_dim * m_dim + m_dim * m_dim) * 2     # Wo+Wp bf16, 2 bufs each
    x_bytes = 2 * 2 * tile_n * p_dim * 2                  # x1+x2 tiles, double-buffered
    prm_bytes = 2 * 8 * m_dim * 4                         # packed params, 2 bufs
    misc_bytes = (4 * 8 * m_dim + 2 * 8 * 128) * 4        # stats scratch + loss acc/out
    base_bytes = w_bytes + x_bytes + prm_bytes + misc_bytes
    stash_bytes = 2 * n_pad * m_dim * 2                   # bf16 zo/zt stash
    if use_stash is None:
        use_stash = (base_bytes + stash_bytes) <= int(0.6 * VMEM_PHYS_MIN)
    total_bytes = base_bytes + (stash_bytes if use_stash else 0)
    vmem_limit = int(min(VMEM_PHYS_MIN, max(32 << 20, total_bytes + (8 << 20))))

    # Pad the batch to a multiple of the tile; padded rows are zero, which keeps
    # the phase-0 stats exact (no bias pre-BN) and are masked in the cosine sum.
    if n_pad != n:
        padding = ((0, n_pad - n), (0, 0))
        x1 = jnp.pad(x1, padding)
        x2 = jnp.pad(x2, padding)

    # bf16 operands for the MXU; f32 for BN params / epilogue.
    x1b = x1.astype(jnp.bfloat16)
    x2b = x2.astype(jnp.bfloat16)
    wob = wo_t.astype(jnp.bfloat16)
    wpb = wp_t.astype(jnp.bfloat16)

    # Pack bo/bp/gamma/beta into one (8, m) f32 slab (rows 0-3 used).
    prm = jnp.zeros((8, m_dim), jnp.float32)
    prm = prm.at[0].set(bo.astype(jnp.float32))
    prm = prm.at[1].set(bp.astype(jnp.float32))
    prm = prm.at[2].set(gamma.astype(jnp.float32))
    prm = prm.at[3].set(beta.astype(jnp.float32))

    kernel = _make_kernel(tile_n, n, n_pad, eps, use_stash)

    if use_stash:
        # Phase 1 never reads x1/x2 (it reads the stash), so collapse their block
        # index to tile 0 during phase 1 -> no redundant HBM->VMEM DMAs.
        x_map = lambda ph, ti: (ti * (1 - ph), 0)
    else:
        x_map = lambda ph, ti: (ti, 0)
    const2 = lambda ph, ti: (0, 0)

    scratch = [
        pltpu.VMEM((1, m_dim), jnp.float32),   # sum   (online branch)
        pltpu.VMEM((1, m_dim), jnp.float32),   # sumsq (online branch)
        pltpu.VMEM((1, m_dim), jnp.float32),   # sum   (target branch)
        pltpu.VMEM((1, m_dim), jnp.float32),   # sumsq (target branch)
        pltpu.VMEM((1, 1), jnp.float32),       # running cosine sum
    ]
    if use_stash:
        scratch.append(pltpu.VMEM((2, n_pad, m_dim), jnp.bfloat16))   # zo/zt stash

    loss = pl.pallas_call(
        kernel,
        out_shape=jax.ShapeDtypeStruct((1, 1), jnp.float32),
        grid_spec=pltpu.PrefetchScalarGridSpec(
            num_scalar_prefetch=0,
            grid=(2, nt),                     # (phase, batch tiles)
            in_specs=[
                pl.BlockSpec((tile_n, p_dim), x_map),        # x1
                pl.BlockSpec((tile_n, p_dim), x_map),        # x2
                pl.BlockSpec((p_dim, m_dim), const2),        # Wo (VMEM-resident)
                pl.BlockSpec((m_dim, m_dim), const2),        # Wp (VMEM-resident)
                pl.BlockSpec((8, m_dim), const2),            # packed bo/bp/gamma/beta
            ],
            out_specs=pl.BlockSpec((1, 1), const2),
            scratch_shapes=scratch,
        ),
        compiler_params=pltpu.CompilerParams(
            # Both axes sequential: phase 1 consumes the cross-tile BN stats (and
            # stash) that phase 0 produced in persistent VMEM scratch.
            dimension_semantics=("arbitrary", "arbitrary"),
            vmem_limit_bytes=vmem_limit,
        ),
    )(x1b, x2b, wob, wpb, prm)

    return loss[0, 0]


def simsiam_reference(x1, x2, wo_t, bo, wp_t, bp, gamma, beta, eps=1e-5):
    """Pure-JAX f32 reference of the module forward (training-mode BatchNorm)."""
    def bn(z):
        mean = jnp.mean(z, axis=0, keepdims=True)
        var = jnp.mean(jnp.square(z - mean), axis=0, keepdims=True)
        return (z - mean) / jnp.sqrt(var + eps) * gamma + beta

    def srelu(z, b):
        return jnp.maximum(z - b, 0.0) - jnp.maximum(-z - b, 0.0)

    def neg_mean_cos(p, z):
        # torch.nn.functional.cosine_similarity clamps each norm at eps=1e-8.
        pn = jnp.maximum(jnp.linalg.norm(p, axis=-1), 1e-8)
        zn = jnp.maximum(jnp.linalg.norm(z, axis=-1), 1e-8)
        return -jnp.mean(jnp.sum(p * z, axis=-1) / (pn * zn))

    zo = x1 @ wo_t + bo
    zt = x2 @ wo_t + bo
    zo = bn(zo)
    zt = bn(zt)
    zo = srelu(zo, bo)
    zt = srelu(zt, bo)
    p1 = zo @ wp_t + bp
    p2 = zt @ wp_t + bp
    return 0.5 * (neg_mean_cos(p1, zt) + neg_mean_cos(p2, zo))


if __name__ == "__main__":
    key = jax.random.PRNGKey(0)
    N, P, M = 128, 256, 256          # batch, input dim p, hidden dim m
    ks = jax.random.split(key, 6)
    x1 = jax.random.normal(ks[0], (N, P), jnp.float32)
    x2 = jax.random.normal(ks[1], (N, P), jnp.float32)
    lim_o = 1.0 / (P ** 0.5)
    wo_t = jax.random.uniform(ks[2], (P, M), jnp.float32, -lim_o, lim_o)
    bo = jax.random.uniform(ks[3], (M,), jnp.float32, -lim_o, lim_o)
    lim_p = 1.0 / (M ** 0.5)
    wp_t = jax.random.uniform(ks[4], (M, M), jnp.float32, -lim_p, lim_p)
    bp = jax.random.uniform(ks[5], (M,), jnp.float32, -lim_p, lim_p)
    gamma = jnp.ones((M,), jnp.float32)   # fresh BatchNorm1d affine params
    beta = jnp.zeros((M,), jnp.float32)

    ref = jax.block_until_ready(
        simsiam_reference(x1, x2, wo_t, bo, wp_t, bp, gamma, beta))

    # 1) Default path: whole batch in one tile, zo/zt stashed in VMEM.
    loss = jax.block_until_ready(
        simsiam_forward(x1, x2, wo_t, bo, wp_t, bp, gamma, beta))
    assert abs(float(loss) - float(ref)) < 5e-2, (float(loss), float(ref))

    # 2) Multi-tile + padded batch (exercises the row mask and dynamic stash offsets).
    n2 = 120
    ref2 = jax.block_until_ready(
        simsiam_reference(x1[:n2], x2[:n2], wo_t, bo, wp_t, bp, gamma, beta))
    loss2 = jax.block_until_ready(
        simsiam_forward(x1[:n2], x2[:n2], wo_t, bo, wp_t, bp, gamma, beta,
                        tile_n=64))
    assert abs(float(loss2) - float(ref2)) < 5e-2, (float(loss2), float(ref2))

    # 3) Recompute fallback path (what very large batches would use on v7x).
    loss3 = jax.block_until_ready(
        simsiam_forward(x1, x2, wo_t, bo, wp_t, bp, gamma, beta,
                        tile_n=64, use_stash=False))
    assert abs(float(loss3) - float(ref)) < 5e-2, (float(loss3), float(ref))

    print("KERNEL_OK")
</pallas_src>

<mosaic_0001>
module attributes {stable_mosaic.version = 11 : i64} {
  func.func @kernel(%arg0: i32, %arg1: i32, %arg2: memref<128x256xbf16, #tpu.memory_space<vmem>>, %arg3: memref<128x256xbf16, #tpu.memory_space<vmem>>, %arg4: memref<256x256xbf16, #tpu.memory_space<vmem>>, %arg5: memref<256x256xbf16, #tpu.memory_space<vmem>>, %arg6: memref<8x256xf32, #tpu.memory_space<vmem>>, %arg7: memref<1x1xf32, #tpu.memory_space<vmem>>, %arg8: memref<1x256xf32, #tpu.memory_space<vmem>>, %arg9: memref<1x256xf32, #tpu.memory_space<vmem>>, %arg10: memref<1x256xf32, #tpu.memory_space<vmem>>, %arg11: memref<1x256xf32, #tpu.memory_space<vmem>>, %arg12: memref<1x1xf32, #tpu.memory_space<vmem>>, %arg13: memref<2x128x256xbf16, #tpu.memory_space<vmem>>) attributes {dimension_semantics = [#tpu.dimension_semantics<arbitrary>, #tpu.dimension_semantics<arbitrary>], iteration_bounds = array<i64: 2, 1>, scalar_prefetch = 0 : i64, scratch_operands = 6 : i64, tpu.core_type = #tpu.core_type<tc>, window_params = [{transform_indices = @transform_0, window_bounds = array<i64: 128, 256>}, {transform_indices = @transform_1, window_bounds = array<i64: 128, 256>}, {pipeline_mode = #tpu.pipeline_mode<synchronous>, transform_indices = @transform_2, window_bounds = array<i64: 256, 256>}, {pipeline_mode = #tpu.pipeline_mode<synchronous>, transform_indices = @transform_3, window_bounds = array<i64: 256, 256>}, {pipeline_mode = #tpu.pipeline_mode<synchronous>, transform_indices = @transform_4, window_bounds = array<i64: 8, 256>}, {pipeline_mode = #tpu.pipeline_mode<synchronous>, transform_indices = @transform_5, window_bounds = array<i64: 1, 1>}]} {
    %c128_i32 = arith.constant 128 : i32
    %0 = arith.muli %arg1, %c128_i32 : i32
    %1 = tpu.assume_multiple %0, 16 : i32
    %c0_i32 = arith.constant 0 : i32
    %2 = arith.cmpi eq, %arg0, %c0_i32 : i32
    %c0_i32_0 = arith.constant 0 : i32
    %3 = arith.cmpi eq, %arg1, %c0_i32_0 : i32
    %4 = arith.andi %2, %3 : i1
    %5 = arith.extui %4 : i1 to i32
    %c0_i32_1 = arith.constant 0 : i32
    %6 = arith.cmpi ne, %5, %c0_i32_1 : i32
    scf.if %6 {
      %cst = arith.constant 0.000000e+00 : f32
      %13 = vector.broadcast %cst : f32 to vector<1x256xf32>
      %c0 = arith.constant 0 : index
      %c0_5 = arith.constant 0 : index
      %14 = vector.load %arg8[%c0, %c0_5] : memref<1x256xf32, #tpu.memory_space<vmem>>, vector<1x256xf32>
      tpu.vector_store %arg8[%c0, %c0_5], %13 {strides = array<i32>} : memref<1x256xf32, #tpu.memory_space<vmem>>, vector<1x256xf32>,
      %cst_6 = arith.constant 0.000000e+00 : f32
      %15 = vector.broadcast %cst_6 : f32 to vector<1x256xf32>
      %c0_7 = arith.constant 0 : index
      %c0_8 = arith.constant 0 : index
      %16 = vector.load %arg9[%c0_7, %c0_8] : memref<1x256xf32, #tpu.memory_space<vmem>>, vector<1x256xf32>
      tpu.vector_store %arg9[%c0_7, %c0_8], %15 {strides = array<i32>} : memref<1x256xf32, #tpu.memory_space<vmem>>, vector<1x256xf32>,
      %cst_9 = arith.constant 0.000000e+00 : f32
      %17 = vector.broadcast %cst_9 : f32 to vector<1x256xf32>
      %c0_10 = arith.constant 0 : index
      %c0_11 = arith.constant 0 : index
      %18 = vector.load %arg10[%c0_10, %c0_11] : memref<1x256xf32, #tpu.memory_space<vmem>>, vector<1x256xf32>
      tpu.vector_store %arg10[%c0_10, %c0_11], %17 {strides = array<i32>} : memref<1x256xf32, #tpu.memory_space<vmem>>, vector<1x256xf32>,
      %cst_12 = arith.constant 0.000000e+00 : f32
      %19 = vector.broadcast %cst_12 : f32 to vector<1x256xf32>
      %c0_13 = arith.constant 0 : index
      %c0_14 = arith.constant 0 : index
      %20 = vector.load %arg11[%c0_13, %c0_14] : memref<1x256xf32, #tpu.memory_space<vmem>>, vector<1x256xf32>
      tpu.vector_store %arg11[%c0_13, %c0_14], %19 {strides = array<i32>} : memref<1x256xf32, #tpu.memory_space<vmem>>, vector<1x256xf32>,
      %cst_15 = arith.constant 0.000000e+00 : f32
      %21 = vector.broadcast %cst_15 : f32 to vector<1x1xf32>
      %c0_16 = arith.constant 0 : index
      %c0_17 = arith.constant 0 : index
      %22 = vector.load %arg12[%c0_16, %c0_17] : memref<1x1xf32, #tpu.memory_space<vmem>>, vector<1x1xf32>
      tpu.vector_store %arg12[%c0_16, %c0_17], %21 {strides = array<i32>} : memref<1x1xf32, #tpu.memory_space<vmem>>, vector<1x1xf32>,
    } else {
    }
    %c0_i32_2 = arith.constant 0 : i32
    %7 = arith.cmpi eq, %arg0, %c0_i32_2 : i32
    %8 = arith.extui %7 : i1 to i32
    %c0_i32_3 = arith.constant 0 : i32
    %9 = arith.cmpi ne, %8, %c0_i32_3 : i32
    scf.if %9 {
      %c0 = arith.constant 0 : index
      %c0_5 = arith.constant 0 : index
      %13 = vector.load %arg2[%c0, %c0_5] : memref<128x256xbf16, #tpu.memory_space<vmem>>, vector<128x256xbf16>
      %c0_6 = arith.constant 0 : index
      %c0_7 = arith.constant 0 : index
      %14 = vector.load %arg3[%c0_6, %c0_7] : memref<128x256xbf16, #tpu.memory_space<vmem>>, vector<128x256xbf16>
      %15 = tpu.concatenate %13, %14 in 0 : vector<128x256xbf16>, vector<128x256xbf16> -> vector<256x256xbf16>
      %c0_8 = arith.constant 0 : index
      %c0_9 = arith.constant 0 : index
      %16 = vector.load %arg4[%c0_8, %c0_9] : memref<256x256xbf16, #tpu.memory_space<vmem>>, vector<256x256xbf16>
      %cst = arith.constant dense<0.000000e+00> : vector<256x256xf32>
      %17 = tpu.matmul %15, %16, %cst {dimension_numbers = #tpu.dot_dimension_numbers<[1], [0], [0], [1], [0, 0, 1, 1], [], []>} : vector<256x256xbf16>, vector<256x256xbf16>, vector<256x256xf32> -> vector<256x256xf32>
      %18 = vector.extract_strided_slice %17 {offsets = [0, 0], sizes = [128, 256], strides = [1, 1]} : vector<256x256xf32> to vector<128x256xf32>
      %19 = vector.extract_strided_slice %17 {offsets = [128, 0], sizes = [128, 256], strides = [1, 1]} : vector<256x256xf32> to vector<128x256xf32>
      %c0_10 = arith.constant 0 : index
      %c0_11 = arith.constant 0 : index
      %20 = vector.load %arg8[%c0_10, %c0_11] : memref<1x256xf32, #tpu.memory_space<vmem>>, vector<1x256xf32>
      %cst_12 = arith.constant dense<0.000000e+00> : vector<256xf32>
      %21 = vector.multi_reduction <add>, %18, %cst_12 [0] : vector<128x256xf32> to vector<256xf32>
      %22 = vector.shape_cast %21 : vector<256xf32> to vector<1x256xf32>
      %23 = arith.addf %20, %22 : vector<1x256xf32>
      %c0_13 = arith.constant 0 : index
      %c0_14 = arith.constant 0 : index
      %24 = vector.load %arg8[%c0_13, %c0_14] : memref<1x256xf32, #tpu.memory_space<vmem>>, vector<1x256xf32>
      tpu.vector_store %arg8[%c0_13, %c0_14], %23 {strides = array<i32>} : memref<1x256xf32, #tpu.memory_space<vmem>>, vector<1x256xf32>,
      %c0_15 = arith.constant 0 : index
      %c0_16 = arith.constant 0 : index
      %25 = vector.load %arg9[%c0_15, %c0_16] : memref<1x256xf32, #tpu.memory_space<vmem>>, vector<1x256xf32>
      %26 = arith.mulf %18, %18 : vector<128x256xf32>
      %cst_17 = arith.constant dense<0.000000e+00> : vector<256xf32>
      %27 = vector.multi_reduction <add>, %26, %cst_17 [0] : vector<128x256xf32> to vector<256xf32>
      %28 = vector.shape_cast %27 : vector<256xf32> to vector<1x256xf32>
      %29 = arith.addf %25, %28 : vector<1x256xf32>
      %c0_18 = arith.constant 0 : index
      %c0_19 = arith.constant 0 : index
      %30 = vector.load %arg9[%c0_18, %c0_19] : memref<1x256xf32, #tpu.memory_space<vmem>>, vector<1x256xf32>
      tpu.vector_store %arg9[%c0_18, %c0_19], %29 {strides = array<i32>} : memref<1x256xf32, #tpu.memory_space<vmem>>, vector<1x256xf32>,
      %c0_20 = arith.constant 0 : index
      %c0_21 = arith.constant 0 : index
      %31 = vector.load %arg10[%c0_20, %c0_21] : memref<1x256xf32, #tpu.memory_space<vmem>>, vector<1x256xf32>
      %cst_22 = arith.constant dense<0.000000e+00> : vector<256xf32>
      %32 = vector.multi_reduction <add>, %19, %cst_22 [0] : vector<128x256xf32> to vector<256xf32>
      %33 = vector.shape_cast %32 : vector<256xf32> to vector<1x256xf32>
      %34 = arith.addf %31, %33 : vector<1x256xf32>
      %c0_23 = arith.constant 0 : index
      %c0_24 = arith.constant 0 : index
      %35 = vector.load %arg10[%c0_23, %c0_24] : memref<1x256xf32, #tpu.memory_space<vmem>>, vector<1x256xf32>
      tpu.vector_store %arg10[%c0_23, %c0_24], %34 {strides = array<i32>} : memref<1x256xf32, #tpu.memory_space<vmem>>, vector<1x256xf32>,
      %c0_25 = arith.constant 0 : index
      %c0_26 = arith.constant 0 : index
      %36 = vector.load %arg11[%c0_25, %c0_26] : memref<1x256xf32, #tpu.memory_space<vmem>>, vector<1x256xf32>
      %37 = arith.mulf %19, %19 : vector<128x256xf32>
      %cst_27 = arith.constant dense<0.000000e+00> : vector<256xf32>
      %38 = vector.multi_reduction <add>, %37, %cst_27 [0] : vector<128x256xf32> to vector<256xf32>
      %39 = vector.shape_cast %38 : vector<256xf32> to vector<1x256xf32>
      %40 = arith.addf %36, %39 : vector<1x256xf32>
      %c0_28 = arith.constant 0 : index
      %c0_29 = arith.constant 0 : index
      %41 = vector.load %arg11[%c0_28, %c0_29] : memref<1x256xf32, #tpu.memory_space<vmem>>, vector<1x256xf32>
      tpu.vector_store %arg11[%c0_28, %c0_29], %40 {strides = array<i32>} : memref<1x256xf32, #tpu.memory_space<vmem>>, vector<1x256xf32>,
      %42 = arith.truncf %18 : vector<128x256xf32> to vector<128x256xbf16>
      %c0_30 = arith.constant 0 : index
      %43 = arith.index_cast %1 : i32 to index
      %c0_31 = arith.constant 0 : index
      %44 = vector.load %arg13[%c0_30, %43, %c0_31] : memref<2x128x256xbf16, #tpu.memory_space<vmem>>, vector<1x128x256xbf16>
      %45 = vector.shape_cast %44 : vector<1x128x256xbf16> to vector<128x256xbf16>
      %46 = vector.shape_cast %42 : vector<128x256xbf16> to vector<1x128x256xbf16>
      tpu.vector_store %arg13[%c0_30, %43, %c0_31], %46 {strides = array<i32>} : memref<2x128x256xbf16, #tpu.memory_space<vmem>>, vector<1x128x256xbf16>,
      %47 = arith.truncf %19 : vector<128x256xf32> to vector<128x256xbf16>
      %c1 = arith.constant 1 : index
      %48 = arith.index_cast %1 : i32 to index
      %c0_32 = arith.constant 0 : index
      %49 = vector.load %arg13[%c1, %48, %c0_32] : memref<2x128x256xbf16, #tpu.memory_space<vmem>>, vector<1x128x256xbf16>
      %50 = vector.shape_cast %49 : vector<1x128x256xbf16> to vector<128x256xbf16>
      %51 = vector.shape_cast %47 : vector<128x256xbf16> to vector<1x128x256xbf16>
      tpu.vector_store %arg13[%c1, %48, %c0_32], %51 {strides = array<i32>} : memref<2x128x256xbf16, #tpu.memory_space<vmem>>, vector<1x128x256xbf16>,
    } else {
    }
    %c1_i32 = arith.constant 1 : i32
    %10 = arith.cmpi eq, %arg0, %c1_i32 : i32
    %11 = arith.extui %10 : i1 to i32
    %c0_i32_4 = arith.constant 0 : i32
    %12 = arith.cmpi ne, %11, %c0_i32_4 : i32
    scf.if %12 {
      %c0 = arith.constant 0 : index
      %13 = arith.index_cast %1 : i32 to index
      %c0_5 = arith.constant 0 : index
      %14 = vector.load %arg13[%c0, %13, %c0_5] : memref<2x128x256xbf16, #tpu.memory_space<vmem>>, vector<1x128x256xbf16>
      %15 = vector.shape_cast %14 : vector<1x128x256xbf16> to vector<128x256xbf16>
      %16 = arith.extf %15 : vector<128x256xbf16> to vector<128x256xf32>
      %c1 = arith.constant 1 : index
      %17 = arith.index_cast %1 : i32 to index
      %c0_6 = arith.constant 0 : index
      %18 = vector.load %arg13[%c1, %17, %c0_6] : memref<2x128x256xbf16, #tpu.memory_space<vmem>>, vector<1x128x256xbf16>
      %19 = vector.shape_cast %18 : vector<1x128x256xbf16> to vector<128x256xbf16>
      %20 = arith.extf %19 : vector<128x256xbf16> to vector<128x256xf32>
      %c0_7 = arith.constant 0 : index
      %c0_8 = arith.constant 0 : index
      %21 = vector.load %arg6[%c0_7, %c0_8] : memref<8x256xf32, #tpu.memory_space<vmem>>, vector<8x256xf32>
      %22 = vector.extract_strided_slice %21 {offsets = [0, 0], sizes = [1, 256], strides = [1, 1]} : vector<8x256xf32> to vector<1x256xf32>
      %23 = vector.extract_strided_slice %21 {offsets = [1, 0], sizes = [1, 256], strides = [1, 1]} : vector<8x256xf32> to vector<1x256xf32>
      %24 = vector.extract_strided_slice %21 {offsets = [2, 0], sizes = [1, 256], strides = [1, 1]} : vector<8x256xf32> to vector<1x256xf32>
      %25 = vector.extract_strided_slice %21 {offsets = [3, 0], sizes = [1, 256], strides = [1, 1]} : vector<8x256xf32> to vector<1x256xf32>
      %c0_9 = arith.constant 0 : index
      %c0_10 = arith.constant 0 : index
      %26 = vector.load %arg8[%c0_9, %c0_10] : memref<1x256xf32, #tpu.memory_space<vmem>>, vector<1x256xf32>
      %cst = arith.constant 7.812500e-03 : f32
      %27 = vector.broadcast %cst : f32 to vector<1x256xf32>
      %28 = arith.mulf %26, %27 : vector<1x256xf32>
      %c0_11 = arith.constant 0 : index
      %c0_12 = arith.constant 0 : index
      %29 = vector.load %arg10[%c0_11, %c0_12] : memref<1x256xf32, #tpu.memory_space<vmem>>, vector<1x256xf32>
      %cst_13 = arith.constant 7.812500e-03 : f32
      %30 = vector.broadcast %cst_13 : f32 to vector<1x256xf32>
      %31 = arith.mulf %29, %30 : vector<1x256xf32>
      %c0_14 = arith.constant 0 : index
      %c0_15 = arith.constant 0 : index
      %32 = vector.load %arg9[%c0_14, %c0_15] : memref<1x256xf32, #tpu.memory_space<vmem>>, vector<1x256xf32>
      %cst_16 = arith.constant 7.812500e-03 : f32
      %33 = vector.broadcast %cst_16 : f32 to vector<1x256xf32>
      %34 = arith.mulf %32, %33 : vector<1x256xf32>
      %35 = arith.mulf %28, %28 : vector<1x256xf32>
      %36 = arith.subf %34, %35 : vector<1x256xf32>
      %c0_17 = arith.constant 0 : index
      %c0_18 = arith.constant 0 : index
      %37 = vector.load %arg11[%c0_17, %c0_18] : memref<1x256xf32, #tpu.memory_space<vmem>>, vector<1x256xf32>
      %cst_19 = arith.constant 7.812500e-03 : f32
      %38 = vector.broadcast %cst_19 : f32 to vector<1x256xf32>
      %39 = arith.mulf %37, %38 : vector<1x256xf32>
      %40 = arith.mulf %31, %31 : vector<1x256xf32>
      %41 = arith.subf %39, %40 : vector<1x256xf32>
      %cst_20 = arith.constant 9.99999974E-6 : f32
      %42 = vector.broadcast %cst_20 : f32 to vector<1x256xf32>
      %43 = arith.addf %36, %42 : vector<1x256xf32>
      %44 = math.rsqrt %43 : vector<1x256xf32>
      %cst_21 = arith.constant 9.99999974E-6 : f32
      %45 = vector.broadcast %cst_21 : f32 to vector<1x256xf32>
      %46 = arith.addf %41, %45 : vector<1x256xf32>
      %47 = math.rsqrt %46 : vector<1x256xf32>
      %48 = vector.broadcast %28 : vector<1x256xf32> to vector<128x256xf32>
      %49 = arith.subf %16, %48 : vector<128x256xf32>
      %50 = vector.broadcast %44 : vector<1x256xf32> to vector<128x256xf32>
      %51 = arith.mulf %49, %50 : vector<128x256xf32>
      %52 = vector.broadcast %24 : vector<1x256xf32> to vector<128x256xf32>
      %53 = arith.mulf %51, %52 : vector<128x256xf32>
      %54 = vector.broadcast %25 : vector<1x256xf32> to vector<128x256xf32>
      %55 = arith.addf %53, %54 : vector<128x256xf32>
      %56 = vector.broadcast %22 : vector<1x256xf32> to vector<128x256xf32>
      %57 = arith.subf %55, %56 : vector<128x256xf32>
      %cst_22 = arith.constant 0.000000e+00 : f32
      %58 = vector.broadcast %cst_22 : f32 to vector<128x256xf32>
      %59 = arith.maximumf %57, %58 : vector<128x256xf32>
      %cst_23 = arith.constant 0.000000e+00 : f32
      %60 = vector.broadcast %cst_23 : f32 to vector<128x256xf32>
      %61 = arith.subf %60, %55 : vector<128x256xf32>
      %62 = vector.broadcast %22 : vector<1x256xf32> to vector<128x256xf32>
      %63 = arith.subf %61, %62 : vector<128x256xf32>
      %cst_24 = arith.constant 0.000000e+00 : f32
      %64 = vector.broadcast %cst_24 : f32 to vector<128x256xf32>
      %65 = arith.maximumf %63, %64 : vector<128x256xf32>
      %66 = arith.subf %59, %65 : vector<128x256xf32>
      %67 = vector.broadcast %31 : vector<1x256xf32> to vector<128x256xf32>
      %68 = arith.subf %20, %67 : vector<128x256xf32>
      %69 = vector.broadcast %47 : vector<1x256xf32> to vector<128x256xf32>
      %70 = arith.mulf %68, %69 : vector<128x256xf32>
      %71 = vector.broadcast %24 : vector<1x256xf32> to vector<128x256xf32>
      %72 = arith.mulf %70, %71 : vector<128x256xf32>
      %73 = vector.broadcast %25 : vector<1x256xf32> to vector<128x256xf32>
      %74 = arith.addf %72, %73 : vector<128x256xf32>
      %75 = vector.broadcast %22 : vector<1x256xf32> to vector<128x256xf32>
      %76 = arith.subf %74, %75 : vector<128x256xf32>
      %cst_25 = arith.constant 0.000000e+00 : f32
      %77 = vector.broadcast %cst_25 : f32 to vector<128x256xf32>
      %78 = arith.maximumf %76, %77 : vector<128x256xf32>
      %cst_26 = arith.constant 0.000000e+00 : f32
      %79 = vector.broadcast %cst_26 : f32 to vector<128x256xf32>
      %80 = arith.subf %79, %74 : vector<128x256xf32>
      %81 = vector.broadcast %22 : vector<1x256xf32> to vector<128x256xf32>
      %82 = arith.subf %80, %81 : vector<128x256xf32>
      %cst_27 = arith.constant 0.000000e+00 : f32
      %83 = vector.broadcast %cst_27 : f32 to vector<128x256xf32>
      %84 = arith.maximumf %82, %83 : vector<128x256xf32>
      %85 = arith.subf %78, %84 : vector<128x256xf32>
      %86 = arith.truncf %66 : vector<128x256xf32> to vector<128x256xbf16>
      %87 = arith.truncf %85 : vector<128x256xf32> to vector<128x256xbf16>
      %88 = tpu.concatenate %86, %87 in 0 : vector<128x256xbf16>, vector<128x256xbf16> -> vector<256x256xbf16>
      %c0_28 = arith.constant 0 : index
      %c0_29 = arith.constant 0 : index
      %89 = vector.load %arg5[%c0_28, %c0_29] : memref<256x256xbf16, #tpu.memory_space<vmem>>, vector<256x256xbf16>
      %cst_30 = arith.constant dense<0.000000e+00> : vector<256x256xf32>
      %90 = tpu.matmul %88, %89, %cst_30 {dimension_numbers = #tpu.dot_dimension_numbers<[1], [0], [0], [1], [0, 0, 1, 1], [], []>} : vector<256x256xbf16>, vector<256x256xbf16>, vector<256x256xf32> -> vector<256x256xf32>
      %91 = vector.broadcast %23 : vector<1x256xf32> to vector<256x256xf32>
      %92 = arith.addf %90, %91 : vector<256x256xf32>
      %93 = tpu.concatenate %85, %66 in 0 : vector<128x256xf32>, vector<128x256xf32> -> vector<256x256xf32>
      %94 = arith.mulf %92, %93 : vector<256x256xf32>
      %cst_31 = arith.constant dense<0.000000e+00> : vector<256xf32>
      %95 = vector.multi_reduction <add>, %94, %cst_31 [1] : vector<256x256xf32> to vector<256xf32>
      %96 = vector.shape_cast %95 : vector<256xf32> to vector<256x1xf32>
      %97 = arith.mulf %92, %92 : vector<256x256xf32>
      %cst_32 = arith.constant dense<0.000000e+00> : vector<256xf32>
      %98 = vector.multi_reduction <add>, %97, %cst_32 [1] : vector<256x256xf32> to vector<256xf32>
      %99 = vector.shape_cast %98 : vector<256xf32> to vector<256x1xf32>
      %cst_33 = arith.constant 1.000000e-16 : f32
      %100 = vector.broadcast %cst_33 : f32 to vector<256x1xf32>
      %101 = arith.maximumf %99, %100 : vector<256x1xf32>
      %102 = arith.mulf %93, %93 : vector<256x256xf32>
      %cst_34 = arith.constant dense<0.000000e+00> : vector<256xf32>
      %103 = vector.multi_reduction <add>, %102, %cst_34 [1] : vector<256x256xf32> to vector<256xf32>
      %104 = vector.shape_cast %103 : vector<256xf32> to vector<256x1xf32>
      %cst_35 = arith.constant 1.000000e-16 : f32
      %105 = vector.broadcast %cst_35 : f32 to vector<256x1xf32>
      %106 = arith.maximumf %104, %105 : vector<256x1xf32>
      %107 = math.rsqrt %101 : vector<256x1xf32>
      %108 = arith.mulf %96, %107 : vector<256x1xf32>
      %109 = math.rsqrt %106 : vector<256x1xf32>
      %110 = arith.mulf %108, %109 : vector<256x1xf32>
      %c0_36 = arith.constant 0 : index
      %c0_37 = arith.constant 0 : index
      %111 = vector.load %arg12[%c0_36, %c0_37] : memref<1x1xf32, #tpu.memory_space<vmem>>, vector<1x1xf32>
      %cst_38 = arith.constant dense<0.000000e+00> : vector<1xf32>
      %112 = vector.multi_reduction <add>, %110, %cst_38 [0] : vector<256x1xf32> to vector<1xf32>
      %113 = vector.shape_cast %112 : vector<1xf32> to vector<1x1xf32>
      %114 = arith.addf %111, %113 : vector<1x1xf32>
      %c0_39 = arith.constant 0 : index
      %c0_40 = arith.constant 0 : index
      %115 = vector.load %arg12[%c0_39, %c0_40] : memref<1x1xf32, #tpu.memory_space<vmem>>, vector<1x1xf32>
      tpu.vector_store %arg12[%c0_39, %c0_40], %114 {strides = array<i32>} : memref<1x1xf32, #tpu.memory_space<vmem>>, vector<1x1xf32>,
      %c0_i32_41 = arith.constant 0 : i32
      %116 = arith.cmpi eq, %arg1, %c0_i32_41 : i32
      %117 = arith.extui %116 : i1 to i32
      %c0_i32_42 = arith.constant 0 : i32
      %118 = arith.cmpi ne, %117, %c0_i32_42 : i32
      scf.if %118 {
        %c0_43 = arith.constant 0 : index
        %c0_44 = arith.constant 0 : index
        %119 = vector.load %arg12[%c0_43, %c0_44] : memref<1x1xf32, #tpu.memory_space<vmem>>, vector<1x1xf32>
        %cst_45 = arith.constant -3.906250e-03 : f32
        %120 = vector.broadcast %cst_45 : f32 to vector<1x1xf32>
        %121 = arith.mulf %120, %119 : vector<1x1xf32>
        %c0_46 = arith.constant 0 : index
        %c0_47 = arith.constant 0 : index
        %122 = vector.load %arg7[%c0_46, %c0_47] : memref<1x1xf32, #tpu.memory_space<vmem>>, vector<1x1xf32>
        tpu.vector_store %arg7[%c0_46, %c0_47], %121 {strides = array<i32>} : memref<1x1xf32, #tpu.memory_space<vmem>>, vector<1x1xf32>,
      } else {
      }
    } else {
    }
    return
  }
  func.func @transform_0(%arg0: i32, %arg1: i32) -> (i32, i32) {
    %c1_i32 = arith.constant 1 : i32
    %0 = arith.subi %c1_i32, %arg0 : i32
    %1 = arith.muli %arg1, %0 : i32
    %c0_i32 = arith.constant 0 : i32
    %c0_i32_0 = arith.constant 0 : i32
    return %1, %c0_i32 : i32, i32
  }
  func.func @transform_1(%arg0: i32, %arg1: i32) -> (i32, i32) {
    %c1_i32 = arith.constant 1 : i32
    %0 = arith.subi %c1_i32, %arg0 : i32
    %1 = arith.muli %arg1, %0 : i32
    %c0_i32 = arith.constant 0 : i32
    %c0_i32_0 = arith.constant 0 : i32
    return %1, %c0_i32 : i32, i32
  }
  func.func @transform_2(%arg0: i32, %arg1: i32) -> (i32, i32) {
    %c0_i32 = arith.constant 0 : i32
    %c0_i32_0 = arith.constant 0 : i32
    %c0_i32_1 = arith.constant 0 : i32
    return %c0_i32, %c0_i32_0 : i32, i32
  }
  func.func @transform_3(%arg0: i32, %arg1: i32) -> (i32, i32) {
    %c0_i32 = arith.constant 0 : i32
    %c0_i32_0 = arith.constant 0 : i32
    %c0_i32_1 = arith.constant 0 : i32
    return %c0_i32, %c0_i32_0 : i32, i32
  }
  func.func @transform_4(%arg0: i32, %arg1: i32) -> (i32, i32) {
    %c0_i32 = arith.constant 0 : i32
    %c0_i32_0 = arith.constant 0 : i32
    %c0_i32_1 = arith.constant 0 : i32
    return %c0_i32, %c0_i32_0 : i32, i32
  }
  func.func @transform_5(%arg0: i32, %arg1: i32) -> (i32, i32) {
    %c0_i32 = arith.constant 0 : i32
    %c0_i32_0 = arith.constant 0 : i32
    %c0_i32_1 = arith.constant 0 : i32
    return %c0_i32, %c0_i32_0 : i32, i32
  }
}

</mosaic_0001>

<llo_original>
// kernel: tpu_custom_call.1
$region0: #{tpu_custom_call.1}
  #allocation0 [shape = 'u32[]', space=smem, size = 0x4, offset = 0x4, fixed_abs, tag = 'smem constant byte address 0x4 - core index']
  #allocation1 [shape = 'u32[72,128]{1,0:T(1,128)}', space=vmem, size = 0x9000, scoped, tag = 'internal scratch']
  #allocation2 [shape = 'f32[1,256]{1,0:T(1,128)}', space=vmem, size = 0x400, scoped, tag = 'scratch operand']
  #allocation3 [shape = 'f32[1,256]{1,0:T(1,128)}', space=vmem, size = 0x400, scoped, tag = 'scratch operand']
  #allocation4 [shape = 'f32[1,256]{1,0:T(1,128)}', space=vmem, size = 0x400, scoped, tag = 'scratch operand']
  #allocation5 [shape = 'f32[1,256]{1,0:T(1,128)}', space=vmem, size = 0x400, scoped, tag = 'scratch operand']
  #allocation6 [shape = 'f32[1,1]{1,0:T(1,128)}', space=vmem, size = 0x200, scoped, tag = 'scratch operand']
  #allocation7 [shape = 'bf16[2,128,256]{2,1,0:T(8,128)(2,1)}', space=vmem, size = 0x20000, scoped, tag = 'scratch operand']
  %s0 = inlined_call_operand.hbm [shape: bf16[128,256], index: 0, kind: input, shape index: {}]
  %s1 = inlined_call_operand.hbm [shape: bf16[128,256], index: 1, kind: input, shape index: {}]
  %s2 = inlined_call_operand.hbm [shape: bf16[256,256], index: 2, kind: input, shape index: {}]
  %s3 = inlined_call_operand.hbm [shape: bf16[256,256], index: 3, kind: input, shape index: {}]
  %s4 = inlined_call_operand.hbm [shape: f32[8,256], index: 4, kind: input, shape index: {}]
  %s5 = inlined_call_operand.hbm [shape: f32[1,1], index: 5, kind: output, shape index: {}]
  %s6 = sld [smem:[#allocation0]]
  $region89: #{tpu_custom_call.1} parent=0
    _
  %s8 = ssub.s32 1, %s6
  %s9 = scalar_select 0, %s8, %s6
  $region1: #{tpu_custom_call.1} parent=0
    #allocation8 [shape = 'u8[131072]{0}', space=vmem, size = 0x20000, scoped, tag = 'input window, operand 0']
    #allocation9 [shape = 's32[2]{0}', space=sflag, size = 0x8, scoped, tag = 'scoped memory for tpu_custom_call.1']
    #allocation10 [shape = 's32[2]{0}', space=sflag, size = 0x8, scoped, tag = 'scoped memory for tpu_custom_call.1']
    #allocation11 [shape = 'u8[131072]{0}', space=vmem, size = 0x20000, scoped, tag = 'input window, operand 1']
    #allocation12 [shape = 's32[2]{0}', space=sflag, size = 0x8, scoped, tag = 'scoped memory for tpu_custom_call.1']
    #allocation13 [shape = 'u8[131072]{0}', space=vmem, size = 0x20000, scoped, tag = 'input window, operand 2, single buffered']
    #allocation14 [shape = 'u8[131072]{0}', space=vmem, size = 0x20000, scoped, tag = 'input window, operand 3, single buffered']
    #allocation15 [shape = 's32[1]{0}', space=sflag, size = 0x4, scoped, tag = 'scoped memory for tpu_custom_call.1']
    #allocation16 [shape = 'u8[8192]{0}', space=vmem, size = 0x2000, scoped, tag = 'input window, operand 4, single buffered']
    #allocation17 [shape = 'u8[512]{0}', space=vmem, size = 0x400, scoped, tag = 'output window, operand 0, single buffered']
    %10 = vsyncpa [#allocation9], 0
    %s11 = scalar_lea.sflag [#allocation9], 1
    %12 = vsyncpa %s11, 0
    %13 = vsyncpa [#allocation12], 0
    %s14 = scalar_lea.sflag [#allocation12], 1
    %15 = vsyncpa %s14, 0
    %16 = vsyncpa [#allocation15], 0
    %17 = vsyncpa [#allocation10], 0
    loop: start=0, step=1, limit=4
    $region2: #{tpu_custom_call.1} parent=1 // loop_pre_header
      _
    $region3: #{tpu_custom_call.1} parent=1 // loop_header
      %s19 = sphi 0, %s23
      %p20 = scmp.ge.s32.totalorder %s19, 4
      %s26 = sphi 0, %s38
      %s27 = sphi 0, %s34
      %s28 = sphi 0, %s26
      %s29 = sphi 0, %s27
      %s30 = sphi 0, %s28
      %s31 = sphi 0, %s29
      %s45 = sphi 0, %s47
      %s48 = sphi 0, %s45
      %s49 = sphi 0, %s48
      %s65 = sphi 0, %s49
      %s75 = sphi 0, %s77
      %s78 = sphi 0, %s75
      %s79 = sphi 0, %s78
      %s95 = sphi 0, %s79
      %s99 = sphi 0, %s99
      %s101 = sphi 0, %s99
      %s102 = sphi 0, %s101
      %s116 = sphi 0, %s102
      %s120 = sphi 0, %s120
      %s122 = sphi 0, %s120
      %s123 = sphi 0, %s122
      %s137 = sphi 0, %s123
      %s141 = sphi 0, %s141
      %s143 = sphi 0, %s141
      %s144 = sphi 0, %s143
      %s158 = sphi 0, %s144
      %s162 = sphi 0, %s162
      %s164 = sphi 0, %s162
      %s165 = sphi 0, %s164
      %s179 = sphi 0, %s165
    $region4: #{tpu_custom_call.1} parent=1 // loop_header_branch
      %22 = sbr.rel (%p20) target = $region8
    $region5: #{tpu_custom_call.1} parent=1 // loop_body
      %s24 = ssub.s32 %s19, 1
      %s25 = ssub.s32 %s19, 2
      %s32 = sadd.s32 1, %s27
      %p33 = scmp.ge.s32.totalorder %s32, 1
      %s34 = scalar_select %p33, 0, %s32
      %s35 = sadd.s32 1, %s26
      %s36 = scalar_select %p33, %s35, %s26
      %p37 = scmp.ge.s32.totalorder %s36, 2
      %s38 = scalar_select %p37, 0, %s36
      %s39 = ssub.s32 1, %s26
      %s40 = smul.u32 %s27, %s39
      %s41 = ssub.s32 1, %s38
      %s42 = smul.u32 %s34, %s41
      %s43 = ssub.s32 %s40, %s42
      %p44 = scmp.eq.s32.totalorder %s43, 0
      %s46 = sadd.s32 %s45, 1
      %s47 = scalar_select %p44, %s45, %s46
      %p50 = pneg %p44
      %p51 = scmp.eq.s32.totalorder %s19, 1
      %p52 = por %p50, %p51
      %p53 = scmp.ne.s32.totalorder %s45, %s48
      %p54 = scmp.eq.s32.totalorder %s19, 0
      %p55 = por %p53, %p54
      %p56 = scmp.ne.s32.totalorder %s45, %s48
      %p57 = scmp.eq.s32.totalorder %s24, 1
      %p58 = por %p56, %p57
      %p59 = scmp.ne.s32.totalorder %s48, %s49
      %p60 = scmp.eq.s32.totalorder %s24, 0
      %p61 = por %p59, %p60
      %p62 = scmp.ne.s32.totalorder %s48, %s49
      %p63 = scmp.eq.s32.totalorder %s25, 1
      %p64 = por %p62, %p63
      %p66 = scmp.ne.s32.totalorder %s49, %s65
      %p67 = scmp.eq.s32.totalorder %s25, 0
      %p68 = por %p66, %p67
      %s69 = ssub.s32 1, %s26
      %s70 = smul.u32 %s27, %s69
      %s71 = ssub.s32 1, %s38
      %s72 = smul.u32 %s34, %s71
      %s73 = ssub.s32 %s70, %s72
      %p74 = scmp.eq.s32.totalorder %s73, 0
      %s76 = sadd.s32 %s75, 1
      %s77 = scalar_select %p74, %s75, %s76
      %p80 = pneg %p74
      %p81 = scmp.eq.s32.totalorder %s19, 1
      %p82 = por %p80, %p81
      %p83 = scmp.ne.s32.totalorder %s75, %s78
      %p84 = scmp.eq.s32.totalorder %s19, 0
      %p85 = por %p83, %p84
      %p86 = scmp.ne.s32.totalorder %s75, %s78
      %p87 = scmp.eq.s32.totalorder %s24, 1
      %p88 = por %p86, %p87
      %p89 = scmp.ne.s32.totalorder %s78, %s79
      %p90 = scmp.eq.s32.totalorder %s24, 0
      %p91 = por %p89, %p90
      %p92 = scmp.ne.s32.totalorder %s78, %s79
      %p93 = scmp.eq.s32.totalorder %s25, 1
      %p94 = por %p92, %p93
      %p96 = scmp.ne.s32.totalorder %s79, %s95
      %p97 = scmp.eq.s32.totalorder %s25, 0
      %p98 = por %p96, %p97
      %s100 = sadd.s32 %s99, 1
      %p103 = scmp.eq.s32.totalorder %s19, 1
      %p104 = scmp.ne.s32.totalorder %s99, %s101
      %p105 = scmp.eq.s32.totalorder %s19, 0
      %p106 = por %p104, %p105
      %p107 = scmp.ne.s32.totalorder %s99, %s101
      %p108 = scmp.eq.s32.totalorder %s24, 1
      %p109 = por %p107, %p108
      %p110 = scmp.ne.s32.totalorder %s101, %s102
      %p111 = scmp.eq.s32.totalorder %s24, 0
      %p112 = por %p110, %p111
      %p113 = scmp.ne.s32.totalorder %s101, %s102
      %p114 = scmp.eq.s32.totalorder %s25, 1
      %p115 = por %p113, %p114
      %p117 = scmp.ne.s32.totalorder %s102, %s116
      %p118 = scmp.eq.s32.totalorder %s25, 0
      %p119 = por %p117, %p118
      %s121 = sadd.s32 %s120, 1
      %p124 = scmp.eq.s32.totalorder %s19, 1
      %p125 = scmp.ne.s32.totalorder %s120, %s122
      %p126 = scmp.eq.s32.totalorder %s19, 0
      %p127 = por %p125, %p126
      %p128 = scmp.ne.s32.totalorder %s120, %s122
      %p129 = scmp.eq.s32.totalorder %s24, 1
      %p130 = por %p128, %p129
      %p131 = scmp.ne.s32.totalorder %s122, %s123
      %p132 = scmp.eq.s32.totalorder %s24, 0
      %p133 = por %p131, %p132
      %p134 = scmp.ne.s32.totalorder %s122, %s123
      %p135 = scmp.eq.s32.totalorder %s25, 1
      %p136 = por %p134, %p135
      %p138 = scmp.ne.s32.totalorder %s123, %s137
      %p139 = scmp.eq.s32.totalorder %s25, 0
      %p140 = por %p138, %p139
      %s142 = sadd.s32 %s141, 1
      %p145 = scmp.eq.s32.totalorder %s19, 1
      %p146 = scmp.ne.s32.totalorder %s141, %s143
      %p147 = scmp.eq.s32.totalorder %s19, 0
      %p148 = por %p146, %p147
      %p149 = scmp.ne.s32.totalorder %s141, %s143
      %p150 = scmp.eq.s32.totalorder %s24, 1
      %p151 = por %p149, %p150
      %p152 = scmp.ne.s32.totalorder %s143, %s144
      %p153 = scmp.eq.s32.totalorder %s24, 0
      %p154 = por %p152, %p153
      %p155 = scmp.ne.s32.totalorder %s143, %s144
      %p156 = scmp.eq.s32.totalorder %s25, 1
      %p157 = por %p155, %p156
      %p159 = scmp.ne.s32.totalorder %s144, %s158
      %p160 = scmp.eq.s32.totalorder %s25, 0
      %p161 = por %p159, %p160
      %s163 = sadd.s32 %s162, 1
      %p166 = scmp.eq.s32.totalorder %s19, 1
      %p167 = scmp.ne.s32.totalorder %s162, %s164
      %p168 = scmp.eq.s32.totalorder %s19, 0
      %p169 = por %p167, %p168
      %p170 = scmp.ne.s32.totalorder %s162, %s164
      %p171 = scmp.eq.s32.totalorder %s24, 1
      %p172 = por %p170, %p171
      %p173 = scmp.ne.s32.totalorder %s164, %s165
      %p174 = scmp.eq.s32.totalorder %s24, 0
      %p175 = por %p173, %p174
      %p176 = scmp.ne.s32.totalorder %s164, %s165
      %p177 = scmp.eq.s32.totalorder %s25, 1
      %p178 = por %p176, %p177
      %p180 = scmp.ne.s32.totalorder %s165, %s179
      %p181 = scmp.eq.s32.totalorder %s25, 0
      %p182 = por %p180, %p181
      %p183 = scmp.le.s32.totalorder 1, %s19
      %p184 = scmp.lt.s32.totalorder %s19, 3
      %p185 = pnand %p183, %p184
      %p186 = pneg %p185
      // Predicated region
      $region9: #{tpu_custom_call.1} parent=5 // pred_check
        _
      $region10: #{tpu_custom_call.1} parent=5 // pred_check_branch
        %188 = sbr.rel (%p185) target = $region12
      $region11: #{tpu_custom_call.1} parent=5 // pred_region
        %s189 = ssub.s32 %s19, 1
        // Predicated region
        $region13: #{tpu_custom_call.1} parent=11 // pred_check
          %p190 = pneg %p112
        $region14: #{tpu_custom_call.1} parent=11 // pred_check_branch
          %192 = sbr.rel (%p190) target = $region16
        $region15: #{tpu_custom_call.1} parent=11 // pred_region
          %194 = vsyncadd [#allocation12], 0
          %s195 = sshll.u32 %s2, 4
          %s196 = int_to_ptr.hbm [resolvable:$true] %s195
          %s197 = sshll.u32 [#allocation13], 4
          %s198 = int_to_ptr.vmem [resolvable:$true] %s197
          %203 = dma.hbm_to_vmem [thread:$0]  %s196, 4096, %s198, [#allocation12], 128, 128, 8
        $region16: #{tpu_custom_call.1} parent=11 // pred_fallthru
          _
        // Predicated region
        $region17: #{tpu_custom_call.1} parent=11 // pred_check
          %p204 = pneg %p133
        $region18: #{tpu_custom_call.1} parent=11 // pred_check_branch
          %206 = sbr.rel (%p204) target = $region20
        $region19: #{tpu_custom_call.1} parent=11 // pred_region
          %208 = vsyncadd [#allocation15], 0
          %s209 = sshll.u32 %s3, 4
          %s210 = int_to_ptr.hbm [resolvable:$true] %s209
          %s211 = sshll.u32 [#allocation14], 4
          %s212 = int_to_ptr.vmem [resolvable:$true] %s211
          %217 = dma.hbm_to_vmem [thread:$0]  %s210, 4096, %s212, [#allocation15], 128, 128, 8
        $region20: #{tpu_custom_call.1} parent=11 // pred_fallthru
          _
        // Predicated region
        $region21: #{tpu_custom_call.1} parent=11 // pred_check
          %p218 = pneg %p154
        $region22: #{tpu_custom_call.1} parent=11 // pred_check_branch
          %220 = sbr.rel (%p218) target = $region24
        $region23: #{tpu_custom_call.1} parent=11 // pred_region
          %222 = vsyncadd [#allocation15], 0
          %s224 = sshll.u32 %s4, 4
          %s225 = int_to_ptr.hbm [resolvable:$true] %s224
          %s226 = sshll.u32 [#allocation16], 4
          %s227 = int_to_ptr.vmem [resolvable:$true] %s226
          %229 = dma.hbm_to_vmem [thread:$0]  %s225, 256, %s227, [#allocation15]
        $region24: #{tpu_custom_call.1} parent=11 // pred_fallthru
          _
      $region12: #{tpu_custom_call.1} parent=5 // pred_fallthru
        _
      %p230 = scmp.lt.s32.totalorder %s19, 2
      // Predicated region
      $region25: #{tpu_custom_call.1} parent=5 // pred_check
        %p231 = pneg %p230
      $region26: #{tpu_custom_call.1} parent=5 // pred_check_branch
        %233 = sbr.rel (%p231) target = $region28
      $region27: #{tpu_custom_call.1} parent=5 // pred_region
        // Predicated region
        $region29: #{tpu_custom_call.1} parent=27 // pred_check
          %p234 = pneg %p55
        $region30: #{tpu_custom_call.1} parent=27 // pred_check_branch
          %236 = sbr.rel (%p234) target = $region32
        $region31: #{tpu_custom_call.1} parent=27 // pred_region
          %s237 = sand.u32 %s45, 1
          %s238 = scalar_lea.sflag [#allocation9], %s237
          %s239 = sand.u32 %s45, 1
          %s240 = smul.addr %s239, 128
          %s241 = scalar_lea.vmem [#allocation8], %s240
          %s242 = ssub.s32 1, %s26
          %s243 = smul.u32 %s27, %s242
          %s244 = smul.u32 16, %s243
          %246 = vsyncadd %s238, 0
          %s247 = smul.addr %s244, 2
          %s248 = smul.addr %s247, 4
          %s249 = scalar_lea.hbm %s0, %s248
          %s250 = sshll.u32 %s249, 4
          %s251 = int_to_ptr.hbm [resolvable:$true] %s250
          %s252 = sshll.u32 %s241, 4
          %s253 = int_to_ptr.vmem [resolvable:$true] %s252
          %258 = dma.hbm_to_vmem [thread:$0]  %s251, 2048, %s253, %s238, 128, 128, 8
        $region32: #{tpu_custom_call.1} parent=27 // pred_fallthru
          _
        // Predicated region
        $region33: #{tpu_custom_call.1} parent=27 // pred_check
          %p259 = pneg %p85
        $region34: #{tpu_custom_call.1} parent=27 // pred_check_branch
          %261 = sbr.rel (%p259) target = $region36
        $region35: #{tpu_custom_call.1} parent=27 // pred_region
          %s262 = sand.u32 %s19, 1
          %s263 = scalar_lea.sflag [#allocation12], %s262
          %s264 = sand.u32 %s75, 1
          %s265 = smul.addr %s264, 128
          %s266 = scalar_lea.vmem [#allocation11], %s265
          %s267 = ssub.s32 1, %s26
          %s268 = smul.u32 %s27, %s267
          %s269 = smul.u32 16, %s268
          %271 = vsyncadd %s263, 0
          %s272 = smul.addr %s269, 2
          %s273 = smul.addr %s272, 4
          %s274 = scalar_lea.hbm %s1, %s273
          %s275 = sshll.u32 %s274, 4
          %s276 = int_to_ptr.hbm [resolvable:$true] %s275
          %s277 = sshll.u32 %s266, 4
          %s278 = int_to_ptr.vmem [resolvable:$true] %s277
          %283 = dma.hbm_to_vmem [thread:$0]  %s276, 2048, %s278, %s263, 128, 128, 8
        $region36: #{tpu_custom_call.1} parent=27 // pred_fallthru
          _
      $region28: #{tpu_custom_call.1} parent=5 // pred_fallthru
        _
      %p284 = scmp.le.s32.totalorder 1, %s19
      %p285 = scmp.lt.s32.totalorder %s19, 3
      %p286 = pnand %p284, %p285
      %p287 = pneg %p286
      // Predicated region
      $region37: #{tpu_custom_call.1} parent=5 // pred_check
        _
      $region38: #{tpu_custom_call.1} parent=5 // pred_check_branch
        %289 = sbr.rel (%p286) target = $region40
      $region39: #{tpu_custom_call.1} parent=5 // pred_region
        %s290 = ssub.s32 %s19, 1
        %s291 = sand.u32 %s48, 1
        %s292 = scalar_lea.sflag [#allocation9], %s291
        %s293 = sand.u32 %s48, 1
        %s294 = smul.addr %s293, 128
        %s295 = scalar_lea.vmem [#allocation8], %s294
        // Predicated region
        $region41: #{tpu_custom_call.1} parent=39 // pred_check
          %p296 = pneg %p61
        $region42: #{tpu_custom_call.1} parent=39 // pred_check_branch
          %298 = sbr.rel (%p296) target = $region44
        $region43: #{tpu_custom_call.1} parent=39 // pred_region
          %300 = dma.done %s292, 2048
        $region44: #{tpu_custom_call.1} parent=39 // pred_fallthru
          _
        %s301 = sand.u32 %s24, 1
        %s302 = scalar_lea.sflag [#allocation12], %s301
        %s303 = sand.u32 %s78, 1
        %s304 = smul.addr %s303, 128
        %s305 = scalar_lea.vmem [#allocation11], %s304
        // Predicated region
        $region45: #{tpu_custom_call.1} parent=39 // pred_check
          %p306 = pneg %p91
        $region46: #{tpu_custom_call.1} parent=39 // pred_check_branch
          %308 = sbr.rel (%p306) target = $region48
        $region47: #{tpu_custom_call.1} parent=39 // pred_region
          %310 = dma.done %s302, 2048
        $region48: #{tpu_custom_call.1} parent=39 // pred_fallthru
          _
        // Predicated region
        $region49: #{tpu_custom_call.1} parent=39 // pred_check
          %p311 = pneg %p112
        $region50: #{tpu_custom_call.1} parent=39 // pred_check_branch
          %313 = sbr.rel (%p311) target = $region52
        $region51: #{tpu_custom_call.1} parent=39 // pred_region
          %315 = dma.done [#allocation12], 4096
        $region52: #{tpu_custom_call.1} parent=39 // pred_fallthru
          _
        // Predicated region
        $region53: #{tpu_custom_call.1} parent=39 // pred_check
          %p316 = pneg %p133
        $region54: #{tpu_custom_call.1} parent=39 // pred_check_branch
          %318 = sbr.rel (%p316) target = $region56
        $region55: #{tpu_custom_call.1} parent=39 // pred_region
          %320 = dma.done [#allocation15], 4096
        $region56: #{tpu_custom_call.1} parent=39 // pred_fallthru
          _
        // Predicated region
        $region57: #{tpu_custom_call.1} parent=39 // pred_check
          %p321 = pneg %p154
        $region58: #{tpu_custom_call.1} parent=39 // pred_check_branch
          %323 = sbr.rel (%p321) target = $region60
        $region59: #{tpu_custom_call.1} parent=39 // pred_region
          %325 = dma.done [#allocation15], 256
        $region60: #{tpu_custom_call.1} parent=39 // pred_fallthru
          _
        %s326 = sand.u32 %s48, 1
        %s327 = scalar_lea.sflag [#allocation9], %s326
        %s328 = sand.u32 %s48, 1
        %s329 = smul.addr %s328, 128
        %s330 = scalar_lea.vmem [#allocation8], %s329
        %p331 = pneg %p61
        %p332 = pneg %p58
        %s333 = sand.u32 %s24, 1
        %s334 = scalar_lea.sflag [#allocation12], %s333
        %s335 = sand.u32 %s78, 1
        %s336 = smul.addr %s335, 128
        %s337 = scalar_lea.vmem [#allocation11], %s336
        %p338 = pneg %p91
        %p339 = pneg %p88
        %p340 = pneg %p112
        %p341 = pneg %p109
        %p342 = pneg %p133
        %p343 = pneg %p130
        %p344 = pneg %p154
        %p345 = pneg %p151
        %p346 = pneg %p175
        %p347 = pneg %p172
        %s348 = ssub.s32 1, %s28
        %s349 = smul.u32 %s29, %s348
        %s350 = smul.u32 16, %s349
        %s351 = ssub.s32 1, %s28
        %s352 = smul.u32 %s29, %s351
        %s353 = smul.u32 16, %s352
        %s354 = smul.u32 %s29, 128
        %p355 = scmp.eq.s32.totalorder %s28, 0
        %p356 = scmp.eq.s32.totalorder %s29, 0
        %p357 = pnand %p355, %p356
        %p358 = pneg %p357
        // Predicated region
        $region61: #{tpu_custom_call.1} parent=39 // pred_check
          _
        $region62: #{tpu_custom_call.1} parent=39 // pred_check_branch
          %360 = sbr.rel (%p357) target = $region64
        $region63: #{tpu_custom_call.1} parent=39 // pred_region
          %v361 = vlaneseq
          %vm362 = vcmp.ge.s32.totalorder %v361, 0
          %vm363 = vcmp.lt.s32.totalorder %v361, 256
          %vm364 = vmand %vm362, %vm363
          %365 = vst.msk [vmem:[#allocation2] sm:$0x3] %vm364, 0.0
          %366 = vst.msk [vmem:[#allocation3] sm:$0x3] %vm364, 0.0
          %367 = vst.msk [vmem:[#allocation4] sm:$0x3] %vm364, 0.0
          %368 = vst.msk [vmem:[#allocation5] sm:$0x3] %vm364, 0.0
          %vm369 = vcmask 0
          %370 = vst.msk [vmem:[#allocation6] sm:$0x1] %vm369, 0.0
        $region64: #{tpu_custom_call.1} parent=39 // pred_fallthru
          _
        // Predicated region
        $region65: #{tpu_custom_call.1} parent=39 // pred_check
          %p371 = pneg %p355
        $region66: #{tpu_custom_call.1} parent=39 // pred_check_branch
          %373 = sbr.rel (%p371) target = $region68
        $region67: #{tpu_custom_call.1} parent=39 // pred_region
          %v374 = vld [vmem:[%s295] sm:$0xff]
          %v375 = vld [vmem:[%s295 + $0x8] sm:$0xff]
          %v376 = vld [vmem:[%s295 + $0x10] sm:$0xff]
          %v377 = vld [vmem:[%s295 + $0x18] sm:$0xff]
          %v378 = vld [vmem:[%s295 + $0x20] sm:$0xff]
          %v379 = vld [vmem:[%s295 + $0x28] sm:$0xff]
          %v380 = vld [vmem:[%s295 + $0x30] sm:$0xff]
          %v381 = vld [vmem:[%s295 + $0x38] sm:$0xff]
          %v382 = vld [vmem:[%s295 + $0x40] sm:$0xff]
          %v383 = vld [vmem:[%s295 + $0x48] sm:$0xff]
          %v384 = vld [vmem:[%s295 + $0x50] sm:$0xff]
          %v385 = vld [vmem:[%s295 + $0x58] sm:$0xff]
          %v386 = vld [vmem:[%s295 + $0x60] sm:$0xff]
          %v387 = vld [vmem:[%s295 + $0x68] sm:$0xff]
          %v388 = vld [vmem:[%s295 + $0x70] sm:$0xff]
          %v389 = vld [vmem:[%s295 + $0x78] sm:$0xff]
          %v390 = vld [vmem:[%s305] sm:$0xff]
          %v391 = vld [vmem:[%s305 + $0x8] sm:$0xff]
          %v392 = vld [vmem:[%s305 + $0x10] sm:$0xff]
          %v393 = vld [vmem:[%s305 + $0x18] sm:$0xff]
          %v394 = vld [vmem:[%s305 + $0x20] sm:$0xff]
          %v395 = vld [vmem:[%s305 + $0x28] sm:$0xff]
          %v396 = vld [vmem:[%s305 + $0x30] sm:$0xff]
          %v397 = vld [vmem:[%s305 + $0x38] sm:$0xff]
          %v398 = vld [vmem:[%s305 + $0x40] sm:$0xff]
          %v399 = vld [vmem:[%s305 + $0x48] sm:$0xff]
          %v400 = vld [vmem:[%s305 + $0x50] sm:$0xff]
          %v401 = vld [vmem:[%s305 + $0x58] sm:$0xff]
          %v402 = vld [vmem:[%s305 + $0x60] sm:$0xff]
          %v403 = vld [vmem:[%s305 + $0x68] sm:$0xff]
          %v404 = vld [vmem:[%s305 + $0x70] sm:$0xff]
          %v405 = vld [vmem:[%s305 + $0x78] sm:$0xff]
          %v422 = vunpack.c.l.b16 %v374
          %v423 = vunpack.c.h.b16 %v374
          %v424 = vunpack.c.l.b16 %v375
          %v425 = vunpack.c.h.b16 %v375
          %v426 = vunpack.c.l.b16 %v376
          %v427 = vunpack.c.h.b16 %v376
          %v428 = vunpack.c.l.b16 %v377
          %v429 = vunpack.c.h.b16 %v377
          %v430 = vunpack.c.l.b16 %v378
          %v431 = vunpack.c.h.b16 %v378
          %v432 = vunpack.c.l.b16 %v379
          %v433 = vunpack.c.h.b16 %v379
          %v434 = vunpack.c.l.b16 %v380
          %v435 = vunpack.c.h.b16 %v380
          %v436 = vunpack.c.l.b16 %v381
          %v437 = vunpack.c.h.b16 %v381
          %v438 = vunpack.c.l.b16 %v382
          %v439 = vunpack.c.h.b16 %v382
          %v440 = vunpack.c.l.b16 %v383
          %v441 = vunpack.c.h.b16 %v383
          %v442 = vunpack.c.l.b16 %v384
          %v443 = vunpack.c.h.b16 %v384
          %v444 = vunpack.c.l.b16 %v385
          %v445 = vunpack.c.h.b16 %v385
          %v446 = vunpack.c.l.b16 %v386
          %v447 = vunpack.c.h.b16 %v386
          %v448 = vunpack.c.l.b16 %v387
          %v449 = vunpack.c.h.b16 %v387
          %v450 = vunpack.c.l.b16 %v388
          %v451 = vunpack.c.h.b16 %v388
          %v452 = vunpack.c.l.b16 %v389
          %v453 = vunpack.c.h.b16 %v389
          %v454 = vpack.c.b16 %v424, %v422
          %v455 = vpack.c.b16 %v425, %v423
          %v456 = vpack.c.b16 %v428, %v426
          %v457 = vpack.c.b16 %v429, %v427
          %v458 = vpack.c.b16 %v432, %v430
          %v459 = vpack.c.b16 %v433, %v431
          %v460 = vpack.c.b16 %v436, %v434
          %v461 = vpack.c.b16 %v437, %v435
          %v462 = vpack.c.b16 %v440, %v438
          %v463 = vpack.c.b16 %v441, %v439
          %v464 = vpack.c.b16 %v444, %v442
          %v465 = vpack.c.b16 %v445, %v443
          %v466 = vpack.c.b16 %v448, %v446
          %v467 = vpack.c.b16 %v449, %v447
          %v468 = vpack.c.b16 %v452, %v450
          %v469 = vpack.c.b16 %v453, %v451
          %v502 = vunpack.c.l.b16 %v390
          %v503 = vunpack.c.h.b16 %v390
          %v504 = vunpack.c.l.b16 %v391
          %v505 = vunpack.c.h.b16 %v391
          %v506 = vunpack.c.l.b16 %v392
          %v507 = vunpack.c.h.b16 %v392
          %v508 = vunpack.c.l.b16 %v393
          %v509 = vunpack.c.h.b16 %v393
          %v510 = vunpack.c.l.b16 %v394
          %v511 = vunpack.c.h.b16 %v394
          %v512 = vunpack.c.l.b16 %v395
          %v513 = vunpack.c.h.b16 %v395
          %v514 = vunpack.c.l.b16 %v396
          %v515 = vunpack.c.h.b16 %v396
          %v516 = vunpack.c.l.b16 %v397
          %v517 = vunpack.c.h.b16 %v397
          %v518 = vunpack.c.l.b16 %v398
          %v519 = vunpack.c.h.b16 %v398
          %v520 = vunpack.c.l.b16 %v399
          %v521 = vunpack.c.h.b16 %v399
          %v522 = vunpack.c.l.b16 %v400
          %v523 = vunpack.c.h.b16 %v400
          %v524 = vunpack.c.l.b16 %v401
          %v525 = vunpack.c.h.b16 %v401
          %v526 = vunpack.c.l.b16 %v402
          %v527 = vunpack.c.h.b16 %v402
          %v528 = vunpack.c.l.b16 %v403
          %v529 = vunpack.c.h.b16 %v403
          %v530 = vunpack.c.l.b16 %v404
          %v531 = vunpack.c.h.b16 %v404
          %v532 = vunpack.c.l.b16 %v405
          %v533 = vunpack.c.h.b16 %v405
          %v534 = vpack.c.b16 %v504, %v502
          %v535 = vpack.c.b16 %v505, %v503
          %v536 = vpack.c.b16 %v508, %v506
          %v537 = vpack.c.b16 %v509, %v507
          %v538 = vpack.c.b16 %v512, %v510
          %v539 = vpack.c.b16 %v513, %v511
          %v540 = vpack.c.b16 %v516, %v514
          %v541 = vpack.c.b16 %v517, %v515
          %v542 = vpack.c.b16 %v520, %v518
          %v543 = vpack.c.b16 %v521, %v519
          %v544 = vpack.c.b16 %v524, %v522
          %v545 = vpack.c.b16 %v525, %v523
          %v546 = vpack.c.b16 %v528, %v526
          %v547 = vpack.c.b16 %v529, %v527
          %v548 = vpack.c.b16 %v532, %v530
          %v549 = vpack.c.b16 %v533, %v531
          %v566 = vld [vmem:[#allocation13] sm:$0xff]
          %v567 = vld [vmem:[#allocation13 + $0x8] sm:$0xff]
          %v568 = vld [vmem:[#allocation13 + $0x10] sm:$0xff]
          %v569 = vld [vmem:[#allocation13 + $0x18] sm:$0xff]
          %v570 = vld [vmem:[#allocation13 + $0x20] sm:$0xff]
          %v571 = vld [vmem:[#allocation13 + $0x28] sm:$0xff]
          %v572 = vld [vmem:[#allocation13 + $0x30] sm:$0xff]
          %v573 = vld [vmem:[#allocation13 + $0x38] sm:$0xff]
          %v574 = vld [vmem:[#allocation13 + $0x40] sm:$0xff]
          %v575 = vld [vmem:[#allocation13 + $0x48] sm:$0xff]
          %v576 = vld [vmem:[#allocation13 + $0x50] sm:$0xff]
          %v577 = vld [vmem:[#allocation13 + $0x58] sm:$0xff]
          %v578 = vld [vmem:[#allocation13 + $0x60] sm:$0xff]
          %v579 = vld [vmem:[#allocation13 + $0x68] sm:$0xff]
          %v580 = vld [vmem:[#allocation13 + $0x70] sm:$0xff]
          %v581 = vld [vmem:[#allocation13 + $0x78] sm:$0xff]
          %v582 = vld [vmem:[#allocation13 + $0x80] sm:$0xff]
          %v583 = vld [vmem:[#allocation13 + $0x88] sm:$0xff]
          %v584 = vld [vmem:[#allocation13 + $0x90] sm:$0xff]
          %v585 = vld [vmem:[#allocation13 + $0x98] sm:$0xff]
          %v586 = vld [vmem:[#allocation13 + $0xa0] sm:$0xff]
          %v587 = vld [vmem:[#allocation13 + $0xa8] sm:$0xff]
          %v588 = vld [vmem:[#allocation13 + $0xb0] sm:$0xff]
          %v589 = vld [vmem:[#allocation13 + $0xb8] sm:$0xff]
          %v590 = vld [vmem:[#allocation13 + $0xc0] sm:$0xff]
          %v591 = vld [vmem:[#allocation13 + $0xc8] sm:$0xff]
          %v592 = vld [vmem:[#allocation13 + $0xd0] sm:$0xff]
          %v593 = vld [vmem:[#allocation13 + $0xd8] sm:$0xff]
          %v594 = vld [vmem:[#allocation13 + $0xe0] sm:$0xff]
          %v595 = vld [vmem:[#allocation13 + $0xe8] sm:$0xff]
          %v596 = vld [vmem:[#allocation13 + $0xf0] sm:$0xff]
          %v597 = vld [vmem:[#allocation13 + $0xf8] sm:$0xff]
          %v630 = vunpack.c.l.b16 %v566
          %v631 = vunpack.c.h.b16 %v566
          %v632 = vunpack.c.l.b16 %v567
          %v633 = vunpack.c.h.b16 %v567
          %v634 = vunpack.c.l.b16 %v568
          %v635 = vunpack.c.h.b16 %v568
          %v636 = vunpack.c.l.b16 %v569
          %v637 = vunpack.c.h.b16 %v569
          %v638 = vunpack.c.l.b16 %v570
          %v639 = vunpack.c.h.b16 %v570
          %v640 = vunpack.c.l.b16 %v571
          %v641 = vunpack.c.h.b16 %v571
          %v642 = vunpack.c.l.b16 %v572
          %v643 = vunpack.c.h.b16 %v572
          %v644 = vunpack.c.l.b16 %v573
          %v645 = vunpack.c.h.b16 %v573
          %v646 = vunpack.c.l.b16 %v574
          %v647 = vunpack.c.h.b16 %v574
          %v648 = vunpack.c.l.b16 %v575
          %v649 = vunpack.c.h.b16 %v575
          %v650 = vunpack.c.l.b16 %v576
          %v651 = vunpack.c.h.b16 %v576
          %v652 = vunpack.c.l.b16 %v577
          %v653 = vunpack.c.h.b16 %v577
          %v654 = vunpack.c.l.b16 %v578
          %v655 = vunpack.c.h.b16 %v578
          %v656 = vunpack.c.l.b16 %v579
          %v657 = vunpack.c.h.b16 %v579
          %v658 = vunpack.c.l.b16 %v580
          %v659 = vunpack.c.h.b16 %v580
          %v660 = vunpack.c.l.b16 %v581
          %v661 = vunpack.c.h.b16 %v581
          %v662 = vunpack.c.l.b16 %v582
          %v663 = vunpack.c.h.b16 %v582
          %v664 = vunpack.c.l.b16 %v583
          %v665 = vunpack.c.h.b16 %v583
          %v666 = vunpack.c.l.b16 %v584
          %v667 = vunpack.c.h.b16 %v584
          %v668 = vunpack.c.l.b16 %v585
          %v669 = vunpack.c.h.b16 %v585
          %v670 = vunpack.c.l.b16 %v586
          %v671 = vunpack.c.h.b16 %v586
          %v672 = vunpack.c.l.b16 %v587
          %v673 = vunpack.c.h.b16 %v587
          %v674 = vunpack.c.l.b16 %v588
          %v675 = vunpack.c.h.b16 %v588
          %v676 = vunpack.c.l.b16 %v589
          %v677 = vunpack.c.h.b16 %v589
          %v678 = vunpack.c.l.b16 %v590
          %v679 = vunpack.c.h.b16 %v590
          %v680 = vunpack.c.l.b16 %v591
          %v681 = vunpack.c.h.b16 %v591
          %v682 = vunpack.c.l.b16 %v592
          %v683 = vunpack.c.h.b16 %v592
          %v684 = vunpack.c.l.b16 %v593
          %v685 = vunpack.c.h.b16 %v593
          %v686 = vunpack.c.l.b16 %v594
          %v687 = vunpack.c.h.b16 %v594
          %v688 = vunpack.c.l.b16 %v595
          %v689 = vunpack.c.h.b16 %v595
          %v690 = vunpack.c.l.b16 %v596
          %v691 = vunpack.c.h.b16 %v596
          %v692 = vunpack.c.l.b16 %v597
          %v693 = vunpack.c.h.b16 %v597
          %v694 = vpack.c.b16 %v632, %v630
          %v695 = vpack.c.b16 %v633, %v631
          %v696 = vpack.c.b16 %v636, %v634
          %v697 = vpack.c.b16 %v637, %v635
          %v698 = vpack.c.b16 %v640, %v638
          %v699 = vpack.c.b16 %v641, %v639
          %v700 = vpack.c.b16 %v644, %v642
          %v701 = vpack.c.b16 %v645, %v643
          %v702 = vpack.c.b16 %v648, %v646
          %v703 = vpack.c.b16 %v649, %v647
          %v704 = vpack.c.b16 %v652, %v650
          %v705 = vpack.c.b16 %v653, %v651
          %v706 = vpack.c.b16 %v656, %v654
          %v707 = vpack.c.b16 %v657, %v655
          %v708 = vpack.c.b16 %v660, %v658
          %v709 = vpack.c.b16 %v661, %v659
          %v710 = vpack.c.b16 %v664, %v662
          %v711 = vpack.c.b16 %v665, %v663
          %v712 = vpack.c.b16 %v668, %v666
          %v713 = vpack.c.b16 %v669, %v667
          %v714 = vpack.c.b16 %v672, %v670
          %v715 = vpack.c.b16 %v673, %v671
          %v716 = vpack.c.b16 %v676, %v674
          %v717 = vpack.c.b16 %v677, %v675
          %v718 = vpack.c.b16 %v680, %v678
          %v719 = vpack.c.b16 %v681, %v679
          %v720 = vpack.c.b16 %v684, %v682
          %v721 = vpack.c.b16 %v685, %v683
          %v722 = vpack.c.b16 %v688, %v686
          %v723 = vpack.c.b16 %v689, %v687
          %v724 = vpack.c.b16 %v692, %v690
          %v725 = vpack.c.b16 %v693, %v691
          %758 = vmatpush.bf16.msra.mxu0 %v708
          %759 = vmatpush.bf16.msra.mxu0 %v706
          %760 = vmatpush.bf16.msra.mxu0 %v704
          %761 = vmatpush.bf16.msra.mxu0 %v702
          %762 = vmatpush.bf16.msra.mxu0 %v700
          %763 = vmatpush.bf16.msra.mxu0 %v698
          %764 = vmatpush.bf16.msra.mxu0 %v696
          %765 = vmatpush.bf16.msra.mxu0 %v694
          %766 = vmatmul.bf16.gmra.mxu0 %v454
          %v767 = vpop.f32.mrf.mxu0
          %v768 = vadd.f32 0.0, %v767
          %v769 = vpop.f32.mrf.mxu0
          %v770 = vadd.f32 0.0, %v769
          %771 = vmatmul.bf16.gmra.mxu0 %v456
          %v772 = vpop.f32.mrf.mxu0
          %v773 = vadd.f32 0.0, %v772
          %v774 = vpop.f32.mrf.mxu0
          %v775 = vadd.f32 0.0, %v774
          %776 = vmatmul.bf16.gmra.mxu0 %v458
          %v777 = vpop.f32.mrf.mxu0
          %v778 = vadd.f32 0.0, %v777
          %v779 = vpop.f32.mrf.mxu0
          %v780 = vadd.f32 0.0, %v779
          %781 = vmatmul.bf16.gmra.mxu0 %v460
          %v782 = vpop.f32.mrf.mxu0
          %v783 = vadd.f32 0.0, %v782
          %v784 = vpop.f32.mrf.mxu0
          %v785 = vadd.f32 0.0, %v784
          %786 = vmatmul.bf16.gmra.mxu0 %v462
          %v787 = vpop.f32.mrf.mxu0
          %v788 = vadd.f32 0.0, %v787
          %v789 = vpop.f32.mrf.mxu0
          %v790 = vadd.f32 0.0, %v789
          %791 = vmatmul.bf16.gmra.mxu0 %v464
          %v792 = vpop.f32.mrf.mxu0
          %v793 = vadd.f32 0.0, %v792
          %v794 = vpop.f32.mrf.mxu0
          %v795 = vadd.f32 0.0, %v794
          %796 = vmatmul.bf16.gmra.mxu0 %v466
          %v797 = vpop.f32.mrf.mxu0
          %v798 = vadd.f32 0.0, %v797
          %v799 = vpop.f32.mrf.mxu0
          %v800 = vadd.f32 0.0, %v799
          %801 = vmatmul.bf16.gmra.mxu0 %v468
          %v802 = vpop.f32.mrf.mxu0
          %v803 = vadd.f32 0.0, %v802
          %v804 = vpop.f32.mrf.mxu0
          %v805 = vadd.f32 0.0, %v804
          %806 = vmatmul.bf16.gmra.mxu0 %v534
          %v807 = vpop.f32.mrf.mxu0
          %v808 = vadd.f32 0.0, %v807
          %v809 = vpop.f32.mrf.mxu0
          %v810 = vadd.f32 0.0, %v809
          %811 = vmatmul.bf16.gmra.mxu0 %v536
          %v812 = vpop.f32.mrf.mxu0
          %v813 = vadd.f32 0.0, %v812
          %v814 = vpop.f32.mrf.mxu0
          %v815 = vadd.f32 0.0, %v814
          %816 = vmatmul.bf16.gmra.mxu0 %v538
          %v817 = vpop.f32.mrf.mxu0
          %v818 = vadd.f32 0.0, %v817
          %v819 = vpop.f32.mrf.mxu0
          %v820 = vadd.f32 0.0, %v819
          %821 = vmatmul.bf16.gmra.mxu0 %v540
          %v822 = vpop.f32.mrf.mxu0
          %v823 = vadd.f32 0.0, %v822
          %v824 = vpop.f32.mrf.mxu0
          %v825 = vadd.f32 0.0, %v824
          %826 = vmatmul.bf16.gmra.mxu0 %v542
          %v827 = vpop.f32.mrf.mxu0
          %v828 = vadd.f32 0.0, %v827
          %v829 = vpop.f32.mrf.mxu0
          %v830 = vadd.f32 0.0, %v829
          %831 = vmatmul.bf16.gmra.mxu0 %v544
          %v832 = vpop.f32.mrf.mxu0
          %v833 = vadd.f32 0.0, %v832
          %v834 = vpop.f32.mrf.mxu0
          %v835 = vadd.f32 0.0, %v834
          %836 = vmatmul.bf16.gmra.mxu0 %v546
          %v837 = vpop.f32.mrf.mxu0
          %v838 = vadd.f32 0.0, %v837
          %v839 = vpop.f32.mrf.mxu0
          %v840 = vadd.f32 0.0, %v839
          %841 = vmatmul.bf16.gmra.mxu0 %v548
          %v842 = vpop.f32.mrf.mxu0
          %v843 = vadd.f32 0.0, %v842
          %v844 = vpop.f32.mrf.mxu0
          %v845 = vadd.f32 0.0, %v844
          %846 = vdwg.mxu0
          %847 = vmatpush.bf16.msra.mxu0 %v724
          %848 = vmatpush.bf16.msra.mxu0 %v722
          %849 = vmatpush.bf16.msra.mxu0 %v720
          %850 = vmatpush.bf16.msra.mxu0 %v718
          %851 = vmatpush.bf16.msra.mxu0 %v716
          %852 = vmatpush.bf16.msra.mxu0 %v714
          %853 = vmatpush.bf16.msra.mxu0 %v712
          %854 = vmatpush.bf16.msra.mxu0 %v710
          %855 = vmatmul.bf16.gmra.mxu0 %v455
          %v856 = vpop.f32.mrf.mxu0
          %v857 = vadd.f32 %v768, %v856
          %v858 = vpop.f32.mrf.mxu0
          %v859 = vadd.f32 %v770, %v858
          %860 = vmatmul.bf16.gmra.mxu0 %v457
          %v861 = vpop.f32.mrf.mxu0
          %v862 = vadd.f32 %v773, %v861
          %v863 = vpop.f32.mrf.mxu0
          %v864 = vadd.f32 %v775, %v863
          %865 = vmatmul.bf16.gmra.mxu0 %v459
          %v866 = vpop.f32.mrf.mxu0
          %v867 = vadd.f32 %v778, %v866
          %v868 = vpop.f32.mrf.mxu0
          %v869 = vadd.f32 %v780, %v868
          %870 = vmatmul.bf16.gmra.mxu0 %v461
          %v871 = vpop.f32.mrf.mxu0
          %v872 = vadd.f32 %v783, %v871
          %v873 = vpop.f32.mrf.mxu0
          %v874 = vadd.f32 %v785, %v873
          %875 = vmatmul.bf16.gmra.mxu0 %v463
          %v876 = vpop.f32.mrf.mxu0
          %v877 = vadd.f32 %v788, %v876
          %v878 = vpop.f32.mrf.mxu0
          %v879 = vadd.f32 %v790, %v878
          %880 = vmatmul.bf16.gmra.mxu0 %v465
          %v881 = vpop.f32.mrf.mxu0
          %v882 = vadd.f32 %v793, %v881
          %v883 = vpop.f32.mrf.mxu0
          %v884 = vadd.f32 %v795, %v883
          %885 = vmatmul.bf16.gmra.mxu0 %v467
          %v886 = vpop.f32.mrf.mxu0
          %v887 = vadd.f32 %v798, %v886
          %v888 = vpop.f32.mrf.mxu0
          %v889 = vadd.f32 %v800, %v888
          %890 = vmatmul.bf16.gmra.mxu0 %v469
          %v891 = vpop.f32.mrf.mxu0
          %v892 = vadd.f32 %v803, %v891
          %v893 = vpop.f32.mrf.mxu0
          %v894 = vadd.f32 %v805, %v893
          %895 = vmatmul.bf16.gmra.mxu0 %v535
          %v896 = vpop.f32.mrf.mxu0
          %v897 = vadd.f32 %v808, %v896
          %v898 = vpop.f32.mrf.mxu0
          %v899 = vadd.f32 %v810, %v898
          %900 = vmatmul.bf16.gmra.mxu0 %v537
          %v901 = vpop.f32.mrf.mxu0
          %v902 = vadd.f32 %v813, %v901
          %v903 = vpop.f32.mrf.mxu0
          %v904 = vadd.f32 %v815, %v903
          %905 = vmatmul.bf16.gmra.mxu0 %v539
          %v906 = vpop.f32.mrf.mxu0
          %v907 = vadd.f32 %v818, %v906
          %v908 = vpop.f32.mrf.mxu0
          %v909 = vadd.f32 %v820, %v908
          %910 = vmatmul.bf16.gmra.mxu0 %v541
          %v911 = vpop.f32.mrf.mxu0
          %v912 = vadd.f32 %v823, %v911
          %v913 = vpop.f32.mrf.mxu0
          %v914 = vadd.f32 %v825, %v913
          %915 = vmatmul.bf16.gmra.mxu0 %v543
          %v916 = vpop.f32.mrf.mxu0
          %v917 = vadd.f32 %v828, %v916
          %v918 = vpop.f32.mrf.mxu0
          %v919 = vadd.f32 %v830, %v918
          %920 = vmatmul.bf16.gmra.mxu0 %v545
          %v921 = vpop.f32.mrf.mxu0
          %v922 = vadd.f32 %v833, %v921
          %v923 = vpop.f32.mrf.mxu0
          %v924 = vadd.f32 %v835, %v923
          %925 = vmatmul.bf16.gmra.mxu0 %v547
          %v926 = vpop.f32.mrf.mxu0
          %v927 = vadd.f32 %v838, %v926
          %v928 = vpop.f32.mrf.mxu0
          %v929 = vadd.f32 %v840, %v928
          %930 = vmatmul.bf16.gmra.mxu0 %v549
          %v931 = vpop.f32.mrf.mxu0
          %v932 = vadd.f32 %v843, %v931
          %v933 = vpop.f32.mrf.mxu0
          %v934 = vadd.f32 %v845, %v933
          %935 = vdwg.mxu0
          %936 = vmatpush.bf16.msra.mxu0 %v709
          %937 = vmatpush.bf16.msra.mxu0 %v707
          %938 = vmatpush.bf16.msra.mxu0 %v705
          %939 = vmatpush.bf16.msra.mxu0 %v703
          %940 = vmatpush.bf16.msra.mxu0 %v701
          %941 = vmatpush.bf16.msra.mxu0 %v699
          %942 = vmatpush.bf16.msra.mxu0 %v697
          %943 = vmatpush.bf16.msra.mxu0 %v695
          %944 = vmatmul.bf16.gmra.mxu0 %v454
          %v945 = vpop.f32.mrf.mxu0
          %v946 = vadd.f32 0.0, %v945
          %v947 = vpop.f32.mrf.mxu0
          %v948 = vadd.f32 0.0, %v947
          %949 = vmatmul.bf16.gmra.mxu0 %v456
          %v950 = vpop.f32.mrf.mxu0
          %v951 = vadd.f32 0.0, %v950
          %v952 = vpop.f32.mrf.mxu0
          %v953 = vadd.f32 0.0, %v952
          %954 = vmatmul.bf16.gmra.mxu0 %v458
          %v955 = vpop.f32.mrf.mxu0
          %v956 = vadd.f32 0.0, %v955
          %v957 = vpop.f32.mrf.mxu0
          %v958 = vadd.f32 0.0, %v957
          %959 = vmatmul.bf16.gmra.mxu0 %v460
          %v960 = vpop.f32.mrf.mxu0
          %v961 = vadd.f32 0.0, %v960
          %v962 = vpop.f32.mrf.mxu0
          %v963 = vadd.f32 0.0, %v962
          %964 = vmatmul.bf16.gmra.mxu0 %v462
          %v965 = vpop.f32.mrf.mxu0
          %v966 = vadd.f32 0.0, %v965
          %v967 = vpop.f32.mrf.mxu0
          %v968 = vadd.f32 0.0, %v967
          %969 = vmatmul.bf16.gmra.mxu0 %v464
          %v970 = vpop.f32.mrf.mxu0
          %v971 = vadd.f32 0.0, %v970
          %v972 = vpop.f32.mrf.mxu0
          %v973 = vadd.f32 0.0, %v972
          %974 = vmatmul.bf16.gmra.mxu0 %v466
          %v975 = vpop.f32.mrf.mxu0
          %v976 = vadd.f32 0.0, %v975
          %v977 = vpop.f32.mrf.mxu0
          %v978 = vadd.f32 0.0, %v977
          %979 = vmatmul.bf16.gmra.mxu0 %v468
          %v980 = vpop.f32.mrf.mxu0
          %v981 = vadd.f32 0.0, %v980
          %v982 = vpop.f32.mrf.mxu0
          %v983 = vadd.f32 0.0, %v982
          %984 = vmatmul.bf16.gmra.mxu0 %v534
          %v985 = vpop.f32.mrf.mxu0
          %v986 = vadd.f32 0.0, %v985
          %v987 = vpop.f32.mrf.mxu0
          %v988 = vadd.f32 0.0, %v987
          %989 = vmatmul.bf16.gmra.mxu0 %v536
          %v990 = vpop.f32.mrf.mxu0
          %v991 = vadd.f32 0.0, %v990
          %v992 = vpop.f32.mrf.mxu0
          %v993 = vadd.f32 0.0, %v992
          %994 = vmatmul.bf16.gmra.mxu0 %v538
          %v995 = vpop.f32.mrf.mxu0
          %v996 = vadd.f32 0.0, %v995
          %v997 = vpop.f32.mrf.mxu0
          %v998 = vadd.f32 0.0, %v997
          %999 = vmatmul.bf16.gmra.mxu0 %v540
          %v1000 = vpop.f32.mrf.mxu0
          %v1001 = vadd.f32 0.0, %v1000
          %v1002 = vpop.f32.mrf.mxu0
          %v1003 = vadd.f32 0.0, %v1002
          %1004 = vmatmul.bf16.gmra.mxu0 %v542
          %v1005 = vpop.f32.mrf.mxu0
          %v1006 = vadd.f32 0.0, %v1005
          %v1007 = vpop.f32.mrf.mxu0
          %v1008 = vadd.f32 0.0, %v1007
          %1009 = vmatmul.bf16.gmra.mxu0 %v544
          %v1010 = vpop.f32.mrf.mxu0
          %v1011 = vadd.f32 0.0, %v1010
          %v1012 = vpop.f32.mrf.mxu0
          %v1013 = vadd.f32 0.0, %v1012
          %1014 = vmatmul.bf16.gmra.mxu0 %v546
          %v1015 = vpop.f32.mrf.mxu0
          %v1016 = vadd.f32 0.0, %v1015
          %v1017 = vpop.f32.mrf.mxu0
          %v1018 = vadd.f32 0.0, %v1017
          %1019 = vmatmul.bf16.gmra.mxu0 %v548
          %v1020 = vpop.f32.mrf.mxu0
          %v1021 = vadd.f32 0.0, %v1020
          %v1022 = vpop.f32.mrf.mxu0
          %v1023 = vadd.f32 0.0, %v1022
          %1024 = vdwg.mxu0
          %1025 = vmatpush.bf16.msra.mxu0 %v725
          %1026 = vmatpush.bf16.msra.mxu0 %v723
          %1027 = vmatpush.bf16.msra.mxu0 %v721
          %1028 = vmatpush.bf16.msra.mxu0 %v719
          %1029 = vmatpush.bf16.msra.mxu0 %v717
          %1030 = vmatpush.bf16.msra.mxu0 %v715
          %1031 = vmatpush.bf16.msra.mxu0 %v713
          %1032 = vmatpush.bf16.msra.mxu0 %v711
          %1033 = vmatmul.bf16.gmra.mxu0 %v455
          %v1034 = vpop.f32.mrf.mxu0
          %v1035 = vadd.f32 %v946, %v1034
          %v1036 = vpop.f32.mrf.mxu0
          %v1037 = vadd.f32 %v948, %v1036
          %1038 = vmatmul.bf16.gmra.mxu0 %v457
          %v1039 = vpop.f32.mrf.mxu0
          %v1040 = vadd.f32 %v951, %v1039
          %v1041 = vpop.f32.mrf.mxu0
          %v1042 = vadd.f32 %v953, %v1041
          %1043 = vmatmul.bf16.gmra.mxu0 %v459
          %v1044 = vpop.f32.mrf.mxu0
          %v1045 = vadd.f32 %v956, %v1044
          %v1046 = vpop.f32.mrf.mxu0
          %v1047 = vadd.f32 %v958, %v1046
          %1048 = vmatmul.bf16.gmra.mxu0 %v461
          %v1049 = vpop.f32.mrf.mxu0
          %v1050 = vadd.f32 %v961, %v1049
          %v1051 = vpop.f32.mrf.mxu0
          %v1052 = vadd.f32 %v963, %v1051
          %1053 = vmatmul.bf16.gmra.mxu0 %v463
          %v1054 = vpop.f32.mrf.mxu0
          %v1055 = vadd.f32 %v966, %v1054
          %v1056 = vpop.f32.mrf.mxu0
          %v1057 = vadd.f32 %v968, %v1056
          %1058 = vmatmul.bf16.gmra.mxu0 %v465
          %v1059 = vpop.f32.mrf.mxu0
          %v1060 = vadd.f32 %v971, %v1059
          %v1061 = vpop.f32.mrf.mxu0
          %v1062 = vadd.f32 %v973, %v1061
          %1063 = vmatmul.bf16.gmra.mxu0 %v467
          %v1064 = vpop.f32.mrf.mxu0
          %v1065 = vadd.f32 %v976, %v1064
          %v1066 = vpop.f32.mrf.mxu0
          %v1067 = vadd.f32 %v978, %v1066
          %1068 = vmatmul.bf16.gmra.mxu0 %v469
          %v1069 = vpop.f32.mrf.mxu0
          %v1070 = vadd.f32 %v981, %v1069
          %v1071 = vpop.f32.mrf.mxu0
          %v1072 = vadd.f32 %v983, %v1071
          %1073 = vmatmul.bf16.gmra.mxu0 %v535
          %v1074 = vpop.f32.mrf.mxu0
          %v1075 = vadd.f32 %v986, %v1074
          %v1076 = vpop.f32.mrf.mxu0
          %v1077 = vadd.f32 %v988, %v1076
          %1078 = vmatmul.bf16.gmra.mxu0 %v537
          %v1079 = vpop.f32.mrf.mxu0
          %v1080 = vadd.f32 %v991, %v1079
          %v1081 = vpop.f32.mrf.mxu0
          %v1082 = vadd.f32 %v993, %v1081
          %1083 = vmatmul.bf16.gmra.mxu0 %v539
          %v1084 = vpop.f32.mrf.mxu0
          %v1085 = vadd.f32 %v996, %v1084
          %v1086 = vpop.f32.mrf.mxu0
          %v1087 = vadd.f32 %v998, %v1086
          %1088 = vmatmul.bf16.gmra.mxu0 %v541
          %v1089 = vpop.f32.mrf.mxu0
          %v1090 = vadd.f32 %v1001, %v1089
          %v1091 = vpop.f32.mrf.mxu0
          %v1092 = vadd.f32 %v1003, %v1091
          %1093 = vmatmul.bf16.gmra.mxu0 %v543
          %v1094 = vpop.f32.mrf.mxu0
          %v1095 = vadd.f32 %v1006, %v1094
          %v1096 = vpop.f32.mrf.mxu0
          %v1097 = vadd.f32 %v1008, %v1096
          %1098 = vmatmul.bf16.gmra.mxu0 %v545
          %v1099 = vpop.f32.mrf.mxu0
          %v1100 = vadd.f32 %v1011, %v1099
          %v1101 = vpop.f32.mrf.mxu0
          %v1102 = vadd.f32 %v1013, %v1101
          %1103 = vmatmul.bf16.gmra.mxu0 %v547
          %v1104 = vpop.f32.mrf.mxu0
          %v1105 = vadd.f32 %v1016, %v1104
          %v1106 = vpop.f32.mrf.mxu0
          %v1107 = vadd.f32 %v1018, %v1106
          %1108 = vmatmul.bf16.gmra.mxu0 %v549
          %v1109 = vpop.f32.mrf.mxu0
          %v1110 = vadd.f32 %v1021, %v1109
          %v1111 = vpop.f32.mrf.mxu0
          %v1112 = vadd.f32 %v1023, %v1111
          %1113 = vdwg.mxu0
          %v1114 = vld [vmem:[#allocation2] sm:$0x3]
          %v1115 = vadd.f32 %v857, %v859
          %v1116 = vadd.f32 %v1115, %v862
          %v1117 = vadd.f32 %v1116, %v864
          %v1118 = vadd.f32 %v1117, %v867
          %v1119 = vadd.f32 %v1118, %v869
          %v1120 = vadd.f32 %v1119, %v872
          %v1121 = vadd.f32 %v1120, %v874
          %v1122 = vadd.f32 %v1121, %v877
          %v1123 = vadd.f32 %v1122, %v879
          %v1124 = vadd.f32 %v1123, %v882
          %v1125 = vadd.f32 %v1124, %v884
          %v1126 = vadd.f32 %v1125, %v887
          %v1127 = vadd.f32 %v1126, %v889
          %v1128 = vadd.f32 %v1127, %v892
          %v1129 = vadd.f32 %v1128, %v894
          %v1130 = vrot.slane %v1129, 4
          %v1131 = vadd.f32 %v1129, %v1130
          %v1132 = vrot.slane %v1131, 2
          %v1133 = vadd.f32 %v1131, %v1132
          %v1134 = vrot.slane %v1133, 1
          %v1135 = vadd.f32 %v1133, %v1134
          %v1136 = vadd.f32 %v1035, %v1037
          %v1137 = vadd.f32 %v1136, %v1040
          %v1138 = vadd.f32 %v1137, %v1042
          %v1139 = vadd.f32 %v1138, %v1045
          %v1140 = vadd.f32 %v1139, %v1047
          %v1141 = vadd.f32 %v1140, %v1050
          %v1142 = vadd.f32 %v1141, %v1052
          %v1143 = vadd.f32 %v1142, %v1055
          %v1144 = vadd.f32 %v1143, %v1057
          %v1145 = vadd.f32 %v1144, %v1060
          %v1146 = vadd.f32 %v1145, %v1062
          %v1147 = vadd.f32 %v1146, %v1065
          %v1148 = vadd.f32 %v1147, %v1067
          %v1149 = vadd.f32 %v1148, %v1070
          %v1150 = vadd.f32 %v1149, %v1072
          %v1151 = vrot.slane %v1150, 4
          %v1152 = vadd.f32 %v1150, %v1151
          %v1153 = vrot.slane %v1152, 2
          %v1154 = vadd.f32 %v1152, %v1153
          %v1155 = vrot.slane %v1154, 1
          %v1156 = vadd.f32 %v1154, %v1155
          %v1159 = vrot.slane %v1156, 7
          %vm1160 = vcmask 1040384
          %v1161 = vsel %vm1160, %v1135, %v1159
          %v1163 = vadd.f32 %v1114, %v1161
          %v1164 = vlaneseq
          %vm1165 = vcmp.ge.s32.totalorder %v1164, 0
          %vm1166 = vcmp.lt.s32.totalorder %v1164, 256
          %vm1167 = vmand %vm1165, %vm1166
          %1168 = vst.msk [vmem:[#allocation2] sm:$0x3] %vm1167, %v1163
          %v1169 = vld [vmem:[#allocation3] sm:$0x3]
          %v1170 = vmul.f32 %v857, %v857
          %v1171 = vmul.f32 %v1035, %v1035
          %v1172 = vmul.f32 %v859, %v859
          %v1173 = vmul.f32 %v1037, %v1037
          %v1174 = vmul.f32 %v862, %v862
          %v1175 = vmul.f32 %v1040, %v1040
          %v1176 = vmul.f32 %v864, %v864
          %v1177 = vmul.f32 %v1042, %v1042
          %v1178 = vmul.f32 %v867, %v867
          %v1179 = vmul.f32 %v1045, %v1045
          %v1180 = vmul.f32 %v869, %v869
          %v1181 = vmul.f32 %v1047, %v1047
          %v1182 = vmul.f32 %v872, %v872
          %v1183 = vmul.f32 %v1050, %v1050
          %v1184 = vmul.f32 %v874, %v874
          %v1185 = vmul.f32 %v1052, %v1052
          %v1186 = vmul.f32 %v877, %v877
          %v1187 = vmul.f32 %v1055, %v1055
          %v1188 = vmul.f32 %v879, %v879
          %v1189 = vmul.f32 %v1057, %v1057
          %v1190 = vmul.f32 %v882, %v882
          %v1191 = vmul.f32 %v1060, %v1060
          %v1192 = vmul.f32 %v884, %v884
          %v1193 = vmul.f32 %v1062, %v1062
          %v1194 = vmul.f32 %v887, %v887
          %v1195 = vmul.f32 %v1065, %v1065
          %v1196 = vmul.f32 %v889, %v889
          %v1197 = vmul.f32 %v1067, %v1067
          %v1198 = vmul.f32 %v892, %v892
          %v1199 = vmul.f32 %v1070, %v1070
          %v1200 = vmul.f32 %v894, %v894
          %v1201 = vmul.f32 %v1072, %v1072
          %v1202 = vadd.f32 %v1170, %v1172
          %v1203 = vadd.f32 %v1202, %v1174
          %v1204 = vadd.f32 %v1203, %v1176
          %v1205 = vadd.f32 %v1204, %v1178
          %v1206 = vadd.f32 %v1205, %v1180
          %v1207 = vadd.f32 %v1206, %v1182
          %v1208 = vadd.f32 %v1207, %v1184
          %v1209 = vadd.f32 %v1208, %v1186
          %v1210 = vadd.f32 %v1209, %v1188
          %v1211 = vadd.f32 %v1210, %v1190
          %v1212 = vadd.f32 %v1211, %v1192
          %v1213 = vadd.f32 %v1212, %v1194
          %v1214 = vadd.f32 %v1213, %v1196
          %v1215 = vadd.f32 %v1214, %v1198
          %v1216 = vadd.f32 %v1215, %v1200
          %v1217 = vrot.slane %v1216, 4
          %v1218 = vadd.f32 %v1216, %v1217
          %v1219 = vrot.slane %v1218, 2
          %v1220 = vadd.f32 %v1218, %v1219
          %v1221 = vrot.slane %v1220, 1
          %v1222 = vadd.f32 %v1220, %v1221
          %v1223 = vadd.f32 %v1171, %v1173
          %v1224 = vadd.f32 %v1223, %v1175
          %v1225 = vadd.f32 %v1224, %v1177
          %v1226 = vadd.f32 %v1225, %v1179
          %v1227 = vadd.f32 %v1226, %v1181
          %v1228 = vadd.f32 %v1227, %v1183
          %v1229 = vadd.f32 %v1228, %v1185
          %v1230 = vadd.f32 %v1229, %v1187
          %v1231 = vadd.f32 %v1230, %v1189
          %v1232 = vadd.f32 %v1231, %v1191
          %v1233 = vadd.f32 %v1232, %v1193
          %v1234 = vadd.f32 %v1233, %v1195
          %v1235 = vadd.f32 %v1234, %v1197
          %v1236 = vadd.f32 %v1235, %v1199
          %v1237 = vadd.f32 %v1236, %v1201
          %v1238 = vrot.slane %v1237, 4
          %v1239 = vadd.f32 %v1237, %v1238
          %v1240 = vrot.slane %v1239, 2
          %v1241 = vadd.f32 %v1239, %v1240
          %v1242 = vrot.slane %v1241, 1
          %v1243 = vadd.f32 %v1241, %v1242
          %v1246 = vrot.slane %v1243, 7
          %v1247 = vsel %vm1160, %v1222, %v1246
          %v1249 = vadd.f32 %v1169, %v1247
          %1250 = vst.msk [vmem:[#allocation3] sm:$0x3] %vm1167, %v1249
          %v1251 = vld [vmem:[#allocation4] sm:$0x3]
          %v1252 = vadd.f32 %v897, %v899
          %v1253 = vadd.f32 %v1252, %v902
          %v1254 = vadd.f32 %v1253, %v904
          %v1255 = vadd.f32 %v1254, %v907
          %v1256 = vadd.f32 %v1255, %v909
          %v1257 = vadd.f32 %v1256, %v912
          %v1258 = vadd.f32 %v1257, %v914
          %v1259 = vadd.f32 %v1258, %v917
          %v1260 = vadd.f32 %v1259, %v919
          %v1261 = vadd.f32 %v1260, %v922
          %v1262 = vadd.f32 %v1261, %v924
          %v1263 = vadd.f32 %v1262, %v927
          %v1264 = vadd.f32 %v1263, %v929
          %v1265 = vadd.f32 %v1264, %v932
          %v1266 = vadd.f32 %v1265, %v934
          %v1267 = vrot.slane %v1266, 4
          %v1268 = vadd.f32 %v1266, %v1267
          %v1269 = vrot.slane %v1268, 2
          %v1270 = vadd.f32 %v1268, %v1269
          %v1271 = vrot.slane %v1270, 1
          %v1272 = vadd.f32 %v1270, %v1271
          %v1273 = vadd.f32 %v1075, %v1077
          %v1274 = vadd.f32 %v1273, %v1080
          %v1275 = vadd.f32 %v1274, %v1082
          %v1276 = vadd.f32 %v1275, %v1085
          %v1277 = vadd.f32 %v1276, %v1087
          %v1278 = vadd.f32 %v1277, %v1090
          %v1279 = vadd.f32 %v1278, %v1092
          %v1280 = vadd.f32 %v1279, %v1095
          %v1281 = vadd.f32 %v1280, %v1097
          %v1282 = vadd.f32 %v1281, %v1100
          %v1283 = vadd.f32 %v1282, %v1102
          %v1284 = vadd.f32 %v1283, %v1105
          %v1285 = vadd.f32 %v1284, %v1107
          %v1286 = vadd.f32 %v1285, %v1110
          %v1287 = vadd.f32 %v1286, %v1112
          %v1288 = vrot.slane %v1287, 4
          %v1289 = vadd.f32 %v1287, %v1288
          %v1290 = vrot.slane %v1289, 2
          %v1291 = vadd.f32 %v1289, %v1290
          %v1292 = vrot.slane %v1291, 1
          %v1293 = vadd.f32 %v1291, %v1292
          %v1296 = vrot.slane %v1293, 7
          %v1297 = vsel %vm1160, %v1272, %v1296
          %v1299 = vadd.f32 %v1251, %v1297
          %1300 = vst.msk [vmem:[#allocation4] sm:$0x3] %vm1167, %v1299
          %v1301 = vld [vmem:[#allocation5] sm:$0x3]
          %v1302 = vmul.f32 %v897, %v897
          %v1303 = vmul.f32 %v1075, %v1075
          %v1304 = vmul.f32 %v899, %v899
          %v1305 = vmul.f32 %v1077, %v1077
          %v1306 = vmul.f32 %v902, %v902
          %v1307 = vmul.f32 %v1080, %v1080
          %v1308 = vmul.f32 %v904, %v904
          %v1309 = vmul.f32 %v1082, %v1082
          %v1310 = vmul.f32 %v907, %v907
          %v1311 = vmul.f32 %v1085, %v1085
          %v1312 = vmul.f32 %v909, %v909
          %v1313 = vmul.f32 %v1087, %v1087
          %v1314 = vmul.f32 %v912, %v912
          %v1315 = vmul.f32 %v1090, %v1090
          %v1316 = vmul.f32 %v914, %v914
          %v1317 = vmul.f32 %v1092, %v1092
          %v1318 = vmul.f32 %v917, %v917
          %v1319 = vmul.f32 %v1095, %v1095
          %v1320 = vmul.f32 %v919, %v919
          %v1321 = vmul.f32 %v1097, %v1097
          %v1322 = vmul.f32 %v922, %v922
          %v1323 = vmul.f32 %v1100, %v1100
          %v1324 = vmul.f32 %v924, %v924
          %v1325 = vmul.f32 %v1102, %v1102
          %v1326 = vmul.f32 %v927, %v927
          %v1327 = vmul.f32 %v1105, %v1105
          %v1328 = vmul.f32 %v929, %v929
          %v1329 = vmul.f32 %v1107, %v1107
          %v1330 = vmul.f32 %v932, %v932
          %v1331 = vmul.f32 %v1110, %v1110
          %v1332 = vmul.f32 %v934, %v934
          %v1333 = vmul.f32 %v1112, %v1112
          %v1334 = vadd.f32 %v1302, %v1304
          %v1335 = vadd.f32 %v1334, %v1306
          %v1336 = vadd.f32 %v1335, %v1308
          %v1337 = vadd.f32 %v1336, %v1310
          %v1338 = vadd.f32 %v1337, %v1312
          %v1339 = vadd.f32 %v1338, %v1314
          %v1340 = vadd.f32 %v1339, %v1316
          %v1341 = vadd.f32 %v1340, %v1318
          %v1342 = vadd.f32 %v1341, %v1320
          %v1343 = vadd.f32 %v1342, %v1322
          %v1344 = vadd.f32 %v1343, %v1324
          %v1345 = vadd.f32 %v1344, %v1326
          %v1346 = vadd.f32 %v1345, %v1328
          %v1347 = vadd.f32 %v1346, %v1330
          %v1348 = vadd.f32 %v1347, %v1332
          %v1349 = vrot.slane %v1348, 4
          %v1350 = vadd.f32 %v1348, %v1349
          %v1351 = vrot.slane %v1350, 2
          %v1352 = vadd.f32 %v1350, %v1351
          %v1353 = vrot.slane %v1352, 1
          %v1354 = vadd.f32 %v1352, %v1353
          %v1355 = vadd.f32 %v1303, %v1305
          %v1356 = vadd.f32 %v1355, %v1307
          %v1357 = vadd.f32 %v1356, %v1309
          %v1358 = vadd.f32 %v1357, %v1311
          %v1359 = vadd.f32 %v1358, %v1313
          %v1360 = vadd.f32 %v1359, %v1315
          %v1361 = vadd.f32 %v1360, %v1317
          %v1362 = vadd.f32 %v1361, %v1319
          %v1363 = vadd.f32 %v1362, %v1321
          %v1364 = vadd.f32 %v1363, %v1323
          %v1365 = vadd.f32 %v1364, %v1325
          %v1366 = vadd.f32 %v1365, %v1327
          %v1367 = vadd.f32 %v1366, %v1329
          %v1368 = vadd.f32 %v1367, %v1331
          %v1369 = vadd.f32 %v1368, %v1333
          %v1370 = vrot.slane %v1369, 4
          %v1371 = vadd.f32 %v1369, %v1370
          %v1372 = vrot.slane %v1371, 2
          %v1373 = vadd.f32 %v1371, %v1372
          %v1374 = vrot.slane %v1373, 1
          %v1375 = vadd.f32 %v1373, %v1374
          %v1378 = vrot.slane %v1375, 7
          %v1379 = vsel %vm1160, %v1354, %v1378
          %v1381 = vadd.f32 %v1301, %v1379
          %1382 = vst.msk [vmem:[#allocation5] sm:$0x3] %vm1167, %v1381
          %v1383 = vpack.c.bf16 %v1035, %v857
          %v1384 = vpack.c.bf16 %v1037, %v859
          %v1385 = vpack.c.bf16 %v1040, %v862
          %v1386 = vpack.c.bf16 %v1042, %v864
          %v1387 = vpack.c.bf16 %v1045, %v867
          %v1388 = vpack.c.bf16 %v1047, %v869
          %v1389 = vpack.c.bf16 %v1050, %v872
          %v1390 = vpack.c.bf16 %v1052, %v874
          %v1391 = vpack.c.bf16 %v1055, %v877
          %v1392 = vpack.c.bf16 %v1057, %v879
          %v1393 = vpack.c.bf16 %v1060, %v882
          %v1394 = vpack.c.bf16 %v1062, %v884
          %v1395 = vpack.c.bf16 %v1065, %v887
          %v1396 = vpack.c.bf16 %v1067, %v889
          %v1397 = vpack.c.bf16 %v1070, %v892
          %v1398 = vpack.c.bf16 %v1072, %v894
          %s1399 = sshra.s32 %s354, 3
          %s1400 = sand.u32 %s354, 7
          %s1401 = smul.u32 %s1399, 2
          %s1402 = smul.addr %s1401, 4
          %s1403 = scalar_lea.vmem [#allocation7], %s1402
          %1404 = vst [vmem:[%s1403] sm:$0xff] %v1383
          %1405 = vst [vmem:[%s1403 + $0x8] sm:$0xff] %v1384
          %1406 = vst [vmem:[%s1403 + $0x10] sm:$0xff] %v1385
          %1407 = vst [vmem:[%s1403 + $0x18] sm:$0xff] %v1386
          %1408 = vst [vmem:[%s1403 + $0x20] sm:$0xff] %v1387
          %1409 = vst [vmem:[%s1403 + $0x28] sm:$0xff] %v1388
          %1410 = vst [vmem:[%s1403 + $0x30] sm:$0xff] %v1389
          %1411 = vst [vmem:[%s1403 + $0x38] sm:$0xff] %v1390
          %1412 = vst [vmem:[%s1403 + $0x40] sm:$0xff] %v1391
          %1413 = vst [vmem:[%s1403 + $0x48] sm:$0xff] %v1392
          %1414 = vst [vmem:[%s1403 + $0x50] sm:$0xff] %v1393
          %1415 = vst [vmem:[%s1403 + $0x58] sm:$0xff] %v1394
          %1416 = vst [vmem:[%s1403 + $0x60] sm:$0xff] %v1395
          %1417 = vst [vmem:[%s1403 + $0x68] sm:$0xff] %v1396
          %1418 = vst [vmem:[%s1403 + $0x70] sm:$0xff] %v1397
          %1419 = vst [vmem:[%s1403 + $0x78] sm:$0xff] %v1398
          %v1420 = vpack.c.bf16 %v1075, %v897
          %v1421 = vpack.c.bf16 %v1077, %v899
          %v1422 = vpack.c.bf16 %v1080, %v902
          %v1423 = vpack.c.bf16 %v1082, %v904
          %v1424 = vpack.c.bf16 %v1085, %v907
          %v1425 = vpack.c.bf16 %v1087, %v909
          %v1426 = vpack.c.bf16 %v1090, %v912
          %v1427 = vpack.c.bf16 %v1092, %v914
          %v1428 = vpack.c.bf16 %v1095, %v917
          %v1429 = vpack.c.bf16 %v1097, %v919
          %v1430 = vpack.c.bf16 %v1100, %v922
          %v1431 = vpack.c.bf16 %v1102, %v924
          %v1432 = vpack.c.bf16 %v1105, %v927
          %v1433 = vpack.c.bf16 %v1107, %v929
          %v1434 = vpack.c.bf16 %v1110, %v932
          %v1435 = vpack.c.bf16 %v1112, %v934
          %s1436 = sadd.s32 %s1401, 32
          %s1437 = smul.addr %s1436, 4
          %s1438 = scalar_lea.vmem [#allocation7], %s1437
          %1439 = vst [vmem:[%s1438] sm:$0xff] %v1420
          %1440 = vst [vmem:[%s1438 + $0x8] sm:$0xff] %v1421
          %1441 = vst [vmem:[%s1438 + $0x10] sm:$0xff] %v1422
          %1442 = vst [vmem:[%s1438 + $0x18] sm:$0xff] %v1423
          %1443 = vst [vmem:[%s1438 + $0x20] sm:$0xff] %v1424
          %1444 = vst [vmem:[%s1438 + $0x28] sm:$0xff] %v1425
          %1445 = vst [vmem:[%s1438 + $0x30] sm:$0xff] %v1426
          %1446 = vst [vmem:[%s1438 + $0x38] sm:$0xff] %v1427
          %1447 = vst [vmem:[%s1438 + $0x40] sm:$0xff] %v1428
          %1448 = vst [vmem:[%s1438 + $0x48] sm:$0xff] %v1429
          %1449 = vst [vmem:[%s1438 + $0x50] sm:$0xff] %v1430
          %1450 = vst [vmem:[%s1438 + $0x58] sm:$0xff] %v1431
          %1451 = vst [vmem:[%s1438 + $0x60] sm:$0xff] %v1432
          %1452 = vst [vmem:[%s1438 + $0x68] sm:$0xff] %v1433
          %1453 = vst [vmem:[%s1438 + $0x70] sm:$0xff] %v1434
          %1454 = vst [vmem:[%s1438 + $0x78] sm:$0xff] %v1435
        $region68: #{tpu_custom_call.1} parent=39 // pred_fallthru
          _
        %p1455 = scmp.eq.s32.totalorder %s28, 1
        // Predicated region
        $region69: #{tpu_custom_call.1} parent=39 // pred_check
          %p1456 = pneg %p1455
        $region70: #{tpu_custom_call.1} parent=39 // pred_check_branch
          %1458 = sbr.rel (%p1456) target = $region72
        $region71: #{tpu_custom_call.1} parent=39 // pred_region
          %s1459 = sshra.s32 %s354, 3
          %s1460 = sand.u32 %s354, 7
          %s1461 = smul.u32 %s1459, 2
          %s1462 = smul.addr %s1461, 4
          %s1463 = scalar_lea.vmem [#allocation7], %s1462
          %v1464 = vld [vmem:[%s1463] sm:$0xff]
          %v1465 = vld [vmem:[%s1463 + $0x8] sm:$0xff]
          %v1466 = vld [vmem:[%s1463 + $0x10] sm:$0xff]
          %v1467 = vld [vmem:[%s1463 + $0x18] sm:$0xff]
          %v1468 = vld [vmem:[%s1463 + $0x20] sm:$0xff]
          %v1469 = vld [vmem:[%s1463 + $0x28] sm:$0xff]
          %v1470 = vld [vmem:[%s1463 + $0x30] sm:$0xff]
          %v1471 = vld [vmem:[%s1463 + $0x38] sm:$0xff]
          %v1472 = vld [vmem:[%s1463 + $0x40] sm:$0xff]
          %v1473 = vld [vmem:[%s1463 + $0x48] sm:$0xff]
          %v1474 = vld [vmem:[%s1463 + $0x50] sm:$0xff]
          %v1475 = vld [vmem:[%s1463 + $0x58] sm:$0xff]
          %v1476 = vld [vmem:[%s1463 + $0x60] sm:$0xff]
          %v1477 = vld [vmem:[%s1463 + $0x68] sm:$0xff]
          %v1478 = vld [vmem:[%s1463 + $0x70] sm:$0xff]
          %v1479 = vld [vmem:[%s1463 + $0x78] sm:$0xff]
          %v1480 = vunpack.c.l.bf16 %v1464
          %v1481 = vunpack.c.h.bf16 %v1464
          %v1482 = vunpack.c.l.bf16 %v1465
          %v1483 = vunpack.c.h.bf16 %v1465
          %v1484 = vunpack.c.l.bf16 %v1466
          %v1485 = vunpack.c.h.bf16 %v1466
          %v1486 = vunpack.c.l.bf16 %v1467
          %v1487 = vunpack.c.h.bf16 %v1467
          %v1488 = vunpack.c.l.bf16 %v1468
          %v1489 = vunpack.c.h.bf16 %v1468
          %v1490 = vunpack.c.l.bf16 %v1469
          %v1491 = vunpack.c.h.bf16 %v1469
          %v1492 = vunpack.c.l.bf16 %v1470
          %v1493 = vunpack.c.h.bf16 %v1470
          %v1494 = vunpack.c.l.bf16 %v1471
          %v1495 = vunpack.c.h.bf16 %v1471
          %v1496 = vunpack.c.l.bf16 %v1472
          %v1497 = vunpack.c.h.bf16 %v1472
          %v1498 = vunpack.c.l.bf16 %v1473
          %v1499 = vunpack.c.h.bf16 %v1473
          %v1500 = vunpack.c.l.bf16 %v1474
          %v1501 = vunpack.c.h.bf16 %v1474
          %v1502 = vunpack.c.l.bf16 %v1475
          %v1503 = vunpack.c.h.bf16 %v1475
          %v1504 = vunpack.c.l.bf16 %v1476
          %v1505 = vunpack.c.h.bf16 %v1476
          %v1506 = vunpack.c.l.bf16 %v1477
          %v1507 = vunpack.c.h.bf16 %v1477
          %v1508 = vunpack.c.l.bf16 %v1478
          %v1509 = vunpack.c.h.bf16 %v1478
          %v1510 = vunpack.c.l.bf16 %v1479
          %v1511 = vunpack.c.h.bf16 %v1479
          %s1512 = sadd.s32 %s1461, 32
          %s1513 = smul.addr %s1512, 4
          %s1514 = scalar_lea.vmem [#allocation7], %s1513
          %v1515 = vld [vmem:[%s1514] sm:$0xff]
          %v1516 = vld [vmem:[%s1514 + $0x8] sm:$0xff]
          %v1517 = vld [vmem:[%s1514 + $0x10] sm:$0xff]
          %v1518 = vld [vmem:[%s1514 + $0x18] sm:$0xff]
          %v1519 = vld [vmem:[%s1514 + $0x20] sm:$0xff]
          %v1520 = vld [vmem:[%s1514 + $0x28] sm:$0xff]
          %v1521 = vld [vmem:[%s1514 + $0x30] sm:$0xff]
          %v1522 = vld [vmem:[%s1514 + $0x38] sm:$0xff]
          %v1523 = vld [vmem:[%s1514 + $0x40] sm:$0xff]
          %v1524 = vld [vmem:[%s1514 + $0x48] sm:$0xff]
          %v1525 = vld [vmem:[%s1514 + $0x50] sm:$0xff]
          %v1526 = vld [vmem:[%s1514 + $0x58] sm:$0xff]
          %v1527 = vld [vmem:[%s1514 + $0x60] sm:$0xff]
          %v1528 = vld [vmem:[%s1514 + $0x68] sm:$0xff]
          %v1529 = vld [vmem:[%s1514 + $0x70] sm:$0xff]
          %v1530 = vld [vmem:[%s1514 + $0x78] sm:$0xff]
          %v1531 = vunpack.c.l.bf16 %v1515
          %v1532 = vunpack.c.h.bf16 %v1515
          %v1533 = vunpack.c.l.bf16 %v1516
          %v1534 = vunpack.c.h.bf16 %v1516
          %v1535 = vunpack.c.l.bf16 %v1517
          %v1536 = vunpack.c.h.bf16 %v1517
          %v1537 = vunpack.c.l.bf16 %v1518
          %v1538 = vunpack.c.h.bf16 %v1518
          %v1539 = vunpack.c.l.bf16 %v1519
          %v1540 = vunpack.c.h.bf16 %v1519
          %v1541 = vunpack.c.l.bf16 %v1520
          %v1542 = vunpack.c.h.bf16 %v1520
          %v1543 = vunpack.c.l.bf16 %v1521
          %v1544 = vunpack.c.h.bf16 %v1521
          %v1545 = vunpack.c.l.bf16 %v1522
          %v1546 = vunpack.c.h.bf16 %v1522
          %v1547 = vunpack.c.l.bf16 %v1523
          %v1548 = vunpack.c.h.bf16 %v1523
          %v1549 = vunpack.c.l.bf16 %v1524
          %v1550 = vunpack.c.h.bf16 %v1524
          %v1551 = vunpack.c.l.bf16 %v1525
          %v1552 = vunpack.c.h.bf16 %v1525
          %v1553 = vunpack.c.l.bf16 %v1526
          %v1554 = vunpack.c.h.bf16 %v1526
          %v1555 = vunpack.c.l.bf16 %v1527
          %v1556 = vunpack.c.h.bf16 %v1527
          %v1557 = vunpack.c.l.bf16 %v1528
          %v1558 = vunpack.c.h.bf16 %v1528
          %v1559 = vunpack.c.l.bf16 %v1529
          %v1560 = vunpack.c.h.bf16 %v1529
          %v1561 = vunpack.c.l.bf16 %v1530
          %v1562 = vunpack.c.h.bf16 %v1530
          %v1563 = vld [vmem:[#allocation16] sm:$0xff]
          %v1564 = vld [vmem:[#allocation16 + $0x8] sm:$0xff]
          %v1565 = vld [vmem:[#allocation2] sm:$0x3]
          %v1566 = vmul.f32 %v1565, 0.0078125
          %v1567 = vld [vmem:[#allocation4] sm:$0x3]
          %v1568 = vmul.f32 %v1567, 0.0078125
          %v1569 = vld [vmem:[#allocation3] sm:$0x3]
          %v1570 = vmul.f32 %v1569, 0.0078125
          %v1571 = vmul.f32 %v1566, %v1566
          %v1572 = vsub.f32 %v1570, %v1571
          %v1573 = vld [vmem:[#allocation5] sm:$0x3]
          %v1574 = vmul.f32 %v1573, 0.0078125
          %v1575 = vmul.f32 %v1568, %v1568
          %v1576 = vsub.f32 %v1574, %v1575
          %v1577 = vadd.f32 %v1572, 1e-05
          %v1578 = vrsqrt.pop %v1577
          %v1579 = vmul.f32 %v1578, %v1577
          %v1580 = vmul.f32 %v1579, %v1578
          %v1581 = vmul.f32 0.5, %v1580
          %v1582 = vsub.f32 1.5, %v1581
          %v1583 = vmul.f32 %v1578, %v1582
          %vm1584 = vweird.f32 %v1577
          %vm1585 = vweird.f32 %v1578
          %vm1586 = vmor %vm1584, %vm1585
          %v1587 = vsel %vm1586, %v1578, %v1583
          %v1588 = vadd.f32 %v1576, 1e-05
          %v1589 = vrsqrt.pop %v1588
          %v1590 = vmul.f32 %v1589, %v1588
          %v1591 = vmul.f32 %v1590, %v1589
          %v1592 = vmul.f32 0.5, %v1591
          %v1593 = vsub.f32 1.5, %v1592
          %v1594 = vmul.f32 %v1589, %v1593
          %vm1595 = vweird.f32 %v1588
          %vm1596 = vweird.f32 %v1589
          %vm1597 = vmor %vm1595, %vm1596
          %v1598 = vsel %vm1597, %v1589, %v1594
          %v1600 = vperm.slane %v1566, 0
          %v1601 = vperm.slane %v1566, 1
          %v1604 = vsub.f32 %v1480, %v1600
          %v1605 = vsub.f32 %v1481, %v1601
          %v1606 = vsub.f32 %v1482, %v1600
          %v1607 = vsub.f32 %v1483, %v1601
          %v1608 = vsub.f32 %v1484, %v1600
          %v1609 = vsub.f32 %v1485, %v1601
          %v1610 = vsub.f32 %v1486, %v1600
          %v1611 = vsub.f32 %v1487, %v1601
          %v1612 = vsub.f32 %v1488, %v1600
          %v1613 = vsub.f32 %v1489, %v1601
          %v1614 = vsub.f32 %v1490, %v1600
          %v1615 = vsub.f32 %v1491, %v1601
          %v1616 = vsub.f32 %v1492, %v1600
          %v1617 = vsub.f32 %v1493, %v1601
          %v1618 = vsub.f32 %v1494, %v1600
          %v1619 = vsub.f32 %v1495, %v1601
          %v1620 = vsub.f32 %v1496, %v1600
          %v1621 = vsub.f32 %v1497, %v1601
          %v1622 = vsub.f32 %v1498, %v1600
          %v1623 = vsub.f32 %v1499, %v1601
          %v1624 = vsub.f32 %v1500, %v1600
          %v1625 = vsub.f32 %v1501, %v1601
          %v1626 = vsub.f32 %v1502, %v1600
          %v1627 = vsub.f32 %v1503, %v1601
          %v1628 = vsub.f32 %v1504, %v1600
          %v1629 = vsub.f32 %v1505, %v1601
          %v1630 = vsub.f32 %v1506, %v1600
          %v1631 = vsub.f32 %v1507, %v1601
          %v1632 = vsub.f32 %v1508, %v1600
          %v1633 = vsub.f32 %v1509, %v1601
          %v1634 = vsub.f32 %v1510, %v1600
          %v1635 = vsub.f32 %v1511, %v1601
          %v1637 = vperm.slane %v1587, 0
          %v1638 = vperm.slane %v1587, 1
          %v1641 = vmul.f32 %v1604, %v1637
          %v1642 = vmul.f32 %v1605, %v1638
          %v1643 = vmul.f32 %v1606, %v1637
          %v1644 = vmul.f32 %v1607, %v1638
          %v1645 = vmul.f32 %v1608, %v1637
          %v1646 = vmul.f32 %v1609, %v1638
          %v1647 = vmul.f32 %v1610, %v1637
          %v1648 = vmul.f32 %v1611, %v1638
          %v1649 = vmul.f32 %v1612, %v1637
          %v1650 = vmul.f32 %v1613, %v1638
          %v1651 = vmul.f32 %v1614, %v1637
          %v1652 = vmul.f32 %v1615, %v1638
          %v1653 = vmul.f32 %v1616, %v1637
          %v1654 = vmul.f32 %v1617, %v1638
          %v1655 = vmul.f32 %v1618, %v1637
          %v1656 = vmul.f32 %v1619, %v1638
          %v1657 = vmul.f32 %v1620, %v1637
          %v1658 = vmul.f32 %v1621, %v1638
          %v1659 = vmul.f32 %v1622, %v1637
          %v1660 = vmul.f32 %v1623, %v1638
          %v1661 = vmul.f32 %v1624, %v1637
          %v1662 = vmul.f32 %v1625, %v1638
          %v1663 = vmul.f32 %v1626, %v1637
          %v1664 = vmul.f32 %v1627, %v1638
          %v1665 = vmul.f32 %v1628, %v1637
          %v1666 = vmul.f32 %v1629, %v1638
          %v1667 = vmul.f32 %v1630, %v1637
          %v1668 = vmul.f32 %v1631, %v1638
          %v1669 = vmul.f32 %v1632, %v1637
          %v1670 = vmul.f32 %v1633, %v1638
          %v1671 = vmul.f32 %v1634, %v1637
          %v1672 = vmul.f32 %v1635, %v1638
          %v1673 = vperm.slane %v1563, 2
          %v1674 = vperm.slane %v1564, 2
          %v1675 = vmul.f32 %v1641, %v1673
          %v1676 = vmul.f32 %v1642, %v1674
          %v1677 = vmul.f32 %v1643, %v1673
          %v1678 = vmul.f32 %v1644, %v1674
          %v1679 = vmul.f32 %v1645, %v1673
          %v1680 = vmul.f32 %v1646, %v1674
          %v1681 = vmul.f32 %v1647, %v1673
          %v1682 = vmul.f32 %v1648, %v1674
          %v1683 = vmul.f32 %v1649, %v1673
          %v1684 = vmul.f32 %v1650, %v1674
          %v1685 = vmul.f32 %v1651, %v1673
          %v1686 = vmul.f32 %v1652, %v1674
          %v1687 = vmul.f32 %v1653, %v1673
          %v1688 = vmul.f32 %v1654, %v1674
          %v1689 = vmul.f32 %v1655, %v1673
          %v1690 = vmul.f32 %v1656, %v1674
          %v1691 = vmul.f32 %v1657, %v1673
          %v1692 = vmul.f32 %v1658, %v1674
          %v1693 = vmul.f32 %v1659, %v1673
          %v1694 = vmul.f32 %v1660, %v1674
          %v1695 = vmul.f32 %v1661, %v1673
          %v1696 = vmul.f32 %v1662, %v1674
          %v1697 = vmul.f32 %v1663, %v1673
          %v1698 = vmul.f32 %v1664, %v1674
          %v1699 = vmul.f32 %v1665, %v1673
          %v1700 = vmul.f32 %v1666, %v1674
          %v1701 = vmul.f32 %v1667, %v1673
          %v1702 = vmul.f32 %v1668, %v1674
          %v1703 = vmul.f32 %v1669, %v1673
          %v1704 = vmul.f32 %v1670, %v1674
          %v1705 = vmul.f32 %v1671, %v1673
          %v1706 = vmul.f32 %v1672, %v1674
          %v1707 = vperm.slane %v1563, 3
          %v1708 = vperm.slane %v1564, 3
          %v1709 = vadd.f32 %v1675, %v1707
          %v1710 = vadd.f32 %v1676, %v1708
          %v1711 = vadd.f32 %v1677, %v1707
          %v1712 = vadd.f32 %v1678, %v1708
          %v1713 = vadd.f32 %v1679, %v1707
          %v1714 = vadd.f32 %v1680, %v1708
          %v1715 = vadd.f32 %v1681, %v1707
          %v1716 = vadd.f32 %v1682, %v1708
          %v1717 = vadd.f32 %v1683, %v1707
          %v1718 = vadd.f32 %v1684, %v1708
          %v1719 = vadd.f32 %v1685, %v1707
          %v1720 = vadd.f32 %v1686, %v1708
          %v1721 = vadd.f32 %v1687, %v1707
          %v1722 = vadd.f32 %v1688, %v1708
          %v1723 = vadd.f32 %v1689, %v1707
          %v1724 = vadd.f32 %v1690, %v1708
          %v1725 = vadd.f32 %v1691, %v1707
          %v1726 = vadd.f32 %v1692, %v1708
          %v1727 = vadd.f32 %v1693, %v1707
          %v1728 = vadd.f32 %v1694, %v1708
          %v1729 = vadd.f32 %v1695, %v1707
          %v1730 = vadd.f32 %v1696, %v1708
          %v1731 = vadd.f32 %v1697, %v1707
          %v1732 = vadd.f32 %v1698, %v1708
          %v1733 = vadd.f32 %v1699, %v1707
          %v1734 = vadd.f32 %v1700, %v1708
          %v1735 = vadd.f32 %v1701, %v1707
          %v1736 = vadd.f32 %v1702, %v1708
          %v1737 = vadd.f32 %v1703, %v1707
          %v1738 = vadd.f32 %v1704, %v1708
          %v1739 = vadd.f32 %v1705, %v1707
          %v1740 = vadd.f32 %v1706, %v1708
          %v1741 = vperm.slane %v1563, 0
          %v1742 = vperm.slane %v1564, 0
          %v1743 = vsub.f32 %v1709, %v1741
          %v1744 = vsub.f32 %v1710, %v1742
          %v1745 = vsub.f32 %v1711, %v1741
          %v1746 = vsub.f32 %v1712, %v1742
          %v1747 = vsub.f32 %v1713, %v1741
          %v1748 = vsub.f32 %v1714, %v1742
          %v1749 = vsub.f32 %v1715, %v1741
          %v1750 = vsub.f32 %v1716, %v1742
          %v1751 = vsub.f32 %v1717, %v1741
          %v1752 = vsub.f32 %v1718, %v1742
          %v1753 = vsub.f32 %v1719, %v1741
          %v1754 = vsub.f32 %v1720, %v1742
          %v1755 = vsub.f32 %v1721, %v1741
          %v1756 = vsub.f32 %v1722, %v1742
          %v1757 = vsub.f32 %v1723, %v1741
          %v1758 = vsub.f32 %v1724, %v1742
          %v1759 = vsub.f32 %v1725, %v1741
          %v1760 = vsub.f32 %v1726, %v1742
          %v1761 = vsub.f32 %v1727, %v1741
          %v1762 = vsub.f32 %v1728, %v1742
          %v1763 = vsub.f32 %v1729, %v1741
          %v1764 = vsub.f32 %v1730, %v1742
          %v1765 = vsub.f32 %v1731, %v1741
          %v1766 = vsub.f32 %v1732, %v1742
          %v1767 = vsub.f32 %v1733, %v1741
          %v1768 = vsub.f32 %v1734, %v1742
          %v1769 = vsub.f32 %v1735, %v1741
          %v1770 = vsub.f32 %v1736, %v1742
          %v1771 = vsub.f32 %v1737, %v1741
          %v1772 = vsub.f32 %v1738, %v1742
          %v1773 = vsub.f32 %v1739, %v1741
          %v1774 = vsub.f32 %v1740, %v1742
          %v1775 = vmax.f32 %v1743, 0.0
          %v1776 = vmax.f32 %v1744, 0.0
          %v1777 = vmax.f32 %v1745, 0.0
          %v1778 = vmax.f32 %v1746, 0.0
          %v1779 = vmax.f32 %v1747, 0.0
          %v1780 = vmax.f32 %v1748, 0.0
          %v1781 = vmax.f32 %v1749, 0.0
          %v1782 = vmax.f32 %v1750, 0.0
          %v1783 = vmax.f32 %v1751, 0.0
          %v1784 = vmax.f32 %v1752, 0.0
          %v1785 = vmax.f32 %v1753, 0.0
          %v1786 = vmax.f32 %v1754, 0.0
          %v1787 = vmax.f32 %v1755, 0.0
          %v1788 = vmax.f32 %v1756, 0.0
          %v1789 = vmax.f32 %v1757, 0.0
          %v1790 = vmax.f32 %v1758, 0.0
          %v1791 = vmax.f32 %v1759, 0.0
          %v1792 = vmax.f32 %v1760, 0.0
          %v1793 = vmax.f32 %v1761, 0.0
          %v1794 = vmax.f32 %v1762, 0.0
          %v1795 = vmax.f32 %v1763, 0.0
          %v1796 = vmax.f32 %v1764, 0.0
          %v1797 = vmax.f32 %v1765, 0.0
          %v1798 = vmax.f32 %v1766, 0.0
          %v1799 = vmax.f32 %v1767, 0.0
          %v1800 = vmax.f32 %v1768, 0.0
          %v1801 = vmax.f32 %v1769, 0.0
          %v1802 = vmax.f32 %v1770, 0.0
          %v1803 = vmax.f32 %v1771, 0.0
          %v1804 = vmax.f32 %v1772, 0.0
          %v1805 = vmax.f32 %v1773, 0.0
          %v1806 = vmax.f32 %v1774, 0.0
          %v1807 = vsub.f32 0.0, %v1709
          %v1808 = vsub.f32 0.0, %v1710
          %v1809 = vsub.f32 0.0, %v1711
          %v1810 = vsub.f32 0.0, %v1712
          %v1811 = vsub.f32 0.0, %v1713
          %v1812 = vsub.f32 0.0, %v1714
          %v1813 = vsub.f32 0.0, %v1715
          %v1814 = vsub.f32 0.0, %v1716
          %v1815 = vsub.f32 0.0, %v1717
          %v1816 = vsub.f32 0.0, %v1718
          %v1817 = vsub.f32 0.0, %v1719
          %v1818 = vsub.f32 0.0, %v1720
          %v1819 = vsub.f32 0.0, %v1721
          %v1820 = vsub.f32 0.0, %v1722
          %v1821 = vsub.f32 0.0, %v1723
          %v1822 = vsub.f32 0.0, %v1724
          %v1823 = vsub.f32 0.0, %v1725
          %v1824 = vsub.f32 0.0, %v1726
          %v1825 = vsub.f32 0.0, %v1727
          %v1826 = vsub.f32 0.0, %v1728
          %v1827 = vsub.f32 0.0, %v1729
          %v1828 = vsub.f32 0.0, %v1730
          %v1829 = vsub.f32 0.0, %v1731
          %v1830 = vsub.f32 0.0, %v1732
          %v1831 = vsub.f32 0.0, %v1733
          %v1832 = vsub.f32 0.0, %v1734
          %v1833 = vsub.f32 0.0, %v1735
          %v1834 = vsub.f32 0.0, %v1736
          %v1835 = vsub.f32 0.0, %v1737
          %v1836 = vsub.f32 0.0, %v1738
          %v1837 = vsub.f32 0.0, %v1739
          %v1838 = vsub.f32 0.0, %v1740
          %v1839 = vsub.f32 %v1807, %v1741
          %v1840 = vsub.f32 %v1808, %v1742
          %v1841 = vsub.f32 %v1809, %v1741
          %v1842 = vsub.f32 %v1810, %v1742
          %v1843 = vsub.f32 %v1811, %v1741
          %v1844 = vsub.f32 %v1812, %v1742
          %v1845 = vsub.f32 %v1813, %v1741
          %v1846 = vsub.f32 %v1814, %v1742
          %v1847 = vsub.f32 %v1815, %v1741
          %v1848 = vsub.f32 %v1816, %v1742
          %v1849 = vsub.f32 %v1817, %v1741
          %v1850 = vsub.f32 %v1818, %v1742
          %v1851 = vsub.f32 %v1819, %v1741
          %v1852 = vsub.f32 %v1820, %v1742
          %v1853 = vsub.f32 %v1821, %v1741
          %v1854 = vsub.f32 %v1822, %v1742
          %v1855 = vsub.f32 %v1823, %v1741
          %v1856 = vsub.f32 %v1824, %v1742
          %v1857 = vsub.f32 %v1825, %v1741
          %v1858 = vsub.f32 %v1826, %v1742
          %v1859 = vsub.f32 %v1827, %v1741
          %v1860 = vsub.f32 %v1828, %v1742
          %v1861 = vsub.f32 %v1829, %v1741
          %v1862 = vsub.f32 %v1830, %v1742
          %v1863 = vsub.f32 %v1831, %v1741
          %v1864 = vsub.f32 %v1832, %v1742
          %v1865 = vsub.f32 %v1833, %v1741
          %v1866 = vsub.f32 %v1834, %v1742
          %v1867 = vsub.f32 %v1835, %v1741
          %v1868 = vsub.f32 %v1836, %v1742
          %v1869 = vsub.f32 %v1837, %v1741
          %v1870 = vsub.f32 %v1838, %v1742
          %v1871 = vmax.f32 %v1839, 0.0
          %v1872 = vmax.f32 %v1840, 0.0
          %v1873 = vmax.f32 %v1841, 0.0
          %v1874 = vmax.f32 %v1842, 0.0
          %v1875 = vmax.f32 %v1843, 0.0
          %v1876 = vmax.f32 %v1844, 0.0
          %v1877 = vmax.f32 %v1845, 0.0
          %v1878 = vmax.f32 %v1846, 0.0
          %v1879 = vmax.f32 %v1847, 0.0
          %v1880 = vmax.f32 %v1848, 0.0
          %v1881 = vmax.f32 %v1849, 0.0
          %v1882 = vmax.f32 %v1850, 0.0
          %v1883 = vmax.f32 %v1851, 0.0
          %v1884 = vmax.f32 %v1852, 0.0
          %v1885 = vmax.f32 %v1853, 0.0
          %v1886 = vmax.f32 %v1854, 0.0
          %v1887 = vmax.f32 %v1855, 0.0
          %v1888 = vmax.f32 %v1856, 0.0
          %v1889 = vmax.f32 %v1857, 0.0
          %v1890 = vmax.f32 %v1858, 0.0
          %v1891 = vmax.f32 %v1859, 0.0
          %v1892 = vmax.f32 %v1860, 0.0
          %v1893 = vmax.f32 %v1861, 0.0
          %v1894 = vmax.f32 %v1862, 0.0
          %v1895 = vmax.f32 %v1863, 0.0
          %v1896 = vmax.f32 %v1864, 0.0
          %v1897 = vmax.f32 %v1865, 0.0
          %v1898 = vmax.f32 %v1866, 0.0
          %v1899 = vmax.f32 %v1867, 0.0
          %v1900 = vmax.f32 %v1868, 0.0
          %v1901 = vmax.f32 %v1869, 0.0
          %v1902 = vmax.f32 %v1870, 0.0
          %v1903 = vsub.f32 %v1775, %v1871
          %v1904 = vsub.f32 %v1776, %v1872
          %v1905 = vsub.f32 %v1777, %v1873
          %v1906 = vsub.f32 %v1778, %v1874
          %v1907 = vsub.f32 %v1779, %v1875
          %v1908 = vsub.f32 %v1780, %v1876
          %v1909 = vsub.f32 %v1781, %v1877
          %v1910 = vsub.f32 %v1782, %v1878
          %v1911 = vsub.f32 %v1783, %v1879
          %v1912 = vsub.f32 %v1784, %v1880
          %v1913 = vsub.f32 %v1785, %v1881
          %v1914 = vsub.f32 %v1786, %v1882
          %v1915 = vsub.f32 %v1787, %v1883
          %v1916 = vsub.f32 %v1788, %v1884
          %v1917 = vsub.f32 %v1789, %v1885
          %v1918 = vsub.f32 %v1790, %v1886
          %v1919 = vsub.f32 %v1791, %v1887
          %v1920 = vsub.f32 %v1792, %v1888
          %v1921 = vsub.f32 %v1793, %v1889
          %v1922 = vsub.f32 %v1794, %v1890
          %v1923 = vsub.f32 %v1795, %v1891
          %v1924 = vsub.f32 %v1796, %v1892
          %v1925 = vsub.f32 %v1797, %v1893
          %v1926 = vsub.f32 %v1798, %v1894
          %v1927 = vsub.f32 %v1799, %v1895
          %v1928 = vsub.f32 %v1800, %v1896
          %v1929 = vsub.f32 %v1801, %v1897
          %v1930 = vsub.f32 %v1802, %v1898
          %v1931 = vsub.f32 %v1803, %v1899
          %v1932 = vsub.f32 %v1804, %v1900
          %v1933 = vsub.f32 %v1805, %v1901
          %v1934 = vsub.f32 %v1806, %v1902
          %v1936 = vperm.slane %v1568, 0
          %v1937 = vperm.slane %v1568, 1
          %v1940 = vsub.f32 %v1531, %v1936
          %v1941 = vsub.f32 %v1532, %v1937
          %v1942 = vsub.f32 %v1533, %v1936
          %v1943 = vsub.f32 %v1534, %v1937
          %v1944 = vsub.f32 %v1535, %v1936
          %v1945 = vsub.f32 %v1536, %v1937
          %v1946 = vsub.f32 %v1537, %v1936
          %v1947 = vsub.f32 %v1538, %v1937
          %v1948 = vsub.f32 %v1539, %v1936
          %v1949 = vsub.f32 %v1540, %v1937
          %v1950 = vsub.f32 %v1541, %v1936
          %v1951 = vsub.f32 %v1542, %v1937
          %v1952 = vsub.f32 %v1543, %v1936
          %v1953 = vsub.f32 %v1544, %v1937
          %v1954 = vsub.f32 %v1545, %v1936
          %v1955 = vsub.f32 %v1546, %v1937
          %v1956 = vsub.f32 %v1547, %v1936
          %v1957 = vsub.f32 %v1548, %v1937
          %v1958 = vsub.f32 %v1549, %v1936
          %v1959 = vsub.f32 %v1550, %v1937
          %v1960 = vsub.f32 %v1551, %v1936
          %v1961 = vsub.f32 %v1552, %v1937
          %v1962 = vsub.f32 %v1553, %v1936
          %v1963 = vsub.f32 %v1554, %v1937
          %v1964 = vsub.f32 %v1555, %v1936
          %v1965 = vsub.f32 %v1556, %v1937
          %v1966 = vsub.f32 %v1557, %v1936
          %v1967 = vsub.f32 %v1558, %v1937
          %v1968 = vsub.f32 %v1559, %v1936
          %v1969 = vsub.f32 %v1560, %v1937
          %v1970 = vsub.f32 %v1561, %v1936
          %v1971 = vsub.f32 %v1562, %v1937
          %v1973 = vperm.slane %v1598, 0
          %v1974 = vperm.slane %v1598, 1
          %v1977 = vmul.f32 %v1940, %v1973
          %v1978 = vmul.f32 %v1941, %v1974
          %v1979 = vmul.f32 %v1942, %v1973
          %v1980 = vmul.f32 %v1943, %v1974
          %v1981 = vmul.f32 %v1944, %v1973
          %v1982 = vmul.f32 %v1945, %v1974
          %v1983 = vmul.f32 %v1946, %v1973
          %v1984 = vmul.f32 %v1947, %v1974
          %v1985 = vmul.f32 %v1948, %v1973
          %v1986 = vmul.f32 %v1949, %v1974
          %v1987 = vmul.f32 %v1950, %v1973
          %v1988 = vmul.f32 %v1951, %v1974
          %v1989 = vmul.f32 %v1952, %v1973
          %v1990 = vmul.f32 %v1953, %v1974
          %v1991 = vmul.f32 %v1954, %v1973
          %v1992 = vmul.f32 %v1955, %v1974
          %v1993 = vmul.f32 %v1956, %v1973
          %v1994 = vmul.f32 %v1957, %v1974
          %v1995 = vmul.f32 %v1958, %v1973
          %v1996 = vmul.f32 %v1959, %v1974
          %v1997 = vmul.f32 %v1960, %v1973
          %v1998 = vmul.f32 %v1961, %v1974
          %v1999 = vmul.f32 %v1962, %v1973
          %v2000 = vmul.f32 %v1963, %v1974
          %v2001 = vmul.f32 %v1964, %v1973
          %v2002 = vmul.f32 %v1965, %v1974
          %v2003 = vmul.f32 %v1966, %v1973
          %v2004 = vmul.f32 %v1967, %v1974
          %v2005 = vmul.f32 %v1968, %v1973
          %v2006 = vmul.f32 %v1969, %v1974
          %v2007 = vmul.f32 %v1970, %v1973
          %v2008 = vmul.f32 %v1971, %v1974
          %v2009 = vmul.f32 %v1977, %v1673
          %v2010 = vmul.f32 %v1978, %v1674
          %v2011 = vmul.f32 %v1979, %v1673
          %v2012 = vmul.f32 %v1980, %v1674
          %v2013 = vmul.f32 %v1981, %v1673
          %v2014 = vmul.f32 %v1982, %v1674
          %v2015 = vmul.f32 %v1983, %v1673
          %v2016 = vmul.f32 %v1984, %v1674
          %v2017 = vmul.f32 %v1985, %v1673
          %v2018 = vmul.f32 %v1986, %v1674
          %v2019 = vmul.f32 %v1987, %v1673
          %v2020 = vmul.f32 %v1988, %v1674
          %v2021 = vmul.f32 %v1989, %v1673
          %v2022 = vmul.f32 %v1990, %v1674
          %v2023 = vmul.f32 %v1991, %v1673
          %v2024 = vmul.f32 %v1992, %v1674
          %v2025 = vmul.f32 %v1993, %v1673
          %v2026 = vmul.f32 %v1994, %v1674
          %v2027 = vmul.f32 %v1995, %v1673
          %v2028 = vmul.f32 %v1996, %v1674
          %v2029 = vmul.f32 %v1997, %v1673
          %v2030 = vmul.f32 %v1998, %v1674
          %v2031 = vmul.f32 %v1999, %v1673
          %v2032 = vmul.f32 %v2000, %v1674
          %v2033 = vmul.f32 %v2001, %v1673
          %v2034 = vmul.f32 %v2002, %v1674
          %v2035 = vmul.f32 %v2003, %v1673
          %v2036 = vmul.f32 %v2004, %v1674
          %v2037 = vmul.f32 %v2005, %v1673
          %v2038 = vmul.f32 %v2006, %v1674
          %v2039 = vmul.f32 %v2007, %v1673
          %v2040 = vmul.f32 %v2008, %v1674
          %v2041 = vadd.f32 %v2009, %v1707
          %v2042 = vadd.f32 %v2010, %v1708
          %v2043 = vadd.f32 %v2011, %v1707
          %v2044 = vadd.f32 %v2012, %v1708
          %v2045 = vadd.f32 %v2013, %v1707
          %v2046 = vadd.f32 %v2014, %v1708
          %v2047 = vadd.f32 %v2015, %v1707
          %v2048 = vadd.f32 %v2016, %v1708
          %v2049 = vadd.f32 %v2017, %v1707
          %v2050 = vadd.f32 %v2018, %v1708
          %v2051 = vadd.f32 %v2019, %v1707
          %v2052 = vadd.f32 %v2020, %v1708
          %v2053 = vadd.f32 %v2021, %v1707
          %v2054 = vadd.f32 %v2022, %v1708
          %v2055 = vadd.f32 %v2023, %v1707
          %v2056 = vadd.f32 %v2024, %v1708
          %v2057 = vadd.f32 %v2025, %v1707
          %v2058 = vadd.f32 %v2026, %v1708
          %v2059 = vadd.f32 %v2027, %v1707
          %v2060 = vadd.f32 %v2028, %v1708
          %v2061 = vadd.f32 %v2029, %v1707
          %v2062 = vadd.f32 %v2030, %v1708
          %v2063 = vadd.f32 %v2031, %v1707
          %v2064 = vadd.f32 %v2032, %v1708
          %v2065 = vadd.f32 %v2033, %v1707
          %v2066 = vadd.f32 %v2034, %v1708
          %v2067 = vadd.f32 %v2035, %v1707
          %v2068 = vadd.f32 %v2036, %v1708
          %v2069 = vadd.f32 %v2037, %v1707
          %v2070 = vadd.f32 %v2038, %v1708
          %v2071 = vadd.f32 %v2039, %v1707
          %v2072 = vadd.f32 %v2040, %v1708
          %v2073 = vsub.f32 %v2041, %v1741
          %v2074 = vsub.f32 %v2042, %v1742
          %v2075 = vsub.f32 %v2043, %v1741
          %v2076 = vsub.f32 %v2044, %v1742
          %v2077 = vsub.f32 %v2045, %v1741
          %v2078 = vsub.f32 %v2046, %v1742
          %v2079 = vsub.f32 %v2047, %v1741
          %v2080 = vsub.f32 %v2048, %v1742
          %v2081 = vsub.f32 %v2049, %v1741
          %v2082 = vsub.f32 %v2050, %v1742
          %v2083 = vsub.f32 %v2051, %v1741
          %v2084 = vsub.f32 %v2052, %v1742
          %v2085 = vsub.f32 %v2053, %v1741
          %v2086 = vsub.f32 %v2054, %v1742
          %v2087 = vsub.f32 %v2055, %v1741
          %v2088 = vsub.f32 %v2056, %v1742
          %v2089 = vsub.f32 %v2057, %v1741
          %v2090 = vsub.f32 %v2058, %v1742
          %v2091 = vsub.f32 %v2059, %v1741
          %v2092 = vsub.f32 %v2060, %v1742
          %v2093 = vsub.f32 %v2061, %v1741
          %v2094 = vsub.f32 %v2062, %v1742
          %v2095 = vsub.f32 %v2063, %v1741
          %v2096 = vsub.f32 %v2064, %v1742
          %v2097 = vsub.f32 %v2065, %v1741
          %v2098 = vsub.f32 %v2066, %v1742
          %v2099 = vsub.f32 %v2067, %v1741
          %v2100 = vsub.f32 %v2068, %v1742
          %v2101 = vsub.f32 %v2069, %v1741
          %v2102 = vsub.f32 %v2070, %v1742
          %v2103 = vsub.f32 %v2071, %v1741
          %v2104 = vsub.f32 %v2072, %v1742
          %v2105 = vmax.f32 %v2073, 0.0
          %v2106 = vmax.f32 %v2074, 0.0
          %v2107 = vmax.f32 %v2075, 0.0
          %v2108 = vmax.f32 %v2076, 0.0
          %v2109 = vmax.f32 %v2077, 0.0
          %v2110 = vmax.f32 %v2078, 0.0
          %v2111 = vmax.f32 %v2079, 0.0
          %v2112 = vmax.f32 %v2080, 0.0
          %v2113 = vmax.f32 %v2081, 0.0
          %v2114 = vmax.f32 %v2082, 0.0
          %v2115 = vmax.f32 %v2083, 0.0
          %v2116 = vmax.f32 %v2084, 0.0
          %v2117 = vmax.f32 %v2085, 0.0
          %v2118 = vmax.f32 %v2086, 0.0
          %v2119 = vmax.f32 %v2087, 0.0
          %v2120 = vmax.f32 %v2088, 0.0
          %v2121 = vmax.f32 %v2089, 0.0
          %v2122 = vmax.f32 %v2090, 0.0
          %v2123 = vmax.f32 %v2091, 0.0
          %v2124 = vmax.f32 %v2092, 0.0
          %v2125 = vmax.f32 %v2093, 0.0
          %v2126 = vmax.f32 %v2094, 0.0
          %v2127 = vmax.f32 %v2095, 0.0
          %v2128 = vmax.f32 %v2096, 0.0
          %v2129 = vmax.f32 %v2097, 0.0
          %v2130 = vmax.f32 %v2098, 0.0
          %v2131 = vmax.f32 %v2099, 0.0
          %v2132 = vmax.f32 %v2100, 0.0
          %v2133 = vmax.f32 %v2101, 0.0
          %v2134 = vmax.f32 %v2102, 0.0
          %v2135 = vmax.f32 %v2103, 0.0
          %v2136 = vmax.f32 %v2104, 0.0
          %v2137 = vsub.f32 0.0, %v2041
          %v2138 = vsub.f32 0.0, %v2042
          %v2139 = vsub.f32 0.0, %v2043
          %v2140 = vsub.f32 0.0, %v2044
          %v2141 = vsub.f32 0.0, %v2045
          %v2142 = vsub.f32 0.0, %v2046
          %v2143 = vsub.f32 0.0, %v2047
          %v2144 = vsub.f32 0.0, %v2048
          %v2145 = vsub.f32 0.0, %v2049
          %v2146 = vsub.f32 0.0, %v2050
          %v2147 = vsub.f32 0.0, %v2051
          %v2148 = vsub.f32 0.0, %v2052
          %v2149 = vsub.f32 0.0, %v2053
          %v2150 = vsub.f32 0.0, %v2054
          %v2151 = vsub.f32 0.0, %v2055
          %v2152 = vsub.f32 0.0, %v2056
          %v2153 = vsub.f32 0.0, %v2057
          %v2154 = vsub.f32 0.0, %v2058
          %v2155 = vsub.f32 0.0, %v2059
          %v2156 = vsub.f32 0.0, %v2060
          %v2157 = vsub.f32 0.0, %v2061
          %v2158 = vsub.f32 0.0, %v2062
          %v2159 = vsub.f32 0.0, %v2063
          %v2160 = vsub.f32 0.0, %v2064
          %v2161 = vsub.f32 0.0, %v2065
          %v2162 = vsub.f32 0.0, %v2066
          %v2163 = vsub.f32 0.0, %v2067
          %v2164 = vsub.f32 0.0, %v2068
          %v2165 = vsub.f32 0.0, %v2069
          %v2166 = vsub.f32 0.0, %v2070
          %v2167 = vsub.f32 0.0, %v2071
          %v2168 = vsub.f32 0.0, %v2072
          %v2169 = vsub.f32 %v2137, %v1741
          %v2170 = vsub.f32 %v2138, %v1742
          %v2171 = vsub.f32 %v2139, %v1741
          %v2172 = vsub.f32 %v2140, %v1742
          %v2173 = vsub.f32 %v2141, %v1741
          %v2174 = vsub.f32 %v2142, %v1742
          %v2175 = vsub.f32 %v2143, %v1741
          %v2176 = vsub.f32 %v2144, %v1742
          %v2177 = vsub.f32 %v2145, %v1741
          %v2178 = vsub.f32 %v2146, %v1742
          %v2179 = vsub.f32 %v2147, %v1741
          %v2180 = vsub.f32 %v2148, %v1742
          %v2181 = vsub.f32 %v2149, %v1741
          %v2182 = vsub.f32 %v2150, %v1742
          %v2183 = vsub.f32 %v2151, %v1741
          %v2184 = vsub.f32 %v2152, %v1742
          %v2185 = vsub.f32 %v2153, %v1741
          %v2186 = vsub.f32 %v2154, %v1742
          %v2187 = vsub.f32 %v2155, %v1741
          %v2188 = vsub.f32 %v2156, %v1742
          %v2189 = vsub.f32 %v2157, %v1741
          %v2190 = vsub.f32 %v2158, %v1742
          %v2191 = vsub.f32 %v2159, %v1741
          %v2192 = vsub.f32 %v2160, %v1742
          %v2193 = vsub.f32 %v2161, %v1741
          %v2194 = vsub.f32 %v2162, %v1742
          %v2195 = vsub.f32 %v2163, %v1741
          %v2196 = vsub.f32 %v2164, %v1742
          %v2197 = vsub.f32 %v2165, %v1741
          %v2198 = vsub.f32 %v2166, %v1742
          %v2199 = vsub.f32 %v2167, %v1741
          %v2200 = vsub.f32 %v2168, %v1742
          %v2201 = vmax.f32 %v2169, 0.0
          %v2202 = vmax.f32 %v2170, 0.0
          %v2203 = vmax.f32 %v2171, 0.0
          %v2204 = vmax.f32 %v2172, 0.0
          %v2205 = vmax.f32 %v2173, 0.0
          %v2206 = vmax.f32 %v2174, 0.0
          %v2207 = vmax.f32 %v2175, 0.0
          %v2208 = vmax.f32 %v2176, 0.0
          %v2209 = vmax.f32 %v2177, 0.0
          %v2210 = vmax.f32 %v2178, 0.0
          %v2211 = vmax.f32 %v2179, 0.0
          %v2212 = vmax.f32 %v2180, 0.0
          %v2213 = vmax.f32 %v2181, 0.0
          %v2214 = vmax.f32 %v2182, 0.0
          %v2215 = vmax.f32 %v2183, 0.0
          %v2216 = vmax.f32 %v2184, 0.0
          %v2217 = vmax.f32 %v2185, 0.0
          %v2218 = vmax.f32 %v2186, 0.0
          %v2219 = vmax.f32 %v2187, 0.0
          %v2220 = vmax.f32 %v2188, 0.0
          %v2221 = vmax.f32 %v2189, 0.0
          %v2222 = vmax.f32 %v2190, 0.0
          %v2223 = vmax.f32 %v2191, 0.0
          %v2224 = vmax.f32 %v2192, 0.0
          %v2225 = vmax.f32 %v2193, 0.0
          %v2226 = vmax.f32 %v2194, 0.0
          %v2227 = vmax.f32 %v2195, 0.0
          %v2228 = vmax.f32 %v2196, 0.0
          %v2229 = vmax.f32 %v2197, 0.0
          %v2230 = vmax.f32 %v2198, 0.0
          %v2231 = vmax.f32 %v2199, 0.0
          %v2232 = vmax.f32 %v2200, 0.0
          %v2233 = vsub.f32 %v2105, %v2201
          %v2234 = vsub.f32 %v2106, %v2202
          %v2235 = vsub.f32 %v2107, %v2203
          %v2236 = vsub.f32 %v2108, %v2204
          %v2237 = vsub.f32 %v2109, %v2205
          %v2238 = vsub.f32 %v2110, %v2206
          %v2239 = vsub.f32 %v2111, %v2207
          %v2240 = vsub.f32 %v2112, %v2208
          %v2241 = vsub.f32 %v2113, %v2209
          %v2242 = vsub.f32 %v2114, %v2210
          %v2243 = vsub.f32 %v2115, %v2211
          %v2244 = vsub.f32 %v2116, %v2212
          %v2245 = vsub.f32 %v2117, %v2213
          %v2246 = vsub.f32 %v2118, %v2214
          %v2247 = vsub.f32 %v2119, %v2215
          %v2248 = vsub.f32 %v2120, %v2216
          %v2249 = vsub.f32 %v2121, %v2217
          %v2250 = vsub.f32 %v2122, %v2218
          %v2251 = vsub.f32 %v2123, %v2219
          %v2252 = vsub.f32 %v2124, %v2220
          %v2253 = vsub.f32 %v2125, %v2221
          %v2254 = vsub.f32 %v2126, %v2222
          %v2255 = vsub.f32 %v2127, %v2223
          %v2256 = vsub.f32 %v2128, %v2224
          %v2257 = vsub.f32 %v2129, %v2225
          %v2258 = vsub.f32 %v2130, %v2226
          %v2259 = vsub.f32 %v2131, %v2227
          %v2260 = vsub.f32 %v2132, %v2228
          %v2261 = vsub.f32 %v2133, %v2229
          %v2262 = vsub.f32 %v2134, %v2230
          %v2263 = vsub.f32 %v2135, %v2231
          %v2264 = vsub.f32 %v2136, %v2232
          %v2265 = vpack.c.bf16 %v1904, %v1903
          %v2266 = vpack.c.bf16 %v1906, %v1905
          %v2267 = vpack.c.bf16 %v1908, %v1907
          %v2268 = vpack.c.bf16 %v1910, %v1909
          %v2269 = vpack.c.bf16 %v1912, %v1911
          %v2270 = vpack.c.bf16 %v1914, %v1913
          %v2271 = vpack.c.bf16 %v1916, %v1915
          %v2272 = vpack.c.bf16 %v1918, %v1917
          %v2273 = vpack.c.bf16 %v1920, %v1919
          %v2274 = vpack.c.bf16 %v1922, %v1921
          %v2275 = vpack.c.bf16 %v1924, %v1923
          %v2276 = vpack.c.bf16 %v1926, %v1925
          %v2277 = vpack.c.bf16 %v1928, %v1927
          %v2278 = vpack.c.bf16 %v1930, %v1929
          %v2279 = vpack.c.bf16 %v1932, %v1931
          %v2280 = vpack.c.bf16 %v1934, %v1933
          %v2281 = vpack.c.bf16 %v2234, %v2233
          %v2282 = vpack.c.bf16 %v2236, %v2235
          %v2283 = vpack.c.bf16 %v2238, %v2237
          %v2284 = vpack.c.bf16 %v2240, %v2239
          %v2285 = vpack.c.bf16 %v2242, %v2241
          %v2286 = vpack.c.bf16 %v2244, %v2243
          %v2287 = vpack.c.bf16 %v2246, %v2245
          %v2288 = vpack.c.bf16 %v2248, %v2247
          %v2289 = vpack.c.bf16 %v2250, %v2249
          %v2290 = vpack.c.bf16 %v2252, %v2251
          %v2291 = vpack.c.bf16 %v2254, %v2253
          %v2292 = vpack.c.bf16 %v2256, %v2255
          %v2293 = vpack.c.bf16 %v2258, %v2257
          %v2294 = vpack.c.bf16 %v2260, %v2259
          %v2295 = vpack.c.bf16 %v2262, %v2261
          %v2296 = vpack.c.bf16 %v2264, %v2263
          %v2313 = vunpack.c.l.b16 %v2265
          %v2314 = vunpack.c.h.b16 %v2265
          %v2315 = vunpack.c.l.b16 %v2266
          %v2316 = vunpack.c.h.b16 %v2266
          %v2317 = vunpack.c.l.b16 %v2267
          %v2318 = vunpack.c.h.b16 %v2267
          %v2319 = vunpack.c.l.b16 %v2268
          %v2320 = vunpack.c.h.b16 %v2268
          %v2321 = vunpack.c.l.b16 %v2269
          %v2322 = vunpack.c.h.b16 %v2269
          %v2323 = vunpack.c.l.b16 %v2270
          %v2324 = vunpack.c.h.b16 %v2270
          %v2325 = vunpack.c.l.b16 %v2271
          %v2326 = vunpack.c.h.b16 %v2271
          %v2327 = vunpack.c.l.b16 %v2272
          %v2328 = vunpack.c.h.b16 %v2272
          %v2329 = vunpack.c.l.b16 %v2273
          %v2330 = vunpack.c.h.b16 %v2273
          %v2331 = vunpack.c.l.b16 %v2274
          %v2332 = vunpack.c.h.b16 %v2274
          %v2333 = vunpack.c.l.b16 %v2275
          %v2334 = vunpack.c.h.b16 %v2275
          %v2335 = vunpack.c.l.b16 %v2276
          %v2336 = vunpack.c.h.b16 %v2276
          %v2337 = vunpack.c.l.b16 %v2277
          %v2338 = vunpack.c.h.b16 %v2277
          %v2339 = vunpack.c.l.b16 %v2278
          %v2340 = vunpack.c.h.b16 %v2278
          %v2341 = vunpack.c.l.b16 %v2279
          %v2342 = vunpack.c.h.b16 %v2279
          %v2343 = vunpack.c.l.b16 %v2280
          %v2344 = vunpack.c.h.b16 %v2280
          %v2345 = vpack.c.b16 %v2315, %v2313
          %v2346 = vpack.c.b16 %v2316, %v2314
          %v2347 = vpack.c.b16 %v2319, %v2317
          %v2348 = vpack.c.b16 %v2320, %v2318
          %v2349 = vpack.c.b16 %v2323, %v2321
          %v2350 = vpack.c.b16 %v2324, %v2322
          %v2351 = vpack.c.b16 %v2327, %v2325
          %v2352 = vpack.c.b16 %v2328, %v2326
          %v2353 = vpack.c.b16 %v2331, %v2329
          %v2354 = vpack.c.b16 %v2332, %v2330
          %v2355 = vpack.c.b16 %v2335, %v2333
          %v2356 = vpack.c.b16 %v2336, %v2334
          %v2357 = vpack.c.b16 %v2339, %v2337
          %v2358 = vpack.c.b16 %v2340, %v2338
          %v2359 = vpack.c.b16 %v2343, %v2341
          %v2360 = vpack.c.b16 %v2344, %v2342
          %v2393 = vunpack.c.l.b16 %v2281
          %v2394 = vunpack.c.h.b16 %v2281
          %v2395 = vunpack.c.l.b16 %v2282
          %v2396 = vunpack.c.h.b16 %v2282
          %v2397 = vunpack.c.l.b16 %v2283
          %v2398 = vunpack.c.h.b16 %v2283
          %v2399 = vunpack.c.l.b16 %v2284
          %v2400 = vunpack.c.h.b16 %v2284
          %v2401 = vunpack.c.l.b16 %v2285
          %v2402 = vunpack.c.h.b16 %v2285
          %v2403 = vunpack.c.l.b16 %v2286
          %v2404 = vunpack.c.h.b16 %v2286
          %v2405 = vunpack.c.l.b16 %v2287
          %v2406 = vunpack.c.h.b16 %v2287
          %v2407 = vunpack.c.l.b16 %v2288
          %v2408 = vunpack.c.h.b16 %v2288
          %v2409 = vunpack.c.l.b16 %v2289
          %v2410 = vunpack.c.h.b16 %v2289
          %v2411 = vunpack.c.l.b16 %v2290
          %v2412 = vunpack.c.h.b16 %v2290
          %v2413 = vunpack.c.l.b16 %v2291
          %v2414 = vunpack.c.h.b16 %v2291
          %v2415 = vunpack.c.l.b16 %v2292
          %v2416 = vunpack.c.h.b16 %v2292
          %v2417 = vunpack.c.l.b16 %v2293
          %v2418 = vunpack.c.h.b16 %v2293
          %v2419 = vunpack.c.l.b16 %v2294
          %v2420 = vunpack.c.h.b16 %v2294
          %v2421 = vunpack.c.l.b16 %v2295
          %v2422 = vunpack.c.h.b16 %v2295
          %v2423 = vunpack.c.l.b16 %v2296
          %v2424 = vunpack.c.h.b16 %v2296
          %v2425 = vpack.c.b16 %v2395, %v2393
          %v2426 = vpack.c.b16 %v2396, %v2394
          %v2427 = vpack.c.b16 %v2399, %v2397
          %v2428 = vpack.c.b16 %v2400, %v2398
          %v2429 = vpack.c.b16 %v2403, %v2401
          %v2430 = vpack.c.b16 %v2404, %v2402
          %v2431 = vpack.c.b16 %v2407, %v2405
          %v2432 = vpack.c.b16 %v2408, %v2406
          %v2433 = vpack.c.b16 %v2411, %v2409
          %v2434 = vpack.c.b16 %v2412, %v2410
          %v2435 = vpack.c.b16 %v2415, %v2413
          %v2436 = vpack.c.b16 %v2416, %v2414
          %v2437 = vpack.c.b16 %v2419, %v2417
          %v2438 = vpack.c.b16 %v2420, %v2418
          %v2439 = vpack.c.b16 %v2423, %v2421
          %v2440 = vpack.c.b16 %v2424, %v2422
          %v2457 = vld [vmem:[#allocation14] sm:$0xff]
          %v2458 = vld [vmem:[#allocation14 + $0x8] sm:$0xff]
          %v2459 = vld [vmem:[#allocation14 + $0x10] sm:$0xff]
          %v2460 = vld [vmem:[#allocation14 + $0x18] sm:$0xff]
          %v2461 = vld [vmem:[#allocation14 + $0x20] sm:$0xff]
          %v2462 = vld [vmem:[#allocation14 + $0x28] sm:$0xff]
          %v2463 = vld [vmem:[#allocation14 + $0x30] sm:$0xff]
          %v2464 = vld [vmem:[#allocation14 + $0x38] sm:$0xff]
          %v2465 = vld [vmem:[#allocation14 + $0x40] sm:$0xff]
          %v2466 = vld [vmem:[#allocation14 + $0x48] sm:$0xff]
          %v2467 = vld [vmem:[#allocation14 + $0x50] sm:$0xff]
          %v2468 = vld [vmem:[#allocation14 + $0x58] sm:$0xff]
          %v2469 = vld [vmem:[#allocation14 + $0x60] sm:$0xff]
          %v2470 = vld [vmem:[#allocation14 + $0x68] sm:$0xff]
          %v2471 = vld [vmem:[#allocation14 + $0x70] sm:$0xff]
          %v2472 = vld [vmem:[#allocation14 + $0x78] sm:$0xff]
          %v2473 = vld [vmem:[#allocation14 + $0x80] sm:$0xff]
          %v2474 = vld [vmem:[#allocation14 + $0x88] sm:$0xff]
          %v2475 = vld [vmem:[#allocation14 + $0x90] sm:$0xff]
          %v2476 = vld [vmem:[#allocation14 + $0x98] sm:$0xff]
          %v2477 = vld [vmem:[#allocation14 + $0xa0] sm:$0xff]
          %v2478 = vld [vmem:[#allocation14 + $0xa8] sm:$0xff]
          %v2479 = vld [vmem:[#allocation14 + $0xb0] sm:$0xff]
          %v2480 = vld [vmem:[#allocation14 + $0xb8] sm:$0xff]
          %v2481 = vld [vmem:[#allocation14 + $0xc0] sm:$0xff]
          %v2482 = vld [vmem:[#allocation14 + $0xc8] sm:$0xff]
          %v2483 = vld [vmem:[#allocation14 + $0xd0] sm:$0xff]
          %v2484 = vld [vmem:[#allocation14 + $0xd8] sm:$0xff]
          %v2485 = vld [vmem:[#allocation14 + $0xe0] sm:$0xff]
          %v2486 = vld [vmem:[#allocation14 + $0xe8] sm:$0xff]
          %v2487 = vld [vmem:[#allocation14 + $0xf0] sm:$0xff]
          %v2488 = vld [vmem:[#allocation14 + $0xf8] sm:$0xff]
          %v2489 = vperm.slane %v1563, 1
          %v2490 = vperm.slane %v1564, 1
          %v2523 = vunpack.c.l.b16 %v2457
          %v2524 = vunpack.c.h.b16 %v2457
          %v2525 = vunpack.c.l.b16 %v2458
          %v2526 = vunpack.c.h.b16 %v2458
          %v2527 = vunpack.c.l.b16 %v2459
          %v2528 = vunpack.c.h.b16 %v2459
          %v2529 = vunpack.c.l.b16 %v2460
          %v2530 = vunpack.c.h.b16 %v2460
          %v2531 = vunpack.c.l.b16 %v2461
          %v2532 = vunpack.c.h.b16 %v2461
          %v2533 = vunpack.c.l.b16 %v2462
          %v2534 = vunpack.c.h.b16 %v2462
          %v2535 = vunpack.c.l.b16 %v2463
          %v2536 = vunpack.c.h.b16 %v2463
          %v2537 = vunpack.c.l.b16 %v2464
          %v2538 = vunpack.c.h.b16 %v2464
          %v2539 = vunpack.c.l.b16 %v2465
          %v2540 = vunpack.c.h.b16 %v2465
          %v2541 = vunpack.c.l.b16 %v2466
          %v2542 = vunpack.c.h.b16 %v2466
          %v2543 = vunpack.c.l.b16 %v2467
          %v2544 = vunpack.c.h.b16 %v2467
          %v2545 = vunpack.c.l.b16 %v2468
          %v2546 = vunpack.c.h.b16 %v2468
          %v2547 = vunpack.c.l.b16 %v2469
          %v2548 = vunpack.c.h.b16 %v2469
          %v2549 = vunpack.c.l.b16 %v2470
          %v2550 = vunpack.c.h.b16 %v2470
          %v2551 = vunpack.c.l.b16 %v2471
          %v2552 = vunpack.c.h.b16 %v2471
          %v2553 = vunpack.c.l.b16 %v2472
          %v2554 = vunpack.c.h.b16 %v2472
          %v2555 = vunpack.c.l.b16 %v2473
          %v2556 = vunpack.c.h.b16 %v2473
          %v2557 = vunpack.c.l.b16 %v2474
          %v2558 = vunpack.c.h.b16 %v2474
          %v2559 = vunpack.c.l.b16 %v2475
          %v2560 = vunpack.c.h.b16 %v2475
          %v2561 = vunpack.c.l.b16 %v2476
          %v2562 = vunpack.c.h.b16 %v2476
          %v2563 = vunpack.c.l.b16 %v2477
          %v2564 = vunpack.c.h.b16 %v2477
          %v2565 = vunpack.c.l.b16 %v2478
          %v2566 = vunpack.c.h.b16 %v2478
          %v2567 = vunpack.c.l.b16 %v2479
          %v2568 = vunpack.c.h.b16 %v2479
          %v2569 = vunpack.c.l.b16 %v2480
          %v2570 = vunpack.c.h.b16 %v2480
          %v2571 = vunpack.c.l.b16 %v2481
          %v2572 = vunpack.c.h.b16 %v2481
          %v2573 = vunpack.c.l.b16 %v2482
          %v2574 = vunpack.c.h.b16 %v2482
          %v2575 = vunpack.c.l.b16 %v2483
          %v2576 = vunpack.c.h.b16 %v2483
          %v2577 = vunpack.c.l.b16 %v2484
          %v2578 = vunpack.c.h.b16 %v2484
          %v2579 = vunpack.c.l.b16 %v2485
          %v2580 = vunpack.c.h.b16 %v2485
          %v2581 = vunpack.c.l.b16 %v2486
          %v2582 = vunpack.c.h.b16 %v2486
          %v2583 = vunpack.c.l.b16 %v2487
          %v2584 = vunpack.c.h.b16 %v2487
          %v2585 = vunpack.c.l.b16 %v2488
          %v2586 = vunpack.c.h.b16 %v2488
          %v2587 = vpack.c.b16 %v2525, %v2523
          %v2588 = vpack.c.b16 %v2526, %v2524
          %v2589 = vpack.c.b16 %v2529, %v2527
          %v2590 = vpack.c.b16 %v2530, %v2528
          %v2591 = vpack.c.b16 %v2533, %v2531
          %v2592 = vpack.c.b16 %v2534, %v2532
          %v2593 = vpack.c.b16 %v2537, %v2535
          %v2594 = vpack.c.b16 %v2538, %v2536
          %v2595 = vpack.c.b16 %v2541, %v2539
          %v2596 = vpack.c.b16 %v2542, %v2540
          %v2597 = vpack.c.b16 %v2545, %v2543
          %v2598 = vpack.c.b16 %v2546, %v2544
          %v2599 = vpack.c.b16 %v2549, %v2547
          %v2600 = vpack.c.b16 %v2550, %v2548
          %v2601 = vpack.c.b16 %v2553, %v2551
          %v2602 = vpack.c.b16 %v2554, %v2552
          %v2603 = vpack.c.b16 %v2557, %v2555
          %v2604 = vpack.c.b16 %v2558, %v2556
          %v2605 = vpack.c.b16 %v2561, %v2559
          %v2606 = vpack.c.b16 %v2562, %v2560
          %v2607 = vpack.c.b16 %v2565, %v2563
          %v2608 = vpack.c.b16 %v2566, %v2564
          %v2609 = vpack.c.b16 %v2569, %v2567
          %v2610 = vpack.c.b16 %v2570, %v2568
          %v2611 = vpack.c.b16 %v2573, %v2571
          %v2612 = vpack.c.b16 %v2574, %v2572
          %v2613 = vpack.c.b16 %v2577, %v2575
          %v2614 = vpack.c.b16 %v2578, %v2576
          %v2615 = vpack.c.b16 %v2581, %v2579
          %v2616 = vpack.c.b16 %v2582, %v2580
          %v2617 = vpack.c.b16 %v2585, %v2583
          %v2618 = vpack.c.b16 %v2586, %v2584
          %2651 = vmatpush.bf16.msra.mxu0 %v2601
          %2652 = vmatpush.bf16.msra.mxu0 %v2599
          %2653 = vmatpush.bf16.msra.mxu0 %v2597
          %2654 = vmatpush.bf16.msra.mxu0 %v2595
          %2655 = vmatpush.bf16.msra.mxu0 %v2593
          %2656 = vmatpush.bf16.msra.mxu0 %v2591
          %2657 = vmatpush.bf16.msra.mxu0 %v2589
          %2658 = vmatpush.bf16.msra.mxu0 %v2587
          %2659 = vmatmul.bf16.gmra.mxu0 %v2345
          %v2660 = vpop.f32.mrf.mxu0
          %v2661 = vadd.f32 %v2489, %v2660
          %v2662 = vpop.f32.mrf.mxu0
          %v2663 = vadd.f32 %v2489, %v2662
          %2664 = vmatmul.bf16.gmra.mxu0 %v2347
          %v2665 = vpop.f32.mrf.mxu0
          %v2666 = vadd.f32 %v2489, %v2665
          %v2667 = vpop.f32.mrf.mxu0
          %v2668 = vadd.f32 %v2489, %v2667
          %2669 = vmatmul.bf16.gmra.mxu0 %v2349
          %v2670 = vpop.f32.mrf.mxu0
          %v2671 = vadd.f32 %v2489, %v2670
          %v2672 = vpop.f32.mrf.mxu0
          %v2673 = vadd.f32 %v2489, %v2672
          %2674 = vmatmul.bf16.gmra.mxu0 %v2351
          %v2675 = vpop.f32.mrf.mxu0
          %v2676 = vadd.f32 %v2489, %v2675
          %v2677 = vpop.f32.mrf.mxu0
          %v2678 = vadd.f32 %v2489, %v2677
          %2679 = vmatmul.bf16.gmra.mxu0 %v2353
          %v2680 = vpop.f32.mrf.mxu0
          %v2681 = vadd.f32 %v2489, %v2680
          %v2682 = vpop.f32.mrf.mxu0
          %v2683 = vadd.f32 %v2489, %v2682
          %2684 = vmatmul.bf16.gmra.mxu0 %v2355
          %v2685 = vpop.f32.mrf.mxu0
          %v2686 = vadd.f32 %v2489, %v2685
          %v2687 = vpop.f32.mrf.mxu0
          %v2688 = vadd.f32 %v2489, %v2687
          %2689 = vmatmul.bf16.gmra.mxu0 %v2357
          %v2690 = vpop.f32.mrf.mxu0
          %v2691 = vadd.f32 %v2489, %v2690
          %v2692 = vpop.f32.mrf.mxu0
          %v2693 = vadd.f32 %v2489, %v2692
          %2694 = vmatmul.bf16.gmra.mxu0 %v2359
          %v2695 = vpop.f32.mrf.mxu0
          %v2696 = vadd.f32 %v2489, %v2695
          %v2697 = vpop.f32.mrf.mxu0
          %v2698 = vadd.f32 %v2489, %v2697
          %2699 = vmatmul.bf16.gmra.mxu0 %v2425
          %v2700 = vpop.f32.mrf.mxu0
          %v2701 = vadd.f32 %v2489, %v2700
          %v2702 = vpop.f32.mrf.mxu0
          %v2703 = vadd.f32 %v2489, %v2702
          %2704 = vmatmul.bf16.gmra.mxu0 %v2427
          %v2705 = vpop.f32.mrf.mxu0
          %v2706 = vadd.f32 %v2489, %v2705
          %v2707 = vpop.f32.mrf.mxu0
          %v2708 = vadd.f32 %v2489, %v2707
          %2709 = vmatmul.bf16.gmra.mxu0 %v2429
          %v2710 = vpop.f32.mrf.mxu0
          %v2711 = vadd.f32 %v2489, %v2710
          %v2712 = vpop.f32.mrf.mxu0
          %v2713 = vadd.f32 %v2489, %v2712
          %2714 = vmatmul.bf16.gmra.mxu0 %v2431
          %v2715 = vpop.f32.mrf.mxu0
          %v2716 = vadd.f32 %v2489, %v2715
          %v2717 = vpop.f32.mrf.mxu0
          %v2718 = vadd.f32 %v2489, %v2717
          %2719 = vmatmul.bf16.gmra.mxu0 %v2433
          %v2720 = vpop.f32.mrf.mxu0
          %v2721 = vadd.f32 %v2489, %v2720
          %v2722 = vpop.f32.mrf.mxu0
          %v2723 = vadd.f32 %v2489, %v2722
          %2724 = vmatmul.bf16.gmra.mxu0 %v2435
          %v2725 = vpop.f32.mrf.mxu0
          %v2726 = vadd.f32 %v2489, %v2725
          %v2727 = vpop.f32.mrf.mxu0
          %v2728 = vadd.f32 %v2489, %v2727
          %2729 = vmatmul.bf16.gmra.mxu0 %v2437
          %v2730 = vpop.f32.mrf.mxu0
          %v2731 = vadd.f32 %v2489, %v2730
          %v2732 = vpop.f32.mrf.mxu0
          %v2733 = vadd.f32 %v2489, %v2732
          %2734 = vmatmul.bf16.gmra.mxu0 %v2439
          %v2735 = vpop.f32.mrf.mxu0
          %v2736 = vadd.f32 %v2489, %v2735
          %v2737 = vpop.f32.mrf.mxu0
          %v2738 = vadd.f32 %v2489, %v2737
          %2739 = vdwg.mxu0
          %2740 = vmatpush.bf16.msra.mxu0 %v2617
          %2741 = vmatpush.bf16.msra.mxu0 %v2615
          %2742 = vmatpush.bf16.msra.mxu0 %v2613
          %2743 = vmatpush.bf16.msra.mxu0 %v2611
          %2744 = vmatpush.bf16.msra.mxu0 %v2609
          %2745 = vmatpush.bf16.msra.mxu0 %v2607
          %2746 = vmatpush.bf16.msra.mxu0 %v2605
          %2747 = vmatpush.bf16.msra.mxu0 %v2603
          %2748 = vmatmul.bf16.gmra.mxu0 %v2346
          %v2749 = vpop.f32.mrf.mxu0
          %v2750 = vadd.f32 %v2661, %v2749
          %v2751 = vpop.f32.mrf.mxu0
          %v2752 = vadd.f32 %v2663, %v2751
          %2753 = vmatmul.bf16.gmra.mxu0 %v2348
          %v2754 = vpop.f32.mrf.mxu0
          %v2755 = vadd.f32 %v2666, %v2754
          %v2756 = vpop.f32.mrf.mxu0
          %v2757 = vadd.f32 %v2668, %v2756
          %2758 = vmatmul.bf16.gmra.mxu0 %v2350
          %v2759 = vpop.f32.mrf.mxu0
          %v2760 = vadd.f32 %v2671, %v2759
          %v2761 = vpop.f32.mrf.mxu0
          %v2762 = vadd.f32 %v2673, %v2761
          %2763 = vmatmul.bf16.gmra.mxu0 %v2352
          %v2764 = vpop.f32.mrf.mxu0
          %v2765 = vadd.f32 %v2676, %v2764
          %v2766 = vpop.f32.mrf.mxu0
          %v2767 = vadd.f32 %v2678, %v2766
          %2768 = vmatmul.bf16.gmra.mxu0 %v2354
          %v2769 = vpop.f32.mrf.mxu0
          %v2770 = vadd.f32 %v2681, %v2769
          %v2771 = vpop.f32.mrf.mxu0
          %v2772 = vadd.f32 %v2683, %v2771
          %2773 = vmatmul.bf16.gmra.mxu0 %v2356
          %v2774 = vpop.f32.mrf.mxu0
          %v2775 = vadd.f32 %v2686, %v2774
          %v2776 = vpop.f32.mrf.mxu0
          %v2777 = vadd.f32 %v2688, %v2776
          %2778 = vmatmul.bf16.gmra.mxu0 %v2358
          %v2779 = vpop.f32.mrf.mxu0
          %v2780 = vadd.f32 %v2691, %v2779
          %v2781 = vpop.f32.mrf.mxu0
          %v2782 = vadd.f32 %v2693, %v2781
          %2783 = vmatmul.bf16.gmra.mxu0 %v2360
          %v2784 = vpop.f32.mrf.mxu0
          %v2785 = vadd.f32 %v2696, %v2784
          %v2786 = vpop.f32.mrf.mxu0
          %v2787 = vadd.f32 %v2698, %v2786
          %2788 = vmatmul.bf16.gmra.mxu0 %v2426
          %v2789 = vpop.f32.mrf.mxu0
          %v2790 = vadd.f32 %v2701, %v2789
          %v2791 = vpop.f32.mrf.mxu0
          %v2792 = vadd.f32 %v2703, %v2791
          %2793 = vmatmul.bf16.gmra.mxu0 %v2428
          %v2794 = vpop.f32.mrf.mxu0
          %v2795 = vadd.f32 %v2706, %v2794
          %v2796 = vpop.f32.mrf.mxu0
          %v2797 = vadd.f32 %v2708, %v2796
          %2798 = vmatmul.bf16.gmra.mxu0 %v2430
          %v2799 = vpop.f32.mrf.mxu0
          %v2800 = vadd.f32 %v2711, %v2799
          %v2801 = vpop.f32.mrf.mxu0
          %v2802 = vadd.f32 %v2713, %v2801
          %2803 = vmatmul.bf16.gmra.mxu0 %v2432
          %v2804 = vpop.f32.mrf.mxu0
          %v2805 = vadd.f32 %v2716, %v2804
          %v2806 = vpop.f32.mrf.mxu0
          %v2807 = vadd.f32 %v2718, %v2806
          %2808 = vmatmul.bf16.gmra.mxu0 %v2434
          %v2809 = vpop.f32.mrf.mxu0
          %v2810 = vadd.f32 %v2721, %v2809
          %v2811 = vpop.f32.mrf.mxu0
          %v2812 = vadd.f32 %v2723, %v2811
          %2813 = vmatmul.bf16.gmra.mxu0 %v2436
          %v2814 = vpop.f32.mrf.mxu0
          %v2815 = vadd.f32 %v2726, %v2814
          %v2816 = vpop.f32.mrf.mxu0
          %v2817 = vadd.f32 %v2728, %v2816
          %2818 = vmatmul.bf16.gmra.mxu0 %v2438
          %v2819 = vpop.f32.mrf.mxu0
          %v2820 = vadd.f32 %v2731, %v2819
          %v2821 = vpop.f32.mrf.mxu0
          %v2822 = vadd.f32 %v2733, %v2821
          %2823 = vmatmul.bf16.gmra.mxu0 %v2440
          %v2824 = vpop.f32.mrf.mxu0
          %v2825 = vadd.f32 %v2736, %v2824
          %v2826 = vpop.f32.mrf.mxu0
          %v2827 = vadd.f32 %v2738, %v2826
          %2828 = vdwg.mxu0
          %2829 = vmatpush.bf16.msra.mxu0 %v2602
          %2830 = vmatpush.bf16.msra.mxu0 %v2600
          %2831 = vmatpush.bf16.msra.mxu0 %v2598
          %2832 = vmatpush.bf16.msra.mxu0 %v2596
          %2833 = vmatpush.bf16.msra.mxu0 %v2594
          %2834 = vmatpush.bf16.msra.mxu0 %v2592
          %2835 = vmatpush.bf16.msra.mxu0 %v2590
          %2836 = vmatpush.bf16.msra.mxu0 %v2588
          %2837 = vmatmul.bf16.gmra.mxu0 %v2345
          %v2838 = vpop.f32.mrf.mxu0
          %v2839 = vadd.f32 %v2490, %v2838
          %v2840 = vpop.f32.mrf.mxu0
          %v2841 = vadd.f32 %v2490, %v2840
          %2842 = vmatmul.bf16.gmra.mxu0 %v2347
          %v2843 = vpop.f32.mrf.mxu0
          %v2844 = vadd.f32 %v2490, %v2843
          %v2845 = vpop.f32.mrf.mxu0
          %v2846 = vadd.f32 %v2490, %v2845
          %2847 = vmatmul.bf16.gmra.mxu0 %v2349
          %v2848 = vpop.f32.mrf.mxu0
          %v2849 = vadd.f32 %v2490, %v2848
          %v2850 = vpop.f32.mrf.mxu0
          %v2851 = vadd.f32 %v2490, %v2850
          %2852 = vmatmul.bf16.gmra.mxu0 %v2351
          %v2853 = vpop.f32.mrf.mxu0
          %v2854 = vadd.f32 %v2490, %v2853
          %v2855 = vpop.f32.mrf.mxu0
          %v2856 = vadd.f32 %v2490, %v2855
          %2857 = vmatmul.bf16.gmra.mxu0 %v2353
          %v2858 = vpop.f32.mrf.mxu0
          %v2859 = vadd.f32 %v2490, %v2858
          %v2860 = vpop.f32.mrf.mxu0
          %v2861 = vadd.f32 %v2490, %v2860
          %2862 = vmatmul.bf16.gmra.mxu0 %v2355
          %v2863 = vpop.f32.mrf.mxu0
          %v2864 = vadd.f32 %v2490, %v2863
          %v2865 = vpop.f32.mrf.mxu0
          %v2866 = vadd.f32 %v2490, %v2865
          %2867 = vmatmul.bf16.gmra.mxu0 %v2357
          %v2868 = vpop.f32.mrf.mxu0
          %v2869 = vadd.f32 %v2490, %v2868
          %v2870 = vpop.f32.mrf.mxu0
          %v2871 = vadd.f32 %v2490, %v2870
          %2872 = vmatmul.bf16.gmra.mxu0 %v2359
          %v2873 = vpop.f32.mrf.mxu0
          %v2874 = vadd.f32 %v2490, %v2873
          %v2875 = vpop.f32.mrf.mxu0
          %v2876 = vadd.f32 %v2490, %v2875
          %2877 = vmatmul.bf16.gmra.mxu0 %v2425
          %v2878 = vpop.f32.mrf.mxu0
          %v2879 = vadd.f32 %v2490, %v2878
          %v2880 = vpop.f32.mrf.mxu0
          %v2881 = vadd.f32 %v2490, %v2880
          %2882 = vmatmul.bf16.gmra.mxu0 %v2427
          %v2883 = vpop.f32.mrf.mxu0
          %v2884 = vadd.f32 %v2490, %v2883
          %v2885 = vpop.f32.mrf.mxu0
          %v2886 = vadd.f32 %v2490, %v2885
          %2887 = vmatmul.bf16.gmra.mxu0 %v2429
          %v2888 = vpop.f32.mrf.mxu0
          %v2889 = vadd.f32 %v2490, %v2888
          %v2890 = vpop.f32.mrf.mxu0
          %v2891 = vadd.f32 %v2490, %v2890
          %2892 = vmatmul.bf16.gmra.mxu0 %v2431
          %v2893 = vpop.f32.mrf.mxu0
          %v2894 = vadd.f32 %v2490, %v2893
          %v2895 = vpop.f32.mrf.mxu0
          %v2896 = vadd.f32 %v2490, %v2895
          %2897 = vmatmul.bf16.gmra.mxu0 %v2433
          %v2898 = vpop.f32.mrf.mxu0
          %v2899 = vadd.f32 %v2490, %v2898
          %v2900 = vpop.f32.mrf.mxu0
          %v2901 = vadd.f32 %v2490, %v2900
          %2902 = vmatmul.bf16.gmra.mxu0 %v2435
          %v2903 = vpop.f32.mrf.mxu0
          %v2904 = vadd.f32 %v2490, %v2903
          %v2905 = vpop.f32.mrf.mxu0
          %v2906 = vadd.f32 %v2490, %v2905
          %2907 = vmatmul.bf16.gmra.mxu0 %v2437
          %v2908 = vpop.f32.mrf.mxu0
          %v2909 = vadd.f32 %v2490, %v2908
          %v2910 = vpop.f32.mrf.mxu0
          %v2911 = vadd.f32 %v2490, %v2910
          %2912 = vmatmul.bf16.gmra.mxu0 %v2439
          %v2913 = vpop.f32.mrf.mxu0
          %v2914 = vadd.f32 %v2490, %v2913
          %v2915 = vpop.f32.mrf.mxu0
          %v2916 = vadd.f32 %v2490, %v2915
          %2917 = vdwg.mxu0
          %2918 = vmatpush.bf16.msra.mxu0 %v2618
          %2919 = vmatpush.bf16.msra.mxu0 %v2616
          %2920 = vmatpush.bf16.msra.mxu0 %v2614
          %2921 = vmatpush.bf16.msra.mxu0 %v2612
          %2922 = vmatpush.bf16.msra.mxu0 %v2610
          %2923 = vmatpush.bf16.msra.mxu0 %v2608
          %2924 = vmatpush.bf16.msra.mxu0 %v2606
          %2925 = vmatpush.bf16.msra.mxu0 %v2604
          %2926 = vmatmul.bf16.gmra.mxu0 %v2346
          %v2927 = vpop.f32.mrf.mxu0
          %v2928 = vadd.f32 %v2839, %v2927
          %v2929 = vpop.f32.mrf.mxu0
          %v2930 = vadd.f32 %v2841, %v2929
          %2931 = vmatmul.bf16.gmra.mxu0 %v2348
          %v2932 = vpop.f32.mrf.mxu0
          %v2933 = vadd.f32 %v2844, %v2932
          %v2934 = vpop.f32.mrf.mxu0
          %v2935 = vadd.f32 %v2846, %v2934
          %2936 = vmatmul.bf16.gmra.mxu0 %v2350
          %v2937 = vpop.f32.mrf.mxu0
          %v2938 = vadd.f32 %v2849, %v2937
          %v2939 = vpop.f32.mrf.mxu0
          %v2940 = vadd.f32 %v2851, %v2939
          %2941 = vmatmul.bf16.gmra.mxu0 %v2352
          %v2942 = vpop.f32.mrf.mxu0
          %v2943 = vadd.f32 %v2854, %v2942
          %v2944 = vpop.f32.mrf.mxu0
          %v2945 = vadd.f32 %v2856, %v2944
          %2946 = vmatmul.bf16.gmra.mxu0 %v2354
          %v2947 = vpop.f32.mrf.mxu0
          %v2948 = vadd.f32 %v2859, %v2947
          %v2949 = vpop.f32.mrf.mxu0
          %v2950 = vadd.f32 %v2861, %v2949
          %2951 = vmatmul.bf16.gmra.mxu0 %v2356
          %v2952 = vpop.f32.mrf.mxu0
          %v2953 = vadd.f32 %v2864, %v2952
          %v2954 = vpop.f32.mrf.mxu0
          %v2955 = vadd.f32 %v2866, %v2954
          %2956 = vmatmul.bf16.gmra.mxu0 %v2358
          %v2957 = vpop.f32.mrf.mxu0
          %v2958 = vadd.f32 %v2869, %v2957
          %v2959 = vpop.f32.mrf.mxu0
          %v2960 = vadd.f32 %v2871, %v2959
          %2961 = vmatmul.bf16.gmra.mxu0 %v2360
          %v2962 = vpop.f32.mrf.mxu0
          %v2963 = vadd.f32 %v2874, %v2962
          %v2964 = vpop.f32.mrf.mxu0
          %v2965 = vadd.f32 %v2876, %v2964
          %2966 = vmatmul.bf16.gmra.mxu0 %v2426
          %v2967 = vpop.f32.mrf.mxu0
          %v2968 = vadd.f32 %v2879, %v2967
          %v2969 = vpop.f32.mrf.mxu0
          %v2970 = vadd.f32 %v2881, %v2969
          %2971 = vmatmul.bf16.gmra.mxu0 %v2428
          %v2972 = vpop.f32.mrf.mxu0
          %v2973 = vadd.f32 %v2884, %v2972
          %v2974 = vpop.f32.mrf.mxu0
          %v2975 = vadd.f32 %v2886, %v2974
          %2976 = vmatmul.bf16.gmra.mxu0 %v2430
          %v2977 = vpop.f32.mrf.mxu0
          %v2978 = vadd.f32 %v2889, %v2977
          %v2979 = vpop.f32.mrf.mxu0
          %v2980 = vadd.f32 %v2891, %v2979
          %2981 = vmatmul.bf16.gmra.mxu0 %v2432
          %v2982 = vpop.f32.mrf.mxu0
          %v2983 = vadd.f32 %v2894, %v2982
          %v2984 = vpop.f32.mrf.mxu0
          %v2985 = vadd.f32 %v2896, %v2984
          %2986 = vmatmul.bf16.gmra.mxu0 %v2434
          %v2987 = vpop.f32.mrf.mxu0
          %v2988 = vadd.f32 %v2899, %v2987
          %v2989 = vpop.f32.mrf.mxu0
          %v2990 = vadd.f32 %v2901, %v2989
          %2991 = vmatmul.bf16.gmra.mxu0 %v2436
          %v2992 = vpop.f32.mrf.mxu0
          %v2993 = vadd.f32 %v2904, %v2992
          %v2994 = vpop.f32.mrf.mxu0
          %v2995 = vadd.f32 %v2906, %v2994
          %2996 = vmatmul.bf16.gmra.mxu0 %v2438
          %v2997 = vpop.f32.mrf.mxu0
          %v2998 = vadd.f32 %v2909, %v2997
          %v2999 = vpop.f32.mrf.mxu0
          %v3000 = vadd.f32 %v2911, %v2999
          %3001 = vmatmul.bf16.gmra.mxu0 %v2440
          %v3002 = vpop.f32.mrf.mxu0
          %v3003 = vadd.f32 %v2914, %v3002
          %v3004 = vpop.f32.mrf.mxu0
          %v3005 = vadd.f32 %v2916, %v3004
          %3006 = vdwg.mxu0
          %v3007 = vmul.f32 %v2750, %v2233
          %v3008 = vmul.f32 %v2928, %v2234
          %v3009 = vmul.f32 %v2752, %v2235
          %v3010 = vmul.f32 %v2930, %v2236
          %v3011 = vmul.f32 %v2755, %v2237
          %v3012 = vmul.f32 %v2933, %v2238
          %v3013 = vmul.f32 %v2757, %v2239
          %v3014 = vmul.f32 %v2935, %v2240
          %v3015 = vmul.f32 %v2760, %v2241
          %v3016 = vmul.f32 %v2938, %v2242
          %v3017 = vmul.f32 %v2762, %v2243
          %v3018 = vmul.f32 %v2940, %v2244
          %v3019 = vmul.f32 %v2765, %v2245
          %v3020 = vmul.f32 %v2943, %v2246
          %v3021 = vmul.f32 %v2767, %v2247
          %v3022 = vmul.f32 %v2945, %v2248
          %v3023 = vmul.f32 %v2770, %v2249
          %v3024 = vmul.f32 %v2948, %v2250
          %v3025 = vmul.f32 %v2772, %v2251
          %v3026 = vmul.f32 %v2950, %v2252
          %v3027 = vmul.f32 %v2775, %v2253
          %v3028 = vmul.f32 %v2953, %v2254
          %v3029 = vmul.f32 %v2777, %v2255
          %v3030 = vmul.f32 %v2955, %v2256
          %v3031 = vmul.f32 %v2780, %v2257
          %v3032 = vmul.f32 %v2958, %v2258
          %v3033 = vmul.f32 %v2782, %v2259
          %v3034 = vmul.f32 %v2960, %v2260
          %v3035 = vmul.f32 %v2785, %v2261
          %v3036 = vmul.f32 %v2963, %v2262
          %v3037 = vmul.f32 %v2787, %v2263
          %v3038 = vmul.f32 %v2965, %v2264
          %v3039 = vmul.f32 %v2790, %v1903
          %v3040 = vmul.f32 %v2968, %v1904
          %v3041 = vmul.f32 %v2792, %v1905
          %v3042 = vmul.f32 %v2970, %v1906
          %v3043 = vmul.f32 %v2795, %v1907
          %v3044 = vmul.f32 %v2973, %v1908
          %v3045 = vmul.f32 %v2797, %v1909
          %v3046 = vmul.f32 %v2975, %v1910
          %v3047 = vmul.f32 %v2800, %v1911
          %v3048 = vmul.f32 %v2978, %v1912
          %v3049 = vmul.f32 %v2802, %v1913
          %v3050 = vmul.f32 %v2980, %v1914
          %v3051 = vmul.f32 %v2805, %v1915
          %v3052 = vmul.f32 %v2983, %v1916
          %v3053 = vmul.f32 %v2807, %v1917
          %v3054 = vmul.f32 %v2985, %v1918
          %v3055 = vmul.f32 %v2810, %v1919
          %v3056 = vmul.f32 %v2988, %v1920
          %v3057 = vmul.f32 %v2812, %v1921
          %v3058 = vmul.f32 %v2990, %v1922
          %v3059 = vmul.f32 %v2815, %v1923
          %v3060 = vmul.f32 %v2993, %v1924
          %v3061 = vmul.f32 %v2817, %v1925
          %v3062 = vmul.f32 %v2995, %v1926
          %v3063 = vmul.f32 %v2820, %v1927
          %v3064 = vmul.f32 %v2998, %v1928
          %v3065 = vmul.f32 %v2822, %v1929
          %v3066 = vmul.f32 %v3000, %v1930
          %v3067 = vmul.f32 %v2825, %v1931
          %v3068 = vmul.f32 %v3003, %v1932
          %v3069 = vmul.f32 %v2827, %v1933
          %v3070 = vmul.f32 %v3005, %v1934
          %v3071 = vadd.f32 %v3007, %v3008
          %3072 = vadd.xlane.f32.xlu0 %v3071
          %v3073 = vpop.xlane.xlu0 %3072
          %v3074 = vadd.f32 %v3009, %v3010
          %3075 = vadd.xlane.f32.xlu0 %v3074
          %v3076 = vpop.xlane.xlu0 %3075
          %v3077 = vadd.f32 %v3011, %v3012
          %3078 = vadd.xlane.f32.xlu0 %v3077
          %v3079 = vpop.xlane.xlu0 %3078
          %v3080 = vadd.f32 %v3013, %v3014
          %3081 = vadd.xlane.f32.xlu0 %v3080
          %v3082 = vpop.xlane.xlu0 %3081
          %v3083 = vadd.f32 %v3015, %v3016
          %3084 = vadd.xlane.f32.xlu0 %v3083
          %v3085 = vpop.xlane.xlu0 %3084
          %v3086 = vadd.f32 %v3017, %v3018
          %3087 = vadd.xlane.f32.xlu0 %v3086
          %v3088 = vpop.xlane.xlu0 %3087
          %v3089 = vadd.f32 %v3019, %v3020
          %3090 = vadd.xlane.f32.xlu0 %v3089
          %v3091 = vpop.xlane.xlu0 %3090
          %v3092 = vadd.f32 %v3021, %v3022
          %3093 = vadd.xlane.f32.xlu0 %v3092
          %v3094 = vpop.xlane.xlu0 %3093
          %v3095 = vadd.f32 %v3023, %v3024
          %3096 = vadd.xlane.f32.xlu0 %v3095
          %v3097 = vpop.xlane.xlu0 %3096
          %v3098 = vadd.f32 %v3025, %v3026
          %3099 = vadd.xlane.f32.xlu0 %v3098
          %v3100 = vpop.xlane.xlu0 %3099
          %v3101 = vadd.f32 %v3027, %v3028
          %3102 = vadd.xlane.f32.xlu0 %v3101
          %v3103 = vpop.xlane.xlu0 %3102
          %v3104 = vadd.f32 %v3029, %v3030
          %3105 = vadd.xlane.f32.xlu0 %v3104
          %v3106 = vpop.xlane.xlu0 %3105
          %v3107 = vadd.f32 %v3031, %v3032
          %3108 = vadd.xlane.f32.xlu0 %v3107
          %v3109 = vpop.xlane.xlu0 %3108
          %v3110 = vadd.f32 %v3033, %v3034
          %3111 = vadd.xlane.f32.xlu0 %v3110
          %v3112 = vpop.xlane.xlu0 %3111
          %v3113 = vadd.f32 %v3035, %v3036
          %3114 = vadd.xlane.f32.xlu0 %v3113
          %v3115 = vpop.xlane.xlu0 %3114
          %v3116 = vadd.f32 %v3037, %v3038
          %3117 = vadd.xlane.f32.xlu0 %v3116
          %v3118 = vpop.xlane.xlu0 %3117
          %v3119 = vadd.f32 %v3039, %v3040
          %3120 = vadd.xlane.f32.xlu0 %v3119
          %v3121 = vpop.xlane.xlu0 %3120
          %v3122 = vadd.f32 %v3041, %v3042
          %3123 = vadd.xlane.f32.xlu0 %v3122
          %v3124 = vpop.xlane.xlu0 %3123
          %v3125 = vadd.f32 %v3043, %v3044
          %3126 = vadd.xlane.f32.xlu0 %v3125
          %v3127 = vpop.xlane.xlu0 %3126
          %v3128 = vadd.f32 %v3045, %v3046
          %3129 = vadd.xlane.f32.xlu0 %v3128
          %v3130 = vpop.xlane.xlu0 %3129
          %v3131 = vadd.f32 %v3047, %v3048
          %3132 = vadd.xlane.f32.xlu0 %v3131
          %v3133 = vpop.xlane.xlu0 %3132
          %v3134 = vadd.f32 %v3049, %v3050
          %3135 = vadd.xlane.f32.xlu0 %v3134
          %v3136 = vpop.xlane.xlu0 %3135
          %v3137 = vadd.f32 %v3051, %v3052
          %3138 = vadd.xlane.f32.xlu0 %v3137
          %v3139 = vpop.xlane.xlu0 %3138
          %v3140 = vadd.f32 %v3053, %v3054
          %3141 = vadd.xlane.f32.xlu0 %v3140
          %v3142 = vpop.xlane.xlu0 %3141
          %v3143 = vadd.f32 %v3055, %v3056
          %3144 = vadd.xlane.f32.xlu0 %v3143
          %v3145 = vpop.xlane.xlu0 %3144
          %v3146 = vadd.f32 %v3057, %v3058
          %3147 = vadd.xlane.f32.xlu0 %v3146
          %v3148 = vpop.xlane.xlu0 %3147
          %v3149 = vadd.f32 %v3059, %v3060
          %3150 = vadd.xlane.f32.xlu0 %v3149
          %v3151 = vpop.xlane.xlu0 %3150
          %v3152 = vadd.f32 %v3061, %v3062
          %3153 = vadd.xlane.f32.xlu0 %v3152
          %v3154 = vpop.xlane.xlu0 %3153
          %v3155 = vadd.f32 %v3063, %v3064
          %3156 = vadd.xlane.f32.xlu0 %v3155
          %v3157 = vpop.xlane.xlu0 %3156
          %v3158 = vadd.f32 %v3065, %v3066
          %3159 = vadd.xlane.f32.xlu0 %v3158
          %v3160 = vpop.xlane.xlu0 %3159
          %v3161 = vadd.f32 %v3067, %v3068
          %3162 = vadd.xlane.f32.xlu0 %v3161
          %v3163 = vpop.xlane.xlu0 %3162
          %v3164 = vadd.f32 %v3069, %v3070
          %3165 = vadd.xlane.f32.xlu0 %v3164
          %v3166 = vpop.xlane.xlu0 %3165
          %v3167 = vmul.f32 %v2750, %v2750
          %v3168 = vmul.f32 %v2928, %v2928
          %v3169 = vmul.f32 %v2752, %v2752
          %v3170 = vmul.f32 %v2930, %v2930
          %v3171 = vmul.f32 %v2755, %v2755
          %v3172 = vmul.f32 %v2933, %v2933
          %v3173 = vmul.f32 %v2757, %v2757
          %v3174 = vmul.f32 %v2935, %v2935
          %v3175 = vmul.f32 %v2760, %v2760
          %v3176 = vmul.f32 %v2938, %v2938
          %v3177 = vmul.f32 %v2762, %v2762
          %v3178 = vmul.f32 %v2940, %v2940
          %v3179 = vmul.f32 %v2765, %v2765
          %v3180 = vmul.f32 %v2943, %v2943
          %v3181 = vmul.f32 %v2767, %v2767
          %v3182 = vmul.f32 %v2945, %v2945
          %v3183 = vmul.f32 %v2770, %v2770
          %v3184 = vmul.f32 %v2948, %v2948
          %v3185 = vmul.f32 %v2772, %v2772
          %v3186 = vmul.f32 %v2950, %v2950
          %v3187 = vmul.f32 %v2775, %v2775
          %v3188 = vmul.f32 %v2953, %v2953
          %v3189 = vmul.f32 %v2777, %v2777
          %v3190 = vmul.f32 %v2955, %v2955
          %v3191 = vmul.f32 %v2780, %v2780
          %v3192 = vmul.f32 %v2958, %v2958
          %v3193 = vmul.f32 %v2782, %v2782
          %v3194 = vmul.f32 %v2960, %v2960
          %v3195 = vmul.f32 %v2785, %v2785
          %v3196 = vmul.f32 %v2963, %v2963
          %v3197 = vmul.f32 %v2787, %v2787
          %v3198 = vmul.f32 %v2965, %v2965
          %v3199 = vmul.f32 %v2790, %v2790
          %v3200 = vmul.f32 %v2968, %v2968
          %v3201 = vmul.f32 %v2792, %v2792
          %v3202 = vmul.f32 %v2970, %v2970
          %v3203 = vmul.f32 %v2795, %v2795
          %v3204 = vmul.f32 %v2973, %v2973
          %v3205 = vmul.f32 %v2797, %v2797
          %v3206 = vmul.f32 %v2975, %v2975
          %v3207 = vmul.f32 %v2800, %v2800
          %v3208 = vmul.f32 %v2978, %v2978
          %v3209 = vmul.f32 %v2802, %v2802
          %v3210 = vmul.f32 %v2980, %v2980
          %v3211 = vmul.f32 %v2805, %v2805
          %v3212 = vmul.f32 %v2983, %v2983
          %v3213 = vmul.f32 %v2807, %v2807
          %v3214 = vmul.f32 %v2985, %v2985
          %v3215 = vmul.f32 %v2810, %v2810
          %v3216 = vmul.f32 %v2988, %v2988
          %v3217 = vmul.f32 %v2812, %v2812
          %v3218 = vmul.f32 %v2990, %v2990
          %v3219 = vmul.f32 %v2815, %v2815
          %v3220 = vmul.f32 %v2993, %v2993
          %v3221 = vmul.f32 %v2817, %v2817
          %v3222 = vmul.f32 %v2995, %v2995
          %v3223 = vmul.f32 %v2820, %v2820
          %v3224 = vmul.f32 %v2998, %v2998
          %v3225 = vmul.f32 %v2822, %v2822
          %v3226 = vmul.f32 %v3000, %v3000
          %v3227 = vmul.f32 %v2825, %v2825
          %v3228 = vmul.f32 %v3003, %v3003
          %v3229 = vmul.f32 %v2827, %v2827
          %v3230 = vmul.f32 %v3005, %v3005
          %v3231 = vadd.f32 %v3167, %v3168
          %3232 = vadd.xlane.f32.xlu0 %v3231
          %v3233 = vpop.xlane.xlu0 %3232
          %v3234 = vadd.f32 %v3169, %v3170
          %3235 = vadd.xlane.f32.xlu0 %v3234
          %v3236 = vpop.xlane.xlu0 %3235
          %v3237 = vadd.f32 %v3171, %v3172
          %3238 = vadd.xlane.f32.xlu0 %v3237
          %v3239 = vpop.xlane.xlu0 %3238
          %v3240 = vadd.f32 %v3173, %v3174
          %3241 = vadd.xlane.f32.xlu0 %v3240
          %v3242 = vpop.xlane.xlu0 %3241
          %v3243 = vadd.f32 %v3175, %v3176
          %3244 = vadd.xlane.f32.xlu0 %v3243
          %v3245 = vpop.xlane.xlu0 %3244
          %v3246 = vadd.f32 %v3177, %v3178
          %3247 = vadd.xlane.f32.xlu0 %v3246
          %v3248 = vpop.xlane.xlu0 %3247
          %v3249 = vadd.f32 %v3179, %v3180
          %3250 = vadd.xlane.f32.xlu0 %v3249
          %v3251 = vpop.xlane.xlu0 %3250
          %v3252 = vadd.f32 %v3181, %v3182
          %3253 = vadd.xlane.f32.xlu0 %v3252
          %v3254 = vpop.xlane.xlu0 %3253
          %v3255 = vadd.f32 %v3183, %v3184
          %3256 = vadd.xlane.f32.xlu0 %v3255
          %v3257 = vpop.xlane.xlu0 %3256
          %v3258 = vadd.f32 %v3185, %v3186
          %3259 = vadd.xlane.f32.xlu0 %v3258
          %v3260 = vpop.xlane.xlu0 %3259
          %v3261 = vadd.f32 %v3187, %v3188
          %3262 = vadd.xlane.f32.xlu0 %v3261
          %v3263 = vpop.xlane.xlu0 %3262
          %v3264 = vadd.f32 %v3189, %v3190
          %3265 = vadd.xlane.f32.xlu0 %v3264
          %v3266 = vpop.xlane.xlu0 %3265
          %v3267 = vadd.f32 %v3191, %v3192
          %3268 = vadd.xlane.f32.xlu0 %v3267
          %v3269 = vpop.xlane.xlu0 %3268
          %v3270 = vadd.f32 %v3193, %v3194
          %3271 = vadd.xlane.f32.xlu0 %v3270
          %v3272 = vpop.xlane.xlu0 %3271
          %v3273 = vadd.f32 %v3195, %v3196
          %3274 = vadd.xlane.f32.xlu0 %v3273
          %v3275 = vpop.xlane.xlu0 %3274
          %v3276 = vadd.f32 %v3197, %v3198
          %3277 = vadd.xlane.f32.xlu0 %v3276
          %v3278 = vpop.xlane.xlu0 %3277
          %v3279 = vadd.f32 %v3199, %v3200
          %3280 = vadd.xlane.f32.xlu0 %v3279
          %v3281 = vpop.xlane.xlu0 %3280
          %v3282 = vadd.f32 %v3201, %v3202
          %3283 = vadd.xlane.f32.xlu0 %v3282
          %v3284 = vpop.xlane.xlu0 %3283
          %v3285 = vadd.f32 %v3203, %v3204
          %3286 = vadd.xlane.f32.xlu0 %v3285
          %v3287 = vpop.xlane.xlu0 %3286
          %v3288 = vadd.f32 %v3205, %v3206
          %3289 = vadd.xlane.f32.xlu0 %v3288
          %v3290 = vpop.xlane.xlu0 %3289
          %v3291 = vadd.f32 %v3207, %v3208
          %3292 = vadd.xlane.f32.xlu0 %v3291
          %v3293 = vpop.xlane.xlu0 %3292
          %v3294 = vadd.f32 %v3209, %v3210
          %3295 = vadd.xlane.f32.xlu0 %v3294
          %v3296 = vpop.xlane.xlu0 %3295
          %v3297 = vadd.f32 %v3211, %v3212
          %3298 = vadd.xlane.f32.xlu0 %v3297
          %v3299 = vpop.xlane.xlu0 %3298
          %v3300 = vadd.f32 %v3213, %v3214
          %3301 = vadd.xlane.f32.xlu0 %v3300
          %v3302 = vpop.xlane.xlu0 %3301
          %v3303 = vadd.f32 %v3215, %v3216
          %3304 = vadd.xlane.f32.xlu0 %v3303
          %v3305 = vpop.xlane.xlu0 %3304
          %v3306 = vadd.f32 %v3217, %v3218
          %3307 = vadd.xlane.f32.xlu0 %v3306
          %v3308 = vpop.xlane.xlu0 %3307
          %v3309 = vadd.f32 %v3219, %v3220
          %3310 = vadd.xlane.f32.xlu0 %v3309
          %v3311 = vpop.xlane.xlu0 %3310
          %v3312 = vadd.f32 %v3221, %v3222
          %3313 = vadd.xlane.f32.xlu0 %v3312
          %v3314 = vpop.xlane.xlu0 %3313
          %v3315 = vadd.f32 %v3223, %v3224
          %3316 = vadd.xlane.f32.xlu0 %v3315
          %v3317 = vpop.xlane.xlu0 %3316
          %v3318 = vadd.f32 %v3225, %v3226
          %3319 = vadd.xlane.f32.xlu0 %v3318
          %v3320 = vpop.xlane.xlu0 %3319
          %v3321 = vadd.f32 %v3227, %v3228
          %3322 = vadd.xlane.f32.xlu0 %v3321
          %v3323 = vpop.xlane.xlu0 %3322
          %v3324 = vadd.f32 %v3229, %v3230
          %3325 = vadd.xlane.f32.xlu0 %v3324
          %v3326 = vpop.xlane.xlu0 %3325
          %v3327 = vmax.f32 %v3233, 1e-16
          %v3328 = vmax.f32 %v3236, 1e-16
          %v3329 = vmax.f32 %v3239, 1e-16
          %v3330 = vmax.f32 %v3242, 1e-16
          %v3331 = vmax.f32 %v3245, 1e-16
          %v3332 = vmax.f32 %v3248, 1e-16
          %v3333 = vmax.f32 %v3251, 1e-16
          %v3334 = vmax.f32 %v3254, 1e-16
          %v3335 = vmax.f32 %v3257, 1e-16
          %v3336 = vmax.f32 %v3260, 1e-16
          %v3337 = vmax.f32 %v3263, 1e-16
          %v3338 = vmax.f32 %v3266, 1e-16
          %v3339 = vmax.f32 %v3269, 1e-16
          %v3340 = vmax.f32 %v3272, 1e-16
          %v3341 = vmax.f32 %v3275, 1e-16
          %v3342 = vmax.f32 %v3278, 1e-16
          %v3343 = vmax.f32 %v3281, 1e-16
          %v3344 = vmax.f32 %v3284, 1e-16
          %v3345 = vmax.f32 %v3287, 1e-16
          %v3346 = vmax.f32 %v3290, 1e-16
          %v3347 = vmax.f32 %v3293, 1e-16
          %v3348 = vmax.f32 %v3296, 1e-16
          %v3349 = vmax.f32 %v3299, 1e-16
          %v3350 = vmax.f32 %v3302, 1e-16
          %v3351 = vmax.f32 %v3305, 1e-16
          %v3352 = vmax.f32 %v3308, 1e-16
          %v3353 = vmax.f32 %v3311, 1e-16
          %v3354 = vmax.f32 %v3314, 1e-16
          %v3355 = vmax.f32 %v3317, 1e-16
          %v3356 = vmax.f32 %v3320, 1e-16
          %v3357 = vmax.f32 %v3323, 1e-16
          %v3358 = vmax.f32 %v3326, 1e-16
          %v3359 = vmul.f32 %v2233, %v2233
          %v3360 = vmul.f32 %v2234, %v2234
          %v3361 = vmul.f32 %v2235, %v2235
          %v3362 = vmul.f32 %v2236, %v2236
          %v3363 = vmul.f32 %v2237, %v2237
          %v3364 = vmul.f32 %v2238, %v2238
          %v3365 = vmul.f32 %v2239, %v2239
          %v3366 = vmul.f32 %v2240, %v2240
          %v3367 = vmul.f32 %v2241, %v2241
          %v3368 = vmul.f32 %v2242, %v2242
          %v3369 = vmul.f32 %v2243, %v2243
          %v3370 = vmul.f32 %v2244, %v2244
          %v3371 = vmul.f32 %v2245, %v2245
          %v3372 = vmul.f32 %v2246, %v2246
          %v3373 = vmul.f32 %v2247, %v2247
          %v3374 = vmul.f32 %v2248, %v2248
          %v3375 = vmul.f32 %v2249, %v2249
          %v3376 = vmul.f32 %v2250, %v2250
          %v3377 = vmul.f32 %v2251, %v2251
          %v3378 = vmul.f32 %v2252, %v2252
          %v3379 = vmul.f32 %v2253, %v2253
          %v3380 = vmul.f32 %v2254, %v2254
          %v3381 = vmul.f32 %v2255, %v2255
          %v3382 = vmul.f32 %v2256, %v2256
          %v3383 = vmul.f32 %v2257, %v2257
          %v3384 = vmul.f32 %v2258, %v2258
          %v3385 = vmul.f32 %v2259, %v2259
          %v3386 = vmul.f32 %v2260, %v2260
          %v3387 = vmul.f32 %v2261, %v2261
          %v3388 = vmul.f32 %v2262, %v2262
          %v3389 = vmul.f32 %v2263, %v2263
          %v3390 = vmul.f32 %v2264, %v2264
          %v3391 = vmul.f32 %v1903, %v1903
          %v3392 = vmul.f32 %v1904, %v1904
          %v3393 = vmul.f32 %v1905, %v1905
          %v3394 = vmul.f32 %v1906, %v1906
          %v3395 = vmul.f32 %v1907, %v1907
          %v3396 = vmul.f32 %v1908, %v1908
          %v3397 = vmul.f32 %v1909, %v1909
          %v3398 = vmul.f32 %v1910, %v1910
          %v3399 = vmul.f32 %v1911, %v1911
          %v3400 = vmul.f32 %v1912, %v1912
          %v3401 = vmul.f32 %v1913, %v1913
          %v3402 = vmul.f32 %v1914, %v1914
          %v3403 = vmul.f32 %v1915, %v1915
          %v3404 = vmul.f32 %v1916, %v1916
          %v3405 = vmul.f32 %v1917, %v1917
          %v3406 = vmul.f32 %v1918, %v1918
          %v3407 = vmul.f32 %v1919, %v1919
          %v3408 = vmul.f32 %v1920, %v1920
          %v3409 = vmul.f32 %v1921, %v1921
          %v3410 = vmul.f32 %v1922, %v1922
          %v3411 = vmul.f32 %v1923, %v1923
          %v3412 = vmul.f32 %v1924, %v1924
          %v3413 = vmul.f32 %v1925, %v1925
          %v3414 = vmul.f32 %v1926, %v1926
          %v3415 = vmul.f32 %v1927, %v1927
          %v3416 = vmul.f32 %v1928, %v1928
          %v3417 = vmul.f32 %v1929, %v1929
          %v3418 = vmul.f32 %v1930, %v1930
          %v3419 = vmul.f32 %v1931, %v1931
          %v3420 = vmul.f32 %v1932, %v1932
          %v3421 = vmul.f32 %v1933, %v1933
          %v3422 = vmul.f32 %v1934, %v1934
          %v3423 = vadd.f32 %v3359, %v3360
          %3424 = vadd.xlane.f32.xlu0 %v3423
          %v3425 = vpop.xlane.xlu0 %3424
          %v3426 = vadd.f32 %v3361, %v3362
          %3427 = vadd.xlane.f32.xlu0 %v3426
          %v3428 = vpop.xlane.xlu0 %3427
          %v3429 = vadd.f32 %v3363, %v3364
          %3430 = vadd.xlane.f32.xlu0 %v3429
          %v3431 = vpop.xlane.xlu0 %3430
          %v3432 = vadd.f32 %v3365, %v3366
          %3433 = vadd.xlane.f32.xlu0 %v3432
          %v3434 = vpop.xlane.xlu0 %3433
          %v3435 = vadd.f32 %v3367, %v3368
          %3436 = vadd.xlane.f32.xlu0 %v3435
          %v3437 = vpop.xlane.xlu0 %3436
          %v3438 = vadd.f32 %v3369, %v3370
          %3439 = vadd.xlane.f32.xlu0 %v3438
          %v3440 = vpop.xlane.xlu0 %3439
          %v3441 = vadd.f32 %v3371, %v3372
          %3442 = vadd.xlane.f32.xlu0 %v3441
          %v3443 = vpop.xlane.xlu0 %3442
          %v3444 = vadd.f32 %v3373, %v3374
          %3445 = vadd.xlane.f32.xlu0 %v3444
          %v3446 = vpop.xlane.xlu0 %3445
          %v3447 = vadd.f32 %v3375, %v3376
          %3448 = vadd.xlane.f32.xlu0 %v3447
          %v3449 = vpop.xlane.xlu0 %3448
          %v3450 = vadd.f32 %v3377, %v3378
          %3451 = vadd.xlane.f32.xlu0 %v3450
          %v3452 = vpop.xlane.xlu0 %3451
          %v3453 = vadd.f32 %v3379, %v3380
          %3454 = vadd.xlane.f32.xlu0 %v3453
          %v3455 = vpop.xlane.xlu0 %3454
          %v3456 = vadd.f32 %v3381, %v3382
          %3457 = vadd.xlane.f32.xlu0 %v3456
          %v3458 = vpop.xlane.xlu0 %3457
          %v3459 = vadd.f32 %v3383, %v3384
          %3460 = vadd.xlane.f32.xlu0 %v3459
          %v3461 = vpop.xlane.xlu0 %3460
          %v3462 = vadd.f32 %v3385, %v3386
          %3463 = vadd.xlane.f32.xlu0 %v3462
          %v3464 = vpop.xlane.xlu0 %3463
          %v3465 = vadd.f32 %v3387, %v3388
          %3466 = vadd.xlane.f32.xlu0 %v3465
          %v3467 = vpop.xlane.xlu0 %3466
          %v3468 = vadd.f32 %v3389, %v3390
          %3469 = vadd.xlane.f32.xlu0 %v3468
          %v3470 = vpop.xlane.xlu0 %3469
          %v3471 = vadd.f32 %v3391, %v3392
          %3472 = vadd.xlane.f32.xlu0 %v3471
          %v3473 = vpop.xlane.xlu0 %3472
          %v3474 = vadd.f32 %v3393, %v3394
          %3475 = vadd.xlane.f32.xlu0 %v3474
          %v3476 = vpop.xlane.xlu0 %3475
          %v3477 = vadd.f32 %v3395, %v3396
          %3478 = vadd.xlane.f32.xlu0 %v3477
          %v3479 = vpop.xlane.xlu0 %3478
          %v3480 = vadd.f32 %v3397, %v3398
          %3481 = vadd.xlane.f32.xlu0 %v3480
          %v3482 = vpop.xlane.xlu0 %3481
          %v3483 = vadd.f32 %v3399, %v3400
          %3484 = vadd.xlane.f32.xlu0 %v3483
          %v3485 = vpop.xlane.xlu0 %3484
          %v3486 = vadd.f32 %v3401, %v3402
          %3487 = vadd.xlane.f32.xlu0 %v3486
          %v3488 = vpop.xlane.xlu0 %3487
          %v3489 = vadd.f32 %v3403, %v3404
          %3490 = vadd.xlane.f32.xlu0 %v3489
          %v3491 = vpop.xlane.xlu0 %3490
          %v3492 = vadd.f32 %v3405, %v3406
          %3493 = vadd.xlane.f32.xlu0 %v3492
          %v3494 = vpop.xlane.xlu0 %3493
          %v3495 = vadd.f32 %v3407, %v3408
          %3496 = vadd.xlane.f32.xlu0 %v3495
          %v3497 = vpop.xlane.xlu0 %3496
          %v3498 = vadd.f32 %v3409, %v3410
          %3499 = vadd.xlane.f32.xlu0 %v3498
          %v3500 = vpop.xlane.xlu0 %3499
          %v3501 = vadd.f32 %v3411, %v3412
          %3502 = vadd.xlane.f32.xlu0 %v3501
          %v3503 = vpop.xlane.xlu0 %3502
          %v3504 = vadd.f32 %v3413, %v3414
          %3505 = vadd.xlane.f32.xlu0 %v3504
          %v3506 = vpop.xlane.xlu0 %3505
          %v3507 = vadd.f32 %v3415, %v3416
          %3508 = vadd.xlane.f32.xlu0 %v3507
          %v3509 = vpop.xlane.xlu0 %3508
          %v3510 = vadd.f32 %v3417, %v3418
          %3511 = vadd.xlane.f32.xlu0 %v3510
          %v3512 = vpop.xlane.xlu0 %3511
          %v3513 = vadd.f32 %v3419, %v3420
          %3514 = vadd.xlane.f32.xlu0 %v3513
          %v3515 = vpop.xlane.xlu0 %3514
          %v3516 = vadd.f32 %v3421, %v3422
          %3517 = vadd.xlane.f32.xlu0 %v3516
          %v3518 = vpop.xlane.xlu0 %3517
          %v3519 = vmax.f32 %v3425, 1e-16
          %v3520 = vmax.f32 %v3428, 1e-16
          %v3521 = vmax.f32 %v3431, 1e-16
          %v3522 = vmax.f32 %v3434, 1e-16
          %v3523 = vmax.f32 %v3437, 1e-16
          %v3524 = vmax.f32 %v3440, 1e-16
          %v3525 = vmax.f32 %v3443, 1e-16
          %v3526 = vmax.f32 %v3446, 1e-16
          %v3527 = vmax.f32 %v3449, 1e-16
          %v3528 = vmax.f32 %v3452, 1e-16
          %v3529 = vmax.f32 %v3455, 1e-16
          %v3530 = vmax.f32 %v3458, 1e-16
          %v3531 = vmax.f32 %v3461, 1e-16
          %v3532 = vmax.f32 %v3464, 1e-16
          %v3533 = vmax.f32 %v3467, 1e-16
          %v3534 = vmax.f32 %v3470, 1e-16
          %v3535 = vmax.f32 %v3473, 1e-16
          %v3536 = vmax.f32 %v3476, 1e-16
          %v3537 = vmax.f32 %v3479, 1e-16
          %v3538 = vmax.f32 %v3482, 1e-16
          %v3539 = vmax.f32 %v3485, 1e-16
          %v3540 = vmax.f32 %v3488, 1e-16
          %v3541 = vmax.f32 %v3491, 1e-16
          %v3542 = vmax.f32 %v3494, 1e-16
          %v3543 = vmax.f32 %v3497, 1e-16
          %v3544 = vmax.f32 %v3500, 1e-16
          %v3545 = vmax.f32 %v3503, 1e-16
          %v3546 = vmax.f32 %v3506, 1e-16
          %v3547 = vmax.f32 %v3509, 1e-16
          %v3548 = vmax.f32 %v3512, 1e-16
          %v3549 = vmax.f32 %v3515, 1e-16
          %v3550 = vmax.f32 %v3518, 1e-16
          %v3551 = vrsqrt.pop %v3327
          %v3552 = vmul.f32 %v3551, %v3327
          %v3553 = vmul.f32 %v3552, %v3551
          %v3554 = vmul.f32 0.5, %v3553
          %v3555 = vsub.f32 1.5, %v3554
          %v3556 = vmul.f32 %v3551, %v3555
          %vm3557 = vweird.f32 %v3327
          %vm3558 = vweird.f32 %v3551
          %vm3559 = vmor %vm3557, %vm3558
          %v3560 = vsel %vm3559, %v3551, %v3556
          %v3561 = vrsqrt.pop %v3328
          %v3562 = vmul.f32 %v3561, %v3328
          %v3563 = vmul.f32 %v3562, %v3561
          %v3564 = vmul.f32 0.5, %v3563
          %v3565 = vsub.f32 1.5, %v3564
          %v3566 = vmul.f32 %v3561, %v3565
          %vm3567 = vweird.f32 %v3328
          %vm3568 = vweird.f32 %v3561
          %vm3569 = vmor %vm3567, %vm3568
          %v3570 = vsel %vm3569, %v3561, %v3566
          %v3571 = vrsqrt.pop %v3329
          %v3572 = vmul.f32 %v3571, %v3329
          %v3573 = vmul.f32 %v3572, %v3571
          %v3574 = vmul.f32 0.5, %v3573
          %v3575 = vsub.f32 1.5, %v3574
          %v3576 = vmul.f32 %v3571, %v3575
          %vm3577 = vweird.f32 %v3329
          %vm3578 = vweird.f32 %v3571
          %vm3579 = vmor %vm3577, %vm3578
          %v3580 = vsel %vm3579, %v3571, %v3576
          %v3581 = vrsqrt.pop %v3330
          %v3582 = vmul.f32 %v3581, %v3330
          %v3583 = vmul.f32 %v3582, %v3581
          %v3584 = vmul.f32 0.5, %v3583
          %v3585 = vsub.f32 1.5, %v3584
          %v3586 = vmul.f32 %v3581, %v3585
          %vm3587 = vweird.f32 %v3330
          %vm3588 = vweird.f32 %v3581
          %vm3589 = vmor %vm3587, %vm3588
          %v3590 = vsel %vm3589, %v3581, %v3586
          %v3591 = vrsqrt.pop %v3331
          %v3592 = vmul.f32 %v3591, %v3331
          %v3593 = vmul.f32 %v3592, %v3591
          %v3594 = vmul.f32 0.5, %v3593
          %v3595 = vsub.f32 1.5, %v3594
          %v3596 = vmul.f32 %v3591, %v3595
          %vm3597 = vweird.f32 %v3331
          %vm3598 = vweird.f32 %v3591
          %vm3599 = vmor %vm3597, %vm3598
          %v3600 = vsel %vm3599, %v3591, %v3596
          %v3601 = vrsqrt.pop %v3332
          %v3602 = vmul.f32 %v3601, %v3332
          %v3603 = vmul.f32 %v3602, %v3601
          %v3604 = vmul.f32 0.5, %v3603
          %v3605 = vsub.f32 1.5, %v3604
          %v3606 = vmul.f32 %v3601, %v3605
          %vm3607 = vweird.f32 %v3332
          %vm3608 = vweird.f32 %v3601
          %vm3609 = vmor %vm3607, %vm3608
          %v3610 = vsel %vm3609, %v3601, %v3606
          %v3611 = vrsqrt.pop %v3333
          %v3612 = vmul.f32 %v3611, %v3333
          %v3613 = vmul.f32 %v3612, %v3611
          %v3614 = vmul.f32 0.5, %v3613
          %v3615 = vsub.f32 1.5, %v3614
          %v3616 = vmul.f32 %v3611, %v3615
          %vm3617 = vweird.f32 %v3333
          %vm3618 = vweird.f32 %v3611
          %vm3619 = vmor %vm3617, %vm3618
          %v3620 = vsel %vm3619, %v3611, %v3616
          %v3621 = vrsqrt.pop %v3334
          %v3622 = vmul.f32 %v3621, %v3334
          %v3623 = vmul.f32 %v3622, %v3621
          %v3624 = vmul.f32 0.5, %v3623
          %v3625 = vsub.f32 1.5, %v3624
          %v3626 = vmul.f32 %v3621, %v3625
          %vm3627 = vweird.f32 %v3334
          %vm3628 = vweird.f32 %v3621
          %vm3629 = vmor %vm3627, %vm3628
          %v3630 = vsel %vm3629, %v3621, %v3626
          %v3631 = vrsqrt.pop %v3335
          %v3632 = vmul.f32 %v3631, %v3335
          %v3633 = vmul.f32 %v3632, %v3631
          %v3634 = vmul.f32 0.5, %v3633
          %v3635 = vsub.f32 1.5, %v3634
          %v3636 = vmul.f32 %v3631, %v3635
          %vm3637 = vweird.f32 %v3335
          %vm3638 = vweird.f32 %v3631
          %vm3639 = vmor %vm3637, %vm3638
          %v3640 = vsel %vm3639, %v3631, %v3636
          %v3641 = vrsqrt.pop %v3336
          %v3642 = vmul.f32 %v3641, %v3336
          %v3643 = vmul.f32 %v3642, %v3641
          %v3644 = vmul.f32 0.5, %v3643
          %v3645 = vsub.f32 1.5, %v3644
          %v3646 = vmul.f32 %v3641, %v3645
          %vm3647 = vweird.f32 %v3336
          %vm3648 = vweird.f32 %v3641
          %vm3649 = vmor %vm3647, %vm3648
          %v3650 = vsel %vm3649, %v3641, %v3646
          %v3651 = vrsqrt.pop %v3337
          %v3652 = vmul.f32 %v3651, %v3337
          %v3653 = vmul.f32 %v3652, %v3651
          %v3654 = vmul.f32 0.5, %v3653
          %v3655 = vsub.f32 1.5, %v3654
          %v3656 = vmul.f32 %v3651, %v3655
          %vm3657 = vweird.f32 %v3337
          %vm3658 = vweird.f32 %v3651
          %vm3659 = vmor %vm3657, %vm3658
          %v3660 = vsel %vm3659, %v3651, %v3656
          %v3661 = vrsqrt.pop %v3338
          %v3662 = vmul.f32 %v3661, %v3338
          %v3663 = vmul.f32 %v3662, %v3661
          %v3664 = vmul.f32 0.5, %v3663
          %v3665 = vsub.f32 1.5, %v3664
          %v3666 = vmul.f32 %v3661, %v3665
          %vm3667 = vweird.f32 %v3338
          %vm3668 = vweird.f32 %v3661
          %vm3669 = vmor %vm3667, %vm3668
          %v3670 = vsel %vm3669, %v3661, %v3666
          %v3671 = vrsqrt.pop %v3339
          %v3672 = vmul.f32 %v3671, %v3339
          %v3673 = vmul.f32 %v3672, %v3671
          %v3674 = vmul.f32 0.5, %v3673
          %v3675 = vsub.f32 1.5, %v3674
          %v3676 = vmul.f32 %v3671, %v3675
          %vm3677 = vweird.f32 %v3339
          %vm3678 = vweird.f32 %v3671
          %vm3679 = vmor %vm3677, %vm3678
          %v3680 = vsel %vm3679, %v3671, %v3676
          %v3681 = vrsqrt.pop %v3340
          %v3682 = vmul.f32 %v3681, %v3340
          %v3683 = vmul.f32 %v3682, %v3681
          %v3684 = vmul.f32 0.5, %v3683
          %v3685 = vsub.f32 1.5, %v3684
          %v3686 = vmul.f32 %v3681, %v3685
          %vm3687 = vweird.f32 %v3340
          %vm3688 = vweird.f32 %v3681
          %vm3689 = vmor %vm3687, %vm3688
          %v3690 = vsel %vm3689, %v3681, %v3686
          %v3691 = vrsqrt.pop %v3341
          %v3692 = vmul.f32 %v3691, %v3341
          %v3693 = vmul.f32 %v3692, %v3691
          %v3694 = vmul.f32 0.5, %v3693
          %v3695 = vsub.f32 1.5, %v3694
          %v3696 = vmul.f32 %v3691, %v3695
          %vm3697 = vweird.f32 %v3341
          %vm3698 = vweird.f32 %v3691
          %vm3699 = vmor %vm3697, %vm3698
          %v3700 = vsel %vm3699, %v3691, %v3696
          %v3701 = vrsqrt.pop %v3342
          %v3702 = vmul.f32 %v3701, %v3342
          %v3703 = vmul.f32 %v3702, %v3701
          %v3704 = vmul.f32 0.5, %v3703
          %v3705 = vsub.f32 1.5, %v3704
          %v3706 = vmul.f32 %v3701, %v3705
          %vm3707 = vweird.f32 %v3342
          %vm3708 = vweird.f32 %v3701
          %vm3709 = vmor %vm3707, %vm3708
          %v3710 = vsel %vm3709, %v3701, %v3706
          %v3711 = vrsqrt.pop %v3343
          %v3712 = vmul.f32 %v3711, %v3343
          %v3713 = vmul.f32 %v3712, %v3711
          %v3714 = vmul.f32 0.5, %v3713
          %v3715 = vsub.f32 1.5, %v3714
          %v3716 = vmul.f32 %v3711, %v3715
          %vm3717 = vweird.f32 %v3343
          %vm3718 = vweird.f32 %v3711
          %vm3719 = vmor %vm3717, %vm3718
          %v3720 = vsel %vm3719, %v3711, %v3716
          %v3721 = vrsqrt.pop %v3344
          %v3722 = vmul.f32 %v3721, %v3344
          %v3723 = vmul.f32 %v3722, %v3721
          %v3724 = vmul.f32 0.5, %v3723
          %v3725 = vsub.f32 1.5, %v3724
          %v3726 = vmul.f32 %v3721, %v3725
          %vm3727 = vweird.f32 %v3344
          %vm3728 = vweird.f32 %v3721
          %vm3729 = vmor %vm3727, %vm3728
          %v3730 = vsel %vm3729, %v3721, %v3726
          %v3731 = vrsqrt.pop %v3345
          %v3732 = vmul.f32 %v3731, %v3345
          %v3733 = vmul.f32 %v3732, %v3731
          %v3734 = vmul.f32 0.5, %v3733
          %v3735 = vsub.f32 1.5, %v3734
          %v3736 = vmul.f32 %v3731, %v3735
          %vm3737 = vweird.f32 %v3345
          %vm3738 = vweird.f32 %v3731
          %vm3739 = vmor %vm3737, %vm3738
          %v3740 = vsel %vm3739, %v3731, %v3736
          %v3741 = vrsqrt.pop %v3346
          %v3742 = vmul.f32 %v3741, %v3346
          %v3743 = vmul.f32 %v3742, %v3741
          %v3744 = vmul.f32 0.5, %v3743
          %v3745 = vsub.f32 1.5, %v3744
          %v3746 = vmul.f32 %v3741, %v3745
          %vm3747 = vweird.f32 %v3346
          %vm3748 = vweird.f32 %v3741
          %vm3749 = vmor %vm3747, %vm3748
          %v3750 = vsel %vm3749, %v3741, %v3746
          %v3751 = vrsqrt.pop %v3347
          %v3752 = vmul.f32 %v3751, %v3347
          %v3753 = vmul.f32 %v3752, %v3751
          %v3754 = vmul.f32 0.5, %v3753
          %v3755 = vsub.f32 1.5, %v3754
          %v3756 = vmul.f32 %v3751, %v3755
          %vm3757 = vweird.f32 %v3347
          %vm3758 = vweird.f32 %v3751
          %vm3759 = vmor %vm3757, %vm3758
          %v3760 = vsel %vm3759, %v3751, %v3756
          %v3761 = vrsqrt.pop %v3348
          %v3762 = vmul.f32 %v3761, %v3348
          %v3763 = vmul.f32 %v3762, %v3761
          %v3764 = vmul.f32 0.5, %v3763
          %v3765 = vsub.f32 1.5, %v3764
          %v3766 = vmul.f32 %v3761, %v3765
          %vm3767 = vweird.f32 %v3348
          %vm3768 = vweird.f32 %v3761
          %vm3769 = vmor %vm3767, %vm3768
          %v3770 = vsel %vm3769, %v3761, %v3766
          %v3771 = vrsqrt.pop %v3349
          %v3772 = vmul.f32 %v3771, %v3349
          %v3773 = vmul.f32 %v3772, %v3771
          %v3774 = vmul.f32 0.5, %v3773
          %v3775 = vsub.f32 1.5, %v3774
          %v3776 = vmul.f32 %v3771, %v3775
          %vm3777 = vweird.f32 %v3349
          %vm3778 = vweird.f32 %v3771
          %vm3779 = vmor %vm3777, %vm3778
          %v3780 = vsel %vm3779, %v3771, %v3776
          %v3781 = vrsqrt.pop %v3350
          %v3782 = vmul.f32 %v3781, %v3350
          %v3783 = vmul.f32 %v3782, %v3781
          %v3784 = vmul.f32 0.5, %v3783
          %v3785 = vsub.f32 1.5, %v3784
          %v3786 = vmul.f32 %v3781, %v3785
          %vm3787 = vweird.f32 %v3350
          %vm3788 = vweird.f32 %v3781
          %vm3789 = vmor %vm3787, %vm3788
          %v3790 = vsel %vm3789, %v3781, %v3786
          %v3791 = vrsqrt.pop %v3351
          %v3792 = vmul.f32 %v3791, %v3351
          %v3793 = vmul.f32 %v3792, %v3791
          %v3794 = vmul.f32 0.5, %v3793
          %v3795 = vsub.f32 1.5, %v3794
          %v3796 = vmul.f32 %v3791, %v3795
          %vm3797 = vweird.f32 %v3351
          %vm3798 = vweird.f32 %v3791
          %vm3799 = vmor %vm3797, %vm3798
          %v3800 = vsel %vm3799, %v3791, %v3796
          %v3801 = vrsqrt.pop %v3352
          %v3802 = vmul.f32 %v3801, %v3352
          %v3803 = vmul.f32 %v3802, %v3801
          %v3804 = vmul.f32 0.5, %v3803
          %v3805 = vsub.f32 1.5, %v3804
          %v3806 = vmul.f32 %v3801, %v3805
          %vm3807 = vweird.f32 %v3352
          %vm3808 = vweird.f32 %v3801
          %vm3809 = vmor %vm3807, %vm3808
          %v3810 = vsel %vm3809, %v3801, %v3806
          %v3811 = vrsqrt.pop %v3353
          %v3812 = vmul.f32 %v3811, %v3353
          %v3813 = vmul.f32 %v3812, %v3811
          %v3814 = vmul.f32 0.5, %v3813
          %v3815 = vsub.f32 1.5, %v3814
          %v3816 = vmul.f32 %v3811, %v3815
          %vm3817 = vweird.f32 %v3353
          %vm3818 = vweird.f32 %v3811
          %vm3819 = vmor %vm3817, %vm3818
          %v3820 = vsel %vm3819, %v3811, %v3816
          %v3821 = vrsqrt.pop %v3354
          %v3822 = vmul.f32 %v3821, %v3354
          %v3823 = vmul.f32 %v3822, %v3821
          %v3824 = vmul.f32 0.5, %v3823
          %v3825 = vsub.f32 1.5, %v3824
          %v3826 = vmul.f32 %v3821, %v3825
          %vm3827 = vweird.f32 %v3354
          %vm3828 = vweird.f32 %v3821
          %vm3829 = vmor %vm3827, %vm3828
          %v3830 = vsel %vm3829, %v3821, %v3826
          %v3831 = vrsqrt.pop %v3355
          %v3832 = vmul.f32 %v3831, %v3355
          %v3833 = vmul.f32 %v3832, %v3831
          %v3834 = vmul.f32 0.5, %v3833
          %v3835 = vsub.f32 1.5, %v3834
          %v3836 = vmul.f32 %v3831, %v3835
          %vm3837 = vweird.f32 %v3355
          %vm3838 = vweird.f32 %v3831
          %vm3839 = vmor %vm3837, %vm3838
          %v3840 = vsel %vm3839, %v3831, %v3836
          %v3841 = vrsqrt.pop %v3356
          %v3842 = vmul.f32 %v3841, %v3356
          %v3843 = vmul.f32 %v3842, %v3841
          %v3844 = vmul.f32 0.5, %v3843
          %v3845 = vsub.f32 1.5, %v3844
          %v3846 = vmul.f32 %v3841, %v3845
          %vm3847 = vweird.f32 %v3356
          %vm3848 = vweird.f32 %v3841
          %vm3849 = vmor %vm3847, %vm3848
          %v3850 = vsel %vm3849, %v3841, %v3846
          %v3851 = vrsqrt.pop %v3357
          %v3852 = vmul.f32 %v3851, %v3357
          %v3853 = vmul.f32 %v3852, %v3851
          %v3854 = vmul.f32 0.5, %v3853
          %v3855 = vsub.f32 1.5, %v3854
          %v3856 = vmul.f32 %v3851, %v3855
          %vm3857 = vweird.f32 %v3357
          %vm3858 = vweird.f32 %v3851
          %vm3859 = vmor %vm3857, %vm3858
          %v3860 = vsel %vm3859, %v3851, %v3856
          %v3861 = vrsqrt.pop %v3358
          %v3862 = vmul.f32 %v3861, %v3358
          %v3863 = vmul.f32 %v3862, %v3861
          %v3864 = vmul.f32 0.5, %v3863
          %v3865 = vsub.f32 1.5, %v3864
          %v3866 = vmul.f32 %v3861, %v3865
          %vm3867 = vweird.f32 %v3358
          %vm3868 = vweird.f32 %v3861
          %vm3869 = vmor %vm3867, %vm3868
          %v3870 = vsel %vm3869, %v3861, %v3866
          %v3871 = vmul.f32 %v3073, %v3560
          %v3872 = vmul.f32 %v3076, %v3570
          %v3873 = vmul.f32 %v3079, %v3580
          %v3874 = vmul.f32 %v3082, %v3590
          %v3875 = vmul.f32 %v3085, %v3600
          %v3876 = vmul.f32 %v3088, %v3610
          %v3877 = vmul.f32 %v3091, %v3620
          %v3878 = vmul.f32 %v3094, %v3630
          %v3879 = vmul.f32 %v3097, %v3640
          %v3880 = vmul.f32 %v3100, %v3650
          %v3881 = vmul.f32 %v3103, %v3660
          %v3882 = vmul.f32 %v3106, %v3670
          %v3883 = vmul.f32 %v3109, %v3680
          %v3884 = vmul.f32 %v3112, %v3690
          %v3885 = vmul.f32 %v3115, %v3700
          %v3886 = vmul.f32 %v3118, %v3710
          %v3887 = vmul.f32 %v3121, %v3720
          %v3888 = vmul.f32 %v3124, %v3730
          %v3889 = vmul.f32 %v3127, %v3740
          %v3890 = vmul.f32 %v3130, %v3750
          %v3891 = vmul.f32 %v3133, %v3760
          %v3892 = vmul.f32 %v3136, %v3770
          %v3893 = vmul.f32 %v3139, %v3780
          %v3894 = vmul.f32 %v3142, %v3790
          %v3895 = vmul.f32 %v3145, %v3800
          %v3896 = vmul.f32 %v3148, %v3810
          %v3897 = vmul.f32 %v3151, %v3820
          %v3898 = vmul.f32 %v3154, %v3830
          %v3899 = vmul.f32 %v3157, %v3840
          %v3900 = vmul.f32 %v3160, %v3850
          %v3901 = vmul.f32 %v3163, %v3860
          %v3902 = vmul.f32 %v3166, %v3870
          %v3903 = vrsqrt.pop %v3519
          %v3904 = vmul.f32 %v3903, %v3519
          %v3905 = vmul.f32 %v3904, %v3903
          %v3906 = vmul.f32 0.5, %v3905
          %v3907 = vsub.f32 1.5, %v3906
          %v3908 = vmul.f32 %v3903, %v3907
          %vm3909 = vweird.f32 %v3519
          %vm3910 = vweird.f32 %v3903
          %vm3911 = vmor %vm3909, %vm3910
          %v3912 = vsel %vm3911, %v3903, %v3908
          %v3913 = vrsqrt.pop %v3520
          %v3914 = vmul.f32 %v3913, %v3520
          %v3915 = vmul.f32 %v3914, %v3913
          %v3916 = vmul.f32 0.5, %v3915
          %v3917 = vsub.f32 1.5, %v3916
          %v3918 = vmul.f32 %v3913, %v3917
          %vm3919 = vweird.f32 %v3520
          %vm3920 = vweird.f32 %v3913
          %vm3921 = vmor %vm3919, %vm3920
          %v3922 = vsel %vm3921, %v3913, %v3918
          %v3923 = vrsqrt.pop %v3521
          %v3924 = vmul.f32 %v3923, %v3521
          %v3925 = vmul.f32 %v3924, %v3923
          %v3926 = vmul.f32 0.5, %v3925
          %v3927 = vsub.f32 1.5, %v3926
          %v3928 = vmul.f32 %v3923, %v3927
          %vm3929 = vweird.f32 %v3521
          %vm3930 = vweird.f32 %v3923
          %vm3931 = vmor %vm3929, %vm3930
          %v3932 = vsel %vm3931, %v3923, %v3928
          %v3933 = vrsqrt.pop %v3522
          %v3934 = vmul.f32 %v3933, %v3522
          %v3935 = vmul.f32 %v3934, %v3933
          %v3936 = vmul.f32 0.5, %v3935
          %v3937 = vsub.f32 1.5, %v3936
          %v3938 = vmul.f32 %v3933, %v3937
          %vm3939 = vweird.f32 %v3522
          %vm3940 = vweird.f32 %v3933
          %vm3941 = vmor %vm3939, %vm3940
          %v3942 = vsel %vm3941, %v3933, %v3938
          %v3943 = vrsqrt.pop %v3523
          %v3944 = vmul.f32 %v3943, %v3523
          %v3945 = vmul.f32 %v3944, %v3943
          %v3946 = vmul.f32 0.5, %v3945
          %v3947 = vsub.f32 1.5, %v3946
          %v3948 = vmul.f32 %v3943, %v3947
          %vm3949 = vweird.f32 %v3523
          %vm3950 = vweird.f32 %v3943
          %vm3951 = vmor %vm3949, %vm3950
          %v3952 = vsel %vm3951, %v3943, %v3948
          %v3953 = vrsqrt.pop %v3524
          %v3954 = vmul.f32 %v3953, %v3524
          %v3955 = vmul.f32 %v3954, %v3953
          %v3956 = vmul.f32 0.5, %v3955
          %v3957 = vsub.f32 1.5, %v3956
          %v3958 = vmul.f32 %v3953, %v3957
          %vm3959 = vweird.f32 %v3524
          %vm3960 = vweird.f32 %v3953
          %vm3961 = vmor %vm3959, %vm3960
          %v3962 = vsel %vm3961, %v3953, %v3958
          %v3963 = vrsqrt.pop %v3525
          %v3964 = vmul.f32 %v3963, %v3525
          %v3965 = vmul.f32 %v3964, %v3963
          %v3966 = vmul.f32 0.5, %v3965
          %v3967 = vsub.f32 1.5, %v3966
          %v3968 = vmul.f32 %v3963, %v3967
          %vm3969 = vweird.f32 %v3525
          %vm3970 = vweird.f32 %v3963
          %vm3971 = vmor %vm3969, %vm3970
          %v3972 = vsel %vm3971, %v3963, %v3968
          %v3973 = vrsqrt.pop %v3526
          %v3974 = vmul.f32 %v3973, %v3526
          %v3975 = vmul.f32 %v3974, %v3973
          %v3976 = vmul.f32 0.5, %v3975
          %v3977 = vsub.f32 1.5, %v3976
          %v3978 = vmul.f32 %v3973, %v3977
          %vm3979 = vweird.f32 %v3526
          %vm3980 = vweird.f32 %v3973
          %vm3981 = vmor %vm3979, %vm3980
          %v3982 = vsel %vm3981, %v3973, %v3978
          %v3983 = vrsqrt.pop %v3527
          %v3984 = vmul.f32 %v3983, %v3527
          %v3985 = vmul.f32 %v3984, %v3983
          %v3986 = vmul.f32 0.5, %v3985
          %v3987 = vsub.f32 1.5, %v3986
          %v3988 = vmul.f32 %v3983, %v3987
          %vm3989 = vweird.f32 %v3527
          %vm3990 = vweird.f32 %v3983
          %vm3991 = vmor %vm3989, %vm3990
          %v3992 = vsel %vm3991, %v3983, %v3988
          %v3993 = vrsqrt.pop %v3528
          %v3994 = vmul.f32 %v3993, %v3528
          %v3995 = vmul.f32 %v3994, %v3993
          %v3996 = vmul.f32 0.5, %v3995
          %v3997 = vsub.f32 1.5, %v3996
          %v3998 = vmul.f32 %v3993, %v3997
          %vm3999 = vweird.f32 %v3528
          %vm4000 = vweird.f32 %v3993
          %vm4001 = vmor %vm3999, %vm4000
          %v4002 = vsel %vm4001, %v3993, %v3998
          %v4003 = vrsqrt.pop %v3529
          %v4004 = vmul.f32 %v4003, %v3529
          %v4005 = vmul.f32 %v4004, %v4003
          %v4006 = vmul.f32 0.5, %v4005
          %v4007 = vsub.f32 1.5, %v4006
          %v4008 = vmul.f32 %v4003, %v4007
          %vm4009 = vweird.f32 %v3529
          %vm4010 = vweird.f32 %v4003
          %vm4011 = vmor %vm4009, %vm4010
          %v4012 = vsel %vm4011, %v4003, %v4008
          %v4013 = vrsqrt.pop %v3530
          %v4014 = vmul.f32 %v4013, %v3530
          %v4015 = vmul.f32 %v4014, %v4013
          %v4016 = vmul.f32 0.5, %v4015
          %v4017 = vsub.f32 1.5, %v4016
          %v4018 = vmul.f32 %v4013, %v4017
          %vm4019 = vweird.f32 %v3530
          %vm4020 = vweird.f32 %v4013
          %vm4021 = vmor %vm4019, %vm4020
          %v4022 = vsel %vm4021, %v4013, %v4018
          %v4023 = vrsqrt.pop %v3531
          %v4024 = vmul.f32 %v4023, %v3531
          %v4025 = vmul.f32 %v4024, %v4023
          %v4026 = vmul.f32 0.5, %v4025
          %v4027 = vsub.f32 1.5, %v4026
          %v4028 = vmul.f32 %v4023, %v4027
          %vm4029 = vweird.f32 %v3531
          %vm4030 = vweird.f32 %v4023
          %vm4031 = vmor %vm4029, %vm4030
          %v4032 = vsel %vm4031, %v4023, %v4028
          %v4033 = vrsqrt.pop %v3532
          %v4034 = vmul.f32 %v4033, %v3532
          %v4035 = vmul.f32 %v4034, %v4033
          %v4036 = vmul.f32 0.5, %v4035
          %v4037 = vsub.f32 1.5, %v4036
          %v4038 = vmul.f32 %v4033, %v4037
          %vm4039 = vweird.f32 %v3532
          %vm4040 = vweird.f32 %v4033
          %vm4041 = vmor %vm4039, %vm4040
          %v4042 = vsel %vm4041, %v4033, %v4038
          %v4043 = vrsqrt.pop %v3533
          %v4044 = vmul.f32 %v4043, %v3533
          %v4045 = vmul.f32 %v4044, %v4043
          %v4046 = vmul.f32 0.5, %v4045
          %v4047 = vsub.f32 1.5, %v4046
          %v4048 = vmul.f32 %v4043, %v4047
          %vm4049 = vweird.f32 %v3533
          %vm4050 = vweird.f32 %v4043
          %vm4051 = vmor %vm4049, %vm4050
          %v4052 = vsel %vm4051, %v4043, %v4048
          %v4053 = vrsqrt.pop %v3534
          %v4054 = vmul.f32 %v4053, %v3534
          %v4055 = vmul.f32 %v4054, %v4053
          %v4056 = vmul.f32 0.5, %v4055
          %v4057 = vsub.f32 1.5, %v4056
          %v4058 = vmul.f32 %v4053, %v4057
          %vm4059 = vweird.f32 %v3534
          %vm4060 = vweird.f32 %v4053
          %vm4061 = vmor %vm4059, %vm4060
          %v4062 = vsel %vm4061, %v4053, %v4058
          %v4063 = vrsqrt.pop %v3535
          %v4064 = vmul.f32 %v4063, %v3535
          %v4065 = vmul.f32 %v4064, %v4063
          %v4066 = vmul.f32 0.5, %v4065
          %v4067 = vsub.f32 1.5, %v4066
          %v4068 = vmul.f32 %v4063, %v4067
          %vm4069 = vweird.f32 %v3535
          %vm4070 = vweird.f32 %v4063
          %vm4071 = vmor %vm4069, %vm4070
          %v4072 = vsel %vm4071, %v4063, %v4068
          %v4073 = vrsqrt.pop %v3536
          %v4074 = vmul.f32 %v4073, %v3536
          %v4075 = vmul.f32 %v4074, %v4073
          %v4076 = vmul.f32 0.5, %v4075
          %v4077 = vsub.f32 1.5, %v4076
          %v4078 = vmul.f32 %v4073, %v4077
          %vm4079 = vweird.f32 %v3536
          %vm4080 = vweird.f32 %v4073
          %vm4081 = vmor %vm4079, %vm4080
          %v4082 = vsel %vm4081, %v4073, %v4078
          %v4083 = vrsqrt.pop %v3537
          %v4084 = vmul.f32 %v4083, %v3537
          %v4085 = vmul.f32 %v4084, %v4083
          %v4086 = vmul.f32 0.5, %v4085
          %v4087 = vsub.f32 1.5, %v4086
          %v4088 = vmul.f32 %v4083, %v4087
          %vm4089 = vweird.f32 %v3537
          %vm4090 = vweird.f32 %v4083
          %vm4091 = vmor %vm4089, %vm4090
          %v4092 = vsel %vm4091, %v4083, %v4088
          %v4093 = vrsqrt.pop %v3538
          %v4094 = vmul.f32 %v4093, %v3538
          %v4095 = vmul.f32 %v4094, %v4093
          %v4096 = vmul.f32 0.5, %v4095
          %v4097 = vsub.f32 1.5, %v4096
          %v4098 = vmul.f32 %v4093, %v4097
          %vm4099 = vweird.f32 %v3538
          %vm4100 = vweird.f32 %v4093
          %vm4101 = vmor %vm4099, %vm4100
          %v4102 = vsel %vm4101, %v4093, %v4098
          %v4103 = vrsqrt.pop %v3539
          %v4104 = vmul.f32 %v4103, %v3539
          %v4105 = vmul.f32 %v4104, %v4103
          %v4106 = vmul.f32 0.5, %v4105
          %v4107 = vsub.f32 1.5, %v4106
          %v4108 = vmul.f32 %v4103, %v4107
          %vm4109 = vweird.f32 %v3539
          %vm4110 = vweird.f32 %v4103
          %vm4111 = vmor %vm4109, %vm4110
          %v4112 = vsel %vm4111, %v4103, %v4108
          %v4113 = vrsqrt.pop %v3540
          %v4114 = vmul.f32 %v4113, %v3540
          %v4115 = vmul.f32 %v4114, %v4113
          %v4116 = vmul.f32 0.5, %v4115
          %v4117 = vsub.f32 1.5, %v4116
          %v4118 = vmul.f32 %v4113, %v4117
          %vm4119 = vweird.f32 %v3540
          %vm4120 = vweird.f32 %v4113
          %vm4121 = vmor %vm4119, %vm4120
          %v4122 = vsel %vm4121, %v4113, %v4118
          %v4123 = vrsqrt.pop %v3541
          %v4124 = vmul.f32 %v4123, %v3541
          %v4125 = vmul.f32 %v4124, %v4123
          %v4126 = vmul.f32 0.5, %v4125
          %v4127 = vsub.f32 1.5, %v4126
          %v4128 = vmul.f32 %v4123, %v4127
          %vm4129 = vweird.f32 %v3541
          %vm4130 = vweird.f32 %v4123
          %vm4131 = vmor %vm4129, %vm4130
          %v4132 = vsel %vm4131, %v4123, %v4128
          %v4133 = vrsqrt.pop %v3542
          %v4134 = vmul.f32 %v4133, %v3542
          %v4135 = vmul.f32 %v4134, %v4133
          %v4136 = vmul.f32 0.5, %v4135
          %v4137 = vsub.f32 1.5, %v4136
          %v4138 = vmul.f32 %v4133, %v4137
          %vm4139 = vweird.f32 %v3542
          %vm4140 = vweird.f32 %v4133
          %vm4141 = vmor %vm4139, %vm4140
          %v4142 = vsel %vm4141, %v4133, %v4138
          %v4143 = vrsqrt.pop %v3543
          %v4144 = vmul.f32 %v4143, %v3543
          %v4145 = vmul.f32 %v4144, %v4143
          %v4146 = vmul.f32 0.5, %v4145
          %v4147 = vsub.f32 1.5, %v4146
          %v4148 = vmul.f32 %v4143, %v4147
          %vm4149 = vweird.f32 %v3543
          %vm4150 = vweird.f32 %v4143
          %vm4151 = vmor %vm4149, %vm4150
          %v4152 = vsel %vm4151, %v4143, %v4148
          %v4153 = vrsqrt.pop %v3544
          %v4154 = vmul.f32 %v4153, %v3544
          %v4155 = vmul.f32 %v4154, %v4153
          %v4156 = vmul.f32 0.5, %v4155
          %v4157 = vsub.f32 1.5, %v4156
          %v4158 = vmul.f32 %v4153, %v4157
          %vm4159 = vweird.f32 %v3544
          %vm4160 = vweird.f32 %v4153
          %vm4161 = vmor %vm4159, %vm4160
          %v4162 = vsel %vm4161, %v4153, %v4158
          %v4163 = vrsqrt.pop %v3545
          %v4164 = vmul.f32 %v4163, %v3545
          %v4165 = vmul.f32 %v4164, %v4163
          %v4166 = vmul.f32 0.5, %v4165
          %v4167 = vsub.f32 1.5, %v4166
          %v4168 = vmul.f32 %v4163, %v4167
          %vm4169 = vweird.f32 %v3545
          %vm4170 = vweird.f32 %v4163
          %vm4171 = vmor %vm4169, %vm4170
          %v4172 = vsel %vm4171, %v4163, %v4168
          %v4173 = vrsqrt.pop %v3546
          %v4174 = vmul.f32 %v4173, %v3546
          %v4175 = vmul.f32 %v4174, %v4173
          %v4176 = vmul.f32 0.5, %v4175
          %v4177 = vsub.f32 1.5, %v4176
          %v4178 = vmul.f32 %v4173, %v4177
          %vm4179 = vweird.f32 %v3546
          %vm4180 = vweird.f32 %v4173
          %vm4181 = vmor %vm4179, %vm4180
          %v4182 = vsel %vm4181, %v4173, %v4178
          %v4183 = vrsqrt.pop %v3547
          %v4184 = vmul.f32 %v4183, %v3547
          %v4185 = vmul.f32 %v4184, %v4183
          %v4186 = vmul.f32 0.5, %v4185
          %v4187 = vsub.f32 1.5, %v4186
          %v4188 = vmul.f32 %v4183, %v4187
          %vm4189 = vweird.f32 %v3547
          %vm4190 = vweird.f32 %v4183
          %vm4191 = vmor %vm4189, %vm4190
          %v4192 = vsel %vm4191, %v4183, %v4188
          %v4193 = vrsqrt.pop %v3548
          %v4194 = vmul.f32 %v4193, %v3548
          %v4195 = vmul.f32 %v4194, %v4193
          %v4196 = vmul.f32 0.5, %v4195
          %v4197 = vsub.f32 1.5, %v4196
          %v4198 = vmul.f32 %v4193, %v4197
          %vm4199 = vweird.f32 %v3548
          %vm4200 = vweird.f32 %v4193
          %vm4201 = vmor %vm4199, %vm4200
          %v4202 = vsel %vm4201, %v4193, %v4198
          %v4203 = vrsqrt.pop %v3549
          %v4204 = vmul.f32 %v4203, %v3549
          %v4205 = vmul.f32 %v4204, %v4203
          %v4206 = vmul.f32 0.5, %v4205
          %v4207 = vsub.f32 1.5, %v4206
          %v4208 = vmul.f32 %v4203, %v4207
          %vm4209 = vweird.f32 %v3549
          %vm4210 = vweird.f32 %v4203
          %vm4211 = vmor %vm4209, %vm4210
          %v4212 = vsel %vm4211, %v4203, %v4208
          %v4213 = vrsqrt.pop %v3550
          %v4214 = vmul.f32 %v4213, %v3550
          %v4215 = vmul.f32 %v4214, %v4213
          %v4216 = vmul.f32 0.5, %v4215
          %v4217 = vsub.f32 1.5, %v4216
          %v4218 = vmul.f32 %v4213, %v4217
          %vm4219 = vweird.f32 %v3550
          %vm4220 = vweird.f32 %v4213
          %vm4221 = vmor %vm4219, %vm4220
          %v4222 = vsel %vm4221, %v4213, %v4218
          %v4223 = vmul.f32 %v3871, %v3912
          %v4224 = vmul.f32 %v3872, %v3922
          %v4225 = vmul.f32 %v3873, %v3932
          %v4226 = vmul.f32 %v3874, %v3942
          %v4227 = vmul.f32 %v3875, %v3952
          %v4228 = vmul.f32 %v3876, %v3962
          %v4229 = vmul.f32 %v3877, %v3972
          %v4230 = vmul.f32 %v3878, %v3982
          %v4231 = vmul.f32 %v3879, %v3992
          %v4232 = vmul.f32 %v3880, %v4002
          %v4233 = vmul.f32 %v3881, %v4012
          %v4234 = vmul.f32 %v3882, %v4022
          %v4235 = vmul.f32 %v3883, %v4032
          %v4236 = vmul.f32 %v3884, %v4042
          %v4237 = vmul.f32 %v3885, %v4052
          %v4238 = vmul.f32 %v3886, %v4062
          %v4239 = vmul.f32 %v3887, %v4072
          %v4240 = vmul.f32 %v3888, %v4082
          %v4241 = vmul.f32 %v3889, %v4092
          %v4242 = vmul.f32 %v3890, %v4102
          %v4243 = vmul.f32 %v3891, %v4112
          %v4244 = vmul.f32 %v3892, %v4122
          %v4245 = vmul.f32 %v3893, %v4132
          %v4246 = vmul.f32 %v3894, %v4142
          %v4247 = vmul.f32 %v3895, %v4152
          %v4248 = vmul.f32 %v3896, %v4162
          %v4249 = vmul.f32 %v3897, %v4172
          %v4250 = vmul.f32 %v3898, %v4182
          %v4251 = vmul.f32 %v3899, %v4192
          %v4252 = vmul.f32 %v3900, %v4202
          %v4253 = vmul.f32 %v3901, %v4212
          %v4254 = vmul.f32 %v3902, %v4222
          %v4255 = vld [vmem:[#allocation6] sm:$0x1]
          %v4256 = vadd.f32 %v4223, %v4224
          %v4257 = vadd.f32 %v4256, %v4225
          %v4258 = vadd.f32 %v4257, %v4226
          %v4259 = vadd.f32 %v4258, %v4227
          %v4260 = vadd.f32 %v4259, %v4228
          %v4261 = vadd.f32 %v4260, %v4229
          %v4262 = vadd.f32 %v4261, %v4230
          %v4263 = vadd.f32 %v4262, %v4231
          %v4264 = vadd.f32 %v4263, %v4232
          %v4265 = vadd.f32 %v4264, %v4233
          %v4266 = vadd.f32 %v4265, %v4234
          %v4267 = vadd.f32 %v4266, %v4235
          %v4268 = vadd.f32 %v4267, %v4236
          %v4269 = vadd.f32 %v4268, %v4237
          %v4270 = vadd.f32 %v4269, %v4238
          %v4271 = vadd.f32 %v4270, %v4239
          %v4272 = vadd.f32 %v4271, %v4240
          %v4273 = vadd.f32 %v4272, %v4241
          %v4274 = vadd.f32 %v4273, %v4242
          %v4275 = vadd.f32 %v4274, %v4243
          %v4276 = vadd.f32 %v4275, %v4244
          %v4277 = vadd.f32 %v4276, %v4245
          %v4278 = vadd.f32 %v4277, %v4246
          %v4279 = vadd.f32 %v4278, %v4247
          %v4280 = vadd.f32 %v4279, %v4248
          %v4281 = vadd.f32 %v4280, %v4249
          %v4282 = vadd.f32 %v4281, %v4250
          %v4283 = vadd.f32 %v4282, %v4251
          %v4284 = vadd.f32 %v4283, %v4252
          %v4285 = vadd.f32 %v4284, %v4253
          %v4286 = vadd.f32 %v4285, %v4254
          %v4287 = vrot.slane %v4286, 4
          %v4288 = vadd.f32 %v4286, %v4287
          %v4289 = vrot.slane %v4288, 2
          %v4290 = vadd.f32 %v4288, %v4289
          %v4291 = vrot.slane %v4290, 1
          %v4292 = vadd.f32 %v4290, %v4291
          %v4293 = vadd.f32 %v4255, %v4292
          %vm4294 = vcmask 0
          %4295 = vst.msk [vmem:[#allocation6] sm:$0x1] %vm4294, %v4293
          // Predicated region
          $region73: #{tpu_custom_call.1} parent=71 // pred_check
            %p4296 = pneg %p356
          $region74: #{tpu_custom_call.1} parent=71 // pred_check_branch
            %4298 = sbr.rel (%p4296) target = $region76
          $region75: #{tpu_custom_call.1} parent=71 // pred_region
            %v4299 = vld [vmem:[#allocation6] sm:$0x1]
            %v4300 = vmul.f32 %v4299, -0.00390625
            %4301 = vst.msk [vmem:[#allocation17] sm:$0x1] %vm4294, %v4300
          $region76: #{tpu_custom_call.1} parent=71 // pred_fallthru
            _
        $region72: #{tpu_custom_call.1} parent=39 // pred_fallthru
          _
        // Predicated region
        $region77: #{tpu_custom_call.1} parent=39 // pred_check
          %p4302 = pneg %p172
        $region78: #{tpu_custom_call.1} parent=39 // pred_check_branch
          %4304 = sbr.rel (%p4302) target = $region80
        $region79: #{tpu_custom_call.1} parent=39 // pred_region
          %4306 = vsyncadd [#allocation10], 0
          %s4308 = sshll.u32 [#allocation17], 4
          %s4309 = int_to_ptr.vmem [resolvable:$true] %s4308
          %s4310 = sshll.u32 %s5, 4
          %s4311 = int_to_ptr.hbm [resolvable:$true] %s4310
          %4313 = dma.vmem_to_hbm [thread:$0]  %s4309, 16, %s4311, [#allocation10]
        $region80: #{tpu_custom_call.1} parent=39 // pred_fallthru
          _
        // Predicated region
        $region81: #{tpu_custom_call.1} parent=39 // pred_check
          %p4314 = pneg %p172
        $region82: #{tpu_custom_call.1} parent=39 // pred_check_branch
          %4316 = sbr.rel (%p4314) target = $region84
        $region83: #{tpu_custom_call.1} parent=39 // pred_region
          %4318 = dma.done [#allocation10], 16
        $region84: #{tpu_custom_call.1} parent=39 // pred_fallthru
          _
      $region40: #{tpu_custom_call.1} parent=5 // pred_fallthru
        _
      %p4319 = scmp.le.s32.totalorder 2, %s19
      // Predicated region
      $region85: #{tpu_custom_call.1} parent=5 // pred_check
        %p4320 = pneg %p4319
      $region86: #{tpu_custom_call.1} parent=5 // pred_check_branch
        %4322 = sbr.rel (%p4320) target = $region88
      $region87: #{tpu_custom_call.1} parent=5 // pred_region
        %s4323 = ssub.s32 %s19, 2
      $region88: #{tpu_custom_call.1} parent=5 // pred_fallthru
        _
    $region6: #{tpu_custom_call.1} parent=1 // loop_footer
      %s23 = sadd.s32 1, %s19
    $region7: #{tpu_custom_call.1} parent=1 // loop_footer_branch
      %18 = sbr.rel target = $region3
    $region8: #{tpu_custom_call.1} parent=1 // loop_exit
      _
    %4324 = vsyncpa [#allocation9], 1
    %s4325 = scalar_lea.sflag [#allocation9], 1
    %4326 = vsyncpa %s4325, 1
    %4327 = vsyncpa [#allocation12], 1
    %s4328 = scalar_lea.sflag [#allocation12], 1
    %4329 = vsyncpa %s4328, 1
    %4330 = vsyncpa [#allocation15], 1
    %4331 = vsyncpa [#allocation10], 1
    %s4332 = scalar_lea.sflag [#allocation10], 1
    %4333 = vsyncpa %s4332, 1

</llo_original>
